<compile_context>
chip_gen: v7x
topology: tpu7x:2x2x1
jax: 0.10.0
libtpu: 0.0.40
codegen_flags: <defaults>
</compile_context>

<pallas_src>
import functools

import jax
import jax.numpy as jnp
from jax import lax
from jax.experimental import pallas as pl
from jax.experimental.pallas import tpu as pltpu


_VMEM_LIMIT = 32 * 1024 * 1024       # explicit scoped-VMEM request (safe on v5e/v6e/v7x)
_VMEM_BUDGET = 12 * 1024 * 1024      # per-step working-set target (headroom under the limit)
_BN_EPS = 1e-5


def _round_up(x, m):
    return (x + m - 1) // m * m


# --------------------------------------------------------------------------
# in-kernel helper: the four phase convolutions for one (batch, row-tile) step
# --------------------------------------------------------------------------
def _phase_convs(x, w, *, tr, width, cin):
    """x: (3, 1, TR, W+2, Cin) loaded block (3 row-shifted padded views).
       w: (4 phases, 4 taps, Cout, Cin) effective 2x2 phase weights.
    Returns a list of 4 arrays (Cout, TR*W), one per output phase p = 2*a + b,
    holding the BIAS-FREE conv(upsample2x(x))[..., 2i+a, 2j+b] for the TR output
    rows of this tile (spatial index flattened row-major i*W + j)."""
    outs = []
    for a in range(2):
        for b in range(2):
            p = 2 * a + b
            acc = None
            for dy in range(2):
                for dx in range(2):
                    t = 2 * dy + dx
                    # tap source: row-shifted copy (a+dy), column offset (b+dx)
                    src = x[a + dy, 0, :, b + dx:b + dx + width, :]     # (TR, W, Cin)
                    patch = src.reshape(tr * width, cin)                 # (TR*W, Cin)
                    wpt = w[p, t]                                        # (Cout, Cin)
                    # (Cout, Cin) x (TR*W, Cin) contracted on Cin -> (Cout, TR*W)
                    r = lax.dot_general(
                        wpt, patch,
                        dimension_numbers=(((1,), (1,)), ((), ())),
                        preferred_element_type=jnp.float32)
                    acc = r if acc is None else acc + r
            outs.append(acc)
    return outs


# --------------------------------------------------------------------------
# pass 1: conv (computed once, stored lane-dense) + per-channel sum / sum-of-sq
# --------------------------------------------------------------------------
def _conv_stats_kernel(x_ref, w_ref, z_ref, sum_ref, sq_ref, *, tr, width, cin):
    @pl.when(jnp.logical_and(pl.program_id(0) == 0, pl.program_id(1) == 0))
    def _init():
        sum_ref[...] = jnp.zeros_like(sum_ref)
        sq_ref[...] = jnp.zeros_like(sq_ref)

    x = x_ref[...]
    w = w_ref[...]
    s_acc = None
    q_acc = None
    for p, z in enumerate(_phase_convs(x, w, tr=tr, width=width, cin=cin)):
        z_ref[p, 0, :, :] = z.astype(z_ref.dtype)            # lane-dense store (TR*W lanes)
        s = jnp.sum(z, axis=1, keepdims=True)                 # (Cout, 1)
        q = jnp.sum(z * z, axis=1, keepdims=True)
        s_acc = s if s_acc is None else s_acc + s
        q_acc = q if q_acc is None else q_acc + q
    sum_ref[...] += s_acc
    sq_ref[...] += q_acc


# --------------------------------------------------------------------------
# pass 2: BN-apply + ReLU fused into the output write (pure element-wise)
# --------------------------------------------------------------------------
def _bn_relu_kernel(z_ref, scale_ref, shift_ref, o_ref):
    scale = scale_ref[...]      # (Cout, 1)
    shift = shift_ref[...]      # (Cout, 1)
    for p in range(4):
        z = z_ref[p, 0, :, :]                                  # (Cout, TR*W)
        o_ref[p, 0, :, :] = jnp.maximum(z * scale + shift, 0.0).astype(o_ref.dtype)


# --------------------------------------------------------------------------
# tiling choice
# --------------------------------------------------------------------------
def _est_vmem(tr, W, Cin, Cout):
    lane = 128
    cin_l = _round_up(Cin, lane)
    cout_s = _round_up(Cout, 8)
    trw_l = _round_up(tr * W, lane)
    x_blk = 3 * tr * _round_up(W + 2, 8) * cin_l * 4          # input block (padded layout)
    z_blk = 4 * cout_s * trw_l * 4                            # conv / output block
    w_blk = 16 * cout_s * cin_l * 4                           # phase weights
    tmp = (4 * _round_up(tr * W, 8) * cin_l * 4               # patch temporaries
           + 8 * cout_s * trw_l * 4)                           # phase accumulators
    return 2 * (x_blk + z_blk + w_blk) + tmp                   # double-buffered blocks


def _pick_row_tile(H, W, Cin, Cout, budget=_VMEM_BUDGET):
    for tr in sorted((d for d in range(1, H + 1) if H % d == 0), reverse=True):
        lane_ok = (tr == H) or ((tr * W) % 128 == 0)           # lane-dense / legal blocks
        if lane_ok and _est_vmem(tr, W, Cin, Cout) <= budget:
            return tr
    raise ValueError(f"no row tile fits VMEM budget for H={H}, W={W}, Cin={Cin}, Cout={Cout}")


# --------------------------------------------------------------------------
# wrapper
# --------------------------------------------------------------------------
@jax.jit
def upsample2x_block(x_nchw, conv_w, conv_b, bn_gamma, bn_beta):
    """x_nchw: (N, Cin, H, W); conv_w: (Cout, Cin, 3, 3) OIHW; conv_b/bn_*: (Cout,).
    Returns (N, Cout, 2H, 2W).  BatchNorm uses train-mode batch statistics."""
    N, Cin, H, W = x_nchw.shape
    Cout = conv_w.shape[0]
    assert conv_w.shape == (Cout, Cin, 3, 3)
    # TODO(synk): for W not a multiple of 8, pad the width and mask the BN stats.
    assert W % 8 == 0, "W must be a multiple of 8"
    del conv_b  # exact cancellation: (z + b) - mean(z + b) = z - mean(z); var(z + b) = var(z)

    f32 = jnp.float32
    TR = _pick_row_tile(H, W, Cin, Cout)
    grid = (N, H // TR)

    # ---- cheap wrapper prep (O(input) bytes): NHWC, pad=1, 3 row-shifted views
    x = jnp.transpose(x_nchw.astype(f32), (0, 2, 3, 1))                 # (N, H, W, Cin)
    xp = jnp.pad(x, ((0, 0), (1, 1), (1, 1), (0, 0)))                   # (N, H+2, W+2, Cin)
    x3 = jnp.stack([xp[:, s:s + H] for s in range(3)], axis=0)          # (3, N, H, W+2, Cin)

    # ---- effective 2x2 phase/tap weights: Weff[p=2a+b, t=2dy+dx] : (Cout, Cin)
    # row/col combination of the 3x3 kernel under nearest-2x upsampling
    R = jnp.array([[[1., 0., 0.], [0., 1., 1.]],
                   [[1., 1., 0.], [0., 0., 1.]]], dtype=f32)            # (a, dy, ky)
    weff = jnp.einsum('uyk,vxl,oikl->uvyxoi', R, R, conv_w.astype(f32)) # (2,2,2,2,Cout,Cin)
    weff = weff.reshape(4, 4, Cout, Cin)

    x3_spec = pl.BlockSpec((3, 1, TR, W + 2, Cin), lambda n, r: (0, n, r, 0, 0))
    w_spec = pl.BlockSpec((4, 4, Cout, Cin), lambda n, r: (0, 0, 0, 0))
    col_spec = pl.BlockSpec((Cout, 1), lambda n, r: (0, 0))
    zph_spec = pl.BlockSpec((4, 1, Cout, TR * W), lambda n, r: (0, n, 0, r))

    # ---- pass 1: conv once + BN batch statistics (global reduction -> "arbitrary")
    conv_stats = functools.partial(_conv_stats_kernel, tr=TR, width=W, cin=Cin)
    zph, csum, csq = pl.pallas_call(
        conv_stats,
        out_shape=(jax.ShapeDtypeStruct((4, N, Cout, H * W), f32),
                   jax.ShapeDtypeStruct((Cout, 1), f32),
                   jax.ShapeDtypeStruct((Cout, 1), f32)),
        grid_spec=pltpu.PrefetchScalarGridSpec(
            num_scalar_prefetch=0,
            grid=grid,
            in_specs=[x3_spec, w_spec],
            out_specs=[zph_spec, col_spec, col_spec]),
        compiler_params=pltpu.CompilerParams(
            dimension_semantics=("arbitrary", "arbitrary"),
            vmem_limit_bytes=_VMEM_LIMIT),
    )(x3, weff)

    count = jnp.float32(4 * N * H * W)                    # N * 2H * 2W positions
    mean = csum / count                                    # bias-free mean (bias cancels)
    var = jnp.maximum(csq / count - mean * mean, 0.0)      # biased var (BN train mode)
    scale = bn_gamma.astype(f32).reshape(Cout, 1) * lax.rsqrt(var + _BN_EPS)
    shift = bn_beta.astype(f32).reshape(Cout, 1) - mean * scale

    # ---- pass 2: BN-apply + ReLU fused; parallel grid; lane-dense phase-major out
    yph = pl.pallas_call(
        _bn_relu_kernel,
        out_shape=jax.ShapeDtypeStruct((4, N, Cout, H * W), f32),
        grid_spec=pltpu.PrefetchScalarGridSpec(
            num_scalar_prefetch=0,
            grid=grid,
            in_specs=[zph_spec, col_spec, col_spec],
            out_specs=zph_spec),
        compiler_params=pltpu.CompilerParams(
            dimension_semantics=("parallel", "parallel"),
            vmem_limit_bytes=_VMEM_LIMIT),
    )(zph, scale, shift)

    # ---- final phase interleave: out[n, c, 2i+a, 2j+b] = yph[2a+b, n, c, i*W+j]
    y6 = yph.reshape(2, 2, N, Cout, H, W)
    out = jnp.transpose(y6, (2, 3, 4, 0, 5, 1)).reshape(N, Cout, 2 * H, 2 * W)
    return out


# --------------------------------------------------------------------------
# pure-JAX reference (matches the PyTorch module in train() mode)
# --------------------------------------------------------------------------
def _reference(x_nchw, conv_w, conv_b, bn_gamma, bn_beta):
    x_up = jnp.repeat(jnp.repeat(x_nchw, 2, axis=2), 2, axis=3)
    conv = lax.conv_general_dilated(
        x_up, conv_w, window_strides=(1, 1), padding=((1, 1), (1, 1)),
        dimension_numbers=("NCHW", "OIHW", "NCHW"))
    conv = conv + conv_b[None, :, None, None]
    mean = jnp.mean(conv, axis=(0, 2, 3), keepdims=True)
    var = jnp.mean((conv - mean) ** 2, axis=(0, 2, 3), keepdims=True)
    y = (conv - mean) * lax.rsqrt(var + _BN_EPS)
    y = y * bn_gamma[None, :, None, None] + bn_beta[None, :, None, None]
    return jnp.maximum(y, 0.0)


# --------------------------------------------------------------------------
# main
# --------------------------------------------------------------------------
if __name__ == "__main__":
    key = jax.random.PRNGKey(0)
    k_x, k_w, k_b = jax.random.split(key, 3)

    N, Cin, H, W = 2, 4, 16, 16
    Cout = 8

    x = jax.random.normal(k_x, (N, Cin, H, W), dtype=jnp.float32)
    conv_w = 0.1 * jax.random.normal(k_w, (Cout, Cin, 3, 3), dtype=jnp.float32)
    conv_b = 0.05 * jax.random.normal(k_b, (Cout,), dtype=jnp.float32)
    bn_gamma = jnp.ones((Cout,), dtype=jnp.float32)   # BatchNorm2d default init
    bn_beta = jnp.zeros((Cout,), dtype=jnp.float32)

    out = jax.block_until_ready(upsample2x_block(x, conv_w, conv_b, bn_gamma, bn_beta))
    ref = _reference(x, conv_w, conv_b, bn_gamma, bn_beta)

    assert out.shape == (N, Cout, 2 * H, 2 * W), out.shape
    max_err = float(jnp.max(jnp.abs(out - ref)))
    assert max_err < 2e-4, max_err

    print("KERNEL_OK")
</pallas_src>

<mosaic_0001>
module attributes {stable_mosaic.version = 11 : i64} {
  func.func @_conv_stats_kernel(%arg0: i32, %arg1: i32, %arg2: memref<3x1x16x18x4xf32, #tpu.memory_space<vmem>>, %arg3: memref<4x4x8x4xf32, #tpu.memory_space<vmem>>, %arg4: memref<4x1x8x256xf32, #tpu.memory_space<vmem>>, %arg5: memref<8x1xf32, #tpu.memory_space<vmem>>, %arg6: memref<8x1xf32, #tpu.memory_space<vmem>>) attributes {dimension_semantics = [#tpu.dimension_semantics<arbitrary>, #tpu.dimension_semantics<arbitrary>], iteration_bounds = array<i64: 2, 1>, scalar_prefetch = 0 : i64, scratch_operands = 0 : i64, tpu.core_type = #tpu.core_type<tc>, window_params = [{transform_indices = @transform_0, window_bounds = array<i64: 3, 1, 16, 18, 4>}, {pipeline_mode = #tpu.pipeline_mode<synchronous>, transform_indices = @transform_1, window_bounds = array<i64: 4, 4, 8, 4>}, {transform_indices = @transform_2, window_bounds = array<i64: 4, 1, 8, 256>}, {pipeline_mode = #tpu.pipeline_mode<synchronous>, transform_indices = @transform_3, window_bounds = array<i64: 8, 1>}, {pipeline_mode = #tpu.pipeline_mode<synchronous>, transform_indices = @transform_4, window_bounds = array<i64: 8, 1>}]} {
    %c0_i32 = arith.constant 0 : i32
    %0 = arith.cmpi eq, %arg0, %c0_i32 : i32
    %c0_i32_0 = arith.constant 0 : i32
    %1 = arith.cmpi eq, %arg1, %c0_i32_0 : i32
    %2 = arith.andi %0, %1 : i1
    %3 = arith.extui %2 : i1 to i32
    %c0_i32_1 = arith.constant 0 : i32
    %4 = arith.cmpi ne, %3, %c0_i32_1 : i32
    scf.if %4 {
      %cst_54 = arith.constant 0.000000e+00 : f32
      %159 = vector.broadcast %cst_54 : f32 to vector<8x1xf32>
      %c0_55 = arith.constant 0 : index
      %c0_56 = arith.constant 0 : index
      %160 = vector.load %arg5[%c0_55, %c0_56] : memref<8x1xf32, #tpu.memory_space<vmem>>, vector<8x1xf32>
      tpu.vector_store %arg5[%c0_55, %c0_56], %159 {strides = array<i32>} : memref<8x1xf32, #tpu.memory_space<vmem>>, vector<8x1xf32>,
      %cst_57 = arith.constant 0.000000e+00 : f32
      %161 = vector.broadcast %cst_57 : f32 to vector<8x1xf32>
      %c0_58 = arith.constant 0 : index
      %c0_59 = arith.constant 0 : index
      %162 = vector.load %arg6[%c0_58, %c0_59] : memref<8x1xf32, #tpu.memory_space<vmem>>, vector<8x1xf32>
      tpu.vector_store %arg6[%c0_58, %c0_59], %161 {strides = array<i32>} : memref<8x1xf32, #tpu.memory_space<vmem>>, vector<8x1xf32>,
    } else {
    }
    %c0 = arith.constant 0 : index
    %c0_2 = arith.constant 0 : index
    %c0_3 = arith.constant 0 : index
    %c0_4 = arith.constant 0 : index
    %c0_5 = arith.constant 0 : index
    %5 = vector.load %arg2[%c0, %c0_2, %c0_3, %c0_4, %c0_5] : memref<3x1x16x18x4xf32, #tpu.memory_space<vmem>>, vector<3x1x16x18x4xf32>
    %c0_6 = arith.constant 0 : index
    %c0_7 = arith.constant 0 : index
    %c0_8 = arith.constant 0 : index
    %c0_9 = arith.constant 0 : index
    %6 = vector.load %arg3[%c0_6, %c0_7, %c0_8, %c0_9] : memref<4x4x8x4xf32, #tpu.memory_space<vmem>>, vector<4x4x8x4xf32>
    %7 = vector.extract_strided_slice %5 {offsets = [0, 0, 0, 0, 0], sizes = [1, 1, 16, 16, 4], strides = [1, 1, 1, 1, 1]} : vector<3x1x16x18x4xf32> to vector<1x1x16x16x4xf32>
    %8 = vector.shape_cast %7 : vector<1x1x16x16x4xf32> to vector<16x16x4xf32>
    %9 = vector.shape_cast %8 : vector<16x16x4xf32> to vector<256x4xf32>
    %10 = vector.extract_strided_slice %6 {offsets = [0, 0, 0, 0], sizes = [1, 1, 8, 4], strides = [1, 1, 1, 1]} : vector<4x4x8x4xf32> to vector<1x1x8x4xf32>
    %11 = vector.shape_cast %10 : vector<1x1x8x4xf32> to vector<8x4xf32>
    %cst = arith.constant dense<0.000000e+00> : vector<8x256xf32>
    %12 = tpu.matmul %11, %9, %cst {dimension_numbers = #tpu.dot_dimension_numbers<[1], [1], [0], [0], [0, 0, 1, 0], [], []>} : vector<8x4xf32>, vector<256x4xf32>, vector<8x256xf32> -> vector<8x256xf32>
    %13 = vector.extract_strided_slice %5 {offsets = [0, 0, 0, 1, 0], sizes = [1, 1, 16, 16, 4], strides = [1, 1, 1, 1, 1]} : vector<3x1x16x18x4xf32> to vector<1x1x16x16x4xf32>
    %14 = vector.shape_cast %13 : vector<1x1x16x16x4xf32> to vector<16x16x4xf32>
    %15 = vector.shape_cast %14 : vector<16x16x4xf32> to vector<256x4xf32>
    %16 = vector.extract_strided_slice %6 {offsets = [0, 1, 0, 0], sizes = [1, 1, 8, 4], strides = [1, 1, 1, 1]} : vector<4x4x8x4xf32> to vector<1x1x8x4xf32>
    %17 = vector.shape_cast %16 : vector<1x1x8x4xf32> to vector<8x4xf32>
    %cst_10 = arith.constant dense<0.000000e+00> : vector<8x256xf32>
    %18 = tpu.matmul %17, %15, %cst_10 {dimension_numbers = #tpu.dot_dimension_numbers<[1], [1], [0], [0], [0, 0, 1, 0], [], []>} : vector<8x4xf32>, vector<256x4xf32>, vector<8x256xf32> -> vector<8x256xf32>
    %19 = arith.addf %12, %18 : vector<8x256xf32>
    %20 = vector.extract_strided_slice %5 {offsets = [1, 0, 0, 0, 0], sizes = [1, 1, 16, 16, 4], strides = [1, 1, 1, 1, 1]} : vector<3x1x16x18x4xf32> to vector<1x1x16x16x4xf32>
    %21 = vector.shape_cast %20 : vector<1x1x16x16x4xf32> to vector<16x16x4xf32>
    %22 = vector.shape_cast %21 : vector<16x16x4xf32> to vector<256x4xf32>
    %23 = vector.extract_strided_slice %6 {offsets = [0, 2, 0, 0], sizes = [1, 1, 8, 4], strides = [1, 1, 1, 1]} : vector<4x4x8x4xf32> to vector<1x1x8x4xf32>
    %24 = vector.shape_cast %23 : vector<1x1x8x4xf32> to vector<8x4xf32>
    %cst_11 = arith.constant dense<0.000000e+00> : vector<8x256xf32>
    %25 = tpu.matmul %24, %22, %cst_11 {dimension_numbers = #tpu.dot_dimension_numbers<[1], [1], [0], [0], [0, 0, 1, 0], [], []>} : vector<8x4xf32>, vector<256x4xf32>, vector<8x256xf32> -> vector<8x256xf32>
    %26 = arith.addf %19, %25 : vector<8x256xf32>
    %27 = vector.extract_strided_slice %5 {offsets = [1, 0, 0, 1, 0], sizes = [1, 1, 16, 16, 4], strides = [1, 1, 1, 1, 1]} : vector<3x1x16x18x4xf32> to vector<1x1x16x16x4xf32>
    %28 = vector.shape_cast %27 : vector<1x1x16x16x4xf32> to vector<16x16x4xf32>
    %29 = vector.shape_cast %28 : vector<16x16x4xf32> to vector<256x4xf32>
    %30 = vector.extract_strided_slice %6 {offsets = [0, 3, 0, 0], sizes = [1, 1, 8, 4], strides = [1, 1, 1, 1]} : vector<4x4x8x4xf32> to vector<1x1x8x4xf32>
    %31 = vector.shape_cast %30 : vector<1x1x8x4xf32> to vector<8x4xf32>
    %cst_12 = arith.constant dense<0.000000e+00> : vector<8x256xf32>
    %32 = tpu.matmul %31, %29, %cst_12 {dimension_numbers = #tpu.dot_dimension_numbers<[1], [1], [0], [0], [0, 0, 1, 0], [], []>} : vector<8x4xf32>, vector<256x4xf32>, vector<8x256xf32> -> vector<8x256xf32>
    %33 = arith.addf %26, %32 : vector<8x256xf32>
    %34 = vector.extract_strided_slice %5 {offsets = [0, 0, 0, 1, 0], sizes = [1, 1, 16, 16, 4], strides = [1, 1, 1, 1, 1]} : vector<3x1x16x18x4xf32> to vector<1x1x16x16x4xf32>
    %35 = vector.shape_cast %34 : vector<1x1x16x16x4xf32> to vector<16x16x4xf32>
    %36 = vector.shape_cast %35 : vector<16x16x4xf32> to vector<256x4xf32>
    %37 = vector.extract_strided_slice %6 {offsets = [1, 0, 0, 0], sizes = [1, 1, 8, 4], strides = [1, 1, 1, 1]} : vector<4x4x8x4xf32> to vector<1x1x8x4xf32>
    %38 = vector.shape_cast %37 : vector<1x1x8x4xf32> to vector<8x4xf32>
    %cst_13 = arith.constant dense<0.000000e+00> : vector<8x256xf32>
    %39 = tpu.matmul %38, %36, %cst_13 {dimension_numbers = #tpu.dot_dimension_numbers<[1], [1], [0], [0], [0, 0, 1, 0], [], []>} : vector<8x4xf32>, vector<256x4xf32>, vector<8x256xf32> -> vector<8x256xf32>
    %40 = vector.extract_strided_slice %5 {offsets = [0, 0, 0, 2, 0], sizes = [1, 1, 16, 16, 4], strides = [1, 1, 1, 1, 1]} : vector<3x1x16x18x4xf32> to vector<1x1x16x16x4xf32>
    %41 = vector.shape_cast %40 : vector<1x1x16x16x4xf32> to vector<16x16x4xf32>
    %42 = vector.shape_cast %41 : vector<16x16x4xf32> to vector<256x4xf32>
    %43 = vector.extract_strided_slice %6 {offsets = [1, 1, 0, 0], sizes = [1, 1, 8, 4], strides = [1, 1, 1, 1]} : vector<4x4x8x4xf32> to vector<1x1x8x4xf32>
    %44 = vector.shape_cast %43 : vector<1x1x8x4xf32> to vector<8x4xf32>
    %cst_14 = arith.constant dense<0.000000e+00> : vector<8x256xf32>
    %45 = tpu.matmul %44, %42, %cst_14 {dimension_numbers = #tpu.dot_dimension_numbers<[1], [1], [0], [0], [0, 0, 1, 0], [], []>} : vector<8x4xf32>, vector<256x4xf32>, vector<8x256xf32> -> vector<8x256xf32>
    %46 = arith.addf %39, %45 : vector<8x256xf32>
    %47 = vector.extract_strided_slice %5 {offsets = [1, 0, 0, 1, 0], sizes = [1, 1, 16, 16, 4], strides = [1, 1, 1, 1, 1]} : vector<3x1x16x18x4xf32> to vector<1x1x16x16x4xf32>
    %48 = vector.shape_cast %47 : vector<1x1x16x16x4xf32> to vector<16x16x4xf32>
    %49 = vector.shape_cast %48 : vector<16x16x4xf32> to vector<256x4xf32>
    %50 = vector.extract_strided_slice %6 {offsets = [1, 2, 0, 0], sizes = [1, 1, 8, 4], strides = [1, 1, 1, 1]} : vector<4x4x8x4xf32> to vector<1x1x8x4xf32>
    %51 = vector.shape_cast %50 : vector<1x1x8x4xf32> to vector<8x4xf32>
    %cst_15 = arith.constant dense<0.000000e+00> : vector<8x256xf32>
    %52 = tpu.matmul %51, %49, %cst_15 {dimension_numbers = #tpu.dot_dimension_numbers<[1], [1], [0], [0], [0, 0, 1, 0], [], []>} : vector<8x4xf32>, vector<256x4xf32>, vector<8x256xf32> -> vector<8x256xf32>
    %53 = arith.addf %46, %52 : vector<8x256xf32>
    %54 = vector.extract_strided_slice %5 {offsets = [1, 0, 0, 2, 0], sizes = [1, 1, 16, 16, 4], strides = [1, 1, 1, 1, 1]} : vector<3x1x16x18x4xf32> to vector<1x1x16x16x4xf32>
    %55 = vector.shape_cast %54 : vector<1x1x16x16x4xf32> to vector<16x16x4xf32>
    %56 = vector.shape_cast %55 : vector<16x16x4xf32> to vector<256x4xf32>
    %57 = vector.extract_strided_slice %6 {offsets = [1, 3, 0, 0], sizes = [1, 1, 8, 4], strides = [1, 1, 1, 1]} : vector<4x4x8x4xf32> to vector<1x1x8x4xf32>
    %58 = vector.shape_cast %57 : vector<1x1x8x4xf32> to vector<8x4xf32>
    %cst_16 = arith.constant dense<0.000000e+00> : vector<8x256xf32>
    %59 = tpu.matmul %58, %56, %cst_16 {dimension_numbers = #tpu.dot_dimension_numbers<[1], [1], [0], [0], [0, 0, 1, 0], [], []>} : vector<8x4xf32>, vector<256x4xf32>, vector<8x256xf32> -> vector<8x256xf32>
    %60 = arith.addf %53, %59 : vector<8x256xf32>
    %61 = vector.extract_strided_slice %5 {offsets = [1, 0, 0, 0, 0], sizes = [1, 1, 16, 16, 4], strides = [1, 1, 1, 1, 1]} : vector<3x1x16x18x4xf32> to vector<1x1x16x16x4xf32>
    %62 = vector.shape_cast %61 : vector<1x1x16x16x4xf32> to vector<16x16x4xf32>
    %63 = vector.shape_cast %62 : vector<16x16x4xf32> to vector<256x4xf32>
    %64 = vector.extract_strided_slice %6 {offsets = [2, 0, 0, 0], sizes = [1, 1, 8, 4], strides = [1, 1, 1, 1]} : vector<4x4x8x4xf32> to vector<1x1x8x4xf32>
    %65 = vector.shape_cast %64 : vector<1x1x8x4xf32> to vector<8x4xf32>
    %cst_17 = arith.constant dense<0.000000e+00> : vector<8x256xf32>
    %66 = tpu.matmul %65, %63, %cst_17 {dimension_numbers = #tpu.dot_dimension_numbers<[1], [1], [0], [0], [0, 0, 1, 0], [], []>} : vector<8x4xf32>, vector<256x4xf32>, vector<8x256xf32> -> vector<8x256xf32>
    %67 = vector.extract_strided_slice %5 {offsets = [1, 0, 0, 1, 0], sizes = [1, 1, 16, 16, 4], strides = [1, 1, 1, 1, 1]} : vector<3x1x16x18x4xf32> to vector<1x1x16x16x4xf32>
    %68 = vector.shape_cast %67 : vector<1x1x16x16x4xf32> to vector<16x16x4xf32>
    %69 = vector.shape_cast %68 : vector<16x16x4xf32> to vector<256x4xf32>
    %70 = vector.extract_strided_slice %6 {offsets = [2, 1, 0, 0], sizes = [1, 1, 8, 4], strides = [1, 1, 1, 1]} : vector<4x4x8x4xf32> to vector<1x1x8x4xf32>
    %71 = vector.shape_cast %70 : vector<1x1x8x4xf32> to vector<8x4xf32>
    %cst_18 = arith.constant dense<0.000000e+00> : vector<8x256xf32>
    %72 = tpu.matmul %71, %69, %cst_18 {dimension_numbers = #tpu.dot_dimension_numbers<[1], [1], [0], [0], [0, 0, 1, 0], [], []>} : vector<8x4xf32>, vector<256x4xf32>, vector<8x256xf32> -> vector<8x256xf32>
    %73 = arith.addf %66, %72 : vector<8x256xf32>
    %74 = vector.extract_strided_slice %5 {offsets = [2, 0, 0, 0, 0], sizes = [1, 1, 16, 16, 4], strides = [1, 1, 1, 1, 1]} : vector<3x1x16x18x4xf32> to vector<1x1x16x16x4xf32>
    %75 = vector.shape_cast %74 : vector<1x1x16x16x4xf32> to vector<16x16x4xf32>
    %76 = vector.shape_cast %75 : vector<16x16x4xf32> to vector<256x4xf32>
    %77 = vector.extract_strided_slice %6 {offsets = [2, 2, 0, 0], sizes = [1, 1, 8, 4], strides = [1, 1, 1, 1]} : vector<4x4x8x4xf32> to vector<1x1x8x4xf32>
    %78 = vector.shape_cast %77 : vector<1x1x8x4xf32> to vector<8x4xf32>
    %cst_19 = arith.constant dense<0.000000e+00> : vector<8x256xf32>
    %79 = tpu.matmul %78, %76, %cst_19 {dimension_numbers = #tpu.dot_dimension_numbers<[1], [1], [0], [0], [0, 0, 1, 0], [], []>} : vector<8x4xf32>, vector<256x4xf32>, vector<8x256xf32> -> vector<8x256xf32>
    %80 = arith.addf %73, %79 : vector<8x256xf32>
    %81 = vector.extract_strided_slice %5 {offsets = [2, 0, 0, 1, 0], sizes = [1, 1, 16, 16, 4], strides = [1, 1, 1, 1, 1]} : vector<3x1x16x18x4xf32> to vector<1x1x16x16x4xf32>
    %82 = vector.shape_cast %81 : vector<1x1x16x16x4xf32> to vector<16x16x4xf32>
    %83 = vector.shape_cast %82 : vector<16x16x4xf32> to vector<256x4xf32>
    %84 = vector.extract_strided_slice %6 {offsets = [2, 3, 0, 0], sizes = [1, 1, 8, 4], strides = [1, 1, 1, 1]} : vector<4x4x8x4xf32> to vector<1x1x8x4xf32>
    %85 = vector.shape_cast %84 : vector<1x1x8x4xf32> to vector<8x4xf32>
    %cst_20 = arith.constant dense<0.000000e+00> : vector<8x256xf32>
    %86 = tpu.matmul %85, %83, %cst_20 {dimension_numbers = #tpu.dot_dimension_numbers<[1], [1], [0], [0], [0, 0, 1, 0], [], []>} : vector<8x4xf32>, vector<256x4xf32>, vector<8x256xf32> -> vector<8x256xf32>
    %87 = arith.addf %80, %86 : vector<8x256xf32>
    %88 = vector.extract_strided_slice %5 {offsets = [1, 0, 0, 1, 0], sizes = [1, 1, 16, 16, 4], strides = [1, 1, 1, 1, 1]} : vector<3x1x16x18x4xf32> to vector<1x1x16x16x4xf32>
    %89 = vector.shape_cast %88 : vector<1x1x16x16x4xf32> to vector<16x16x4xf32>
    %90 = vector.shape_cast %89 : vector<16x16x4xf32> to vector<256x4xf32>
    %91 = vector.extract_strided_slice %6 {offsets = [3, 0, 0, 0], sizes = [1, 1, 8, 4], strides = [1, 1, 1, 1]} : vector<4x4x8x4xf32> to vector<1x1x8x4xf32>
    %92 = vector.shape_cast %91 : vector<1x1x8x4xf32> to vector<8x4xf32>
    %cst_21 = arith.constant dense<0.000000e+00> : vector<8x256xf32>
    %93 = tpu.matmul %92, %90, %cst_21 {dimension_numbers = #tpu.dot_dimension_numbers<[1], [1], [0], [0], [0, 0, 1, 0], [], []>} : vector<8x4xf32>, vector<256x4xf32>, vector<8x256xf32> -> vector<8x256xf32>
    %94 = vector.extract_strided_slice %5 {offsets = [1, 0, 0, 2, 0], sizes = [1, 1, 16, 16, 4], strides = [1, 1, 1, 1, 1]} : vector<3x1x16x18x4xf32> to vector<1x1x16x16x4xf32>
    %95 = vector.shape_cast %94 : vector<1x1x16x16x4xf32> to vector<16x16x4xf32>
    %96 = vector.shape_cast %95 : vector<16x16x4xf32> to vector<256x4xf32>
    %97 = vector.extract_strided_slice %6 {offsets = [3, 1, 0, 0], sizes = [1, 1, 8, 4], strides = [1, 1, 1, 1]} : vector<4x4x8x4xf32> to vector<1x1x8x4xf32>
    %98 = vector.shape_cast %97 : vector<1x1x8x4xf32> to vector<8x4xf32>
    %cst_22 = arith.constant dense<0.000000e+00> : vector<8x256xf32>
    %99 = tpu.matmul %98, %96, %cst_22 {dimension_numbers = #tpu.dot_dimension_numbers<[1], [1], [0], [0], [0, 0, 1, 0], [], []>} : vector<8x4xf32>, vector<256x4xf32>, vector<8x256xf32> -> vector<8x256xf32>
    %100 = arith.addf %93, %99 : vector<8x256xf32>
    %101 = vector.extract_strided_slice %5 {offsets = [2, 0, 0, 1, 0], sizes = [1, 1, 16, 16, 4], strides = [1, 1, 1, 1, 1]} : vector<3x1x16x18x4xf32> to vector<1x1x16x16x4xf32>
    %102 = vector.shape_cast %101 : vector<1x1x16x16x4xf32> to vector<16x16x4xf32>
    %103 = vector.shape_cast %102 : vector<16x16x4xf32> to vector<256x4xf32>
    %104 = vector.extract_strided_slice %6 {offsets = [3, 2, 0, 0], sizes = [1, 1, 8, 4], strides = [1, 1, 1, 1]} : vector<4x4x8x4xf32> to vector<1x1x8x4xf32>
    %105 = vector.shape_cast %104 : vector<1x1x8x4xf32> to vector<8x4xf32>
    %cst_23 = arith.constant dense<0.000000e+00> : vector<8x256xf32>
    %106 = tpu.matmul %105, %103, %cst_23 {dimension_numbers = #tpu.dot_dimension_numbers<[1], [1], [0], [0], [0, 0, 1, 0], [], []>} : vector<8x4xf32>, vector<256x4xf32>, vector<8x256xf32> -> vector<8x256xf32>
    %107 = arith.addf %100, %106 : vector<8x256xf32>
    %108 = vector.extract_strided_slice %5 {offsets = [2, 0, 0, 2, 0], sizes = [1, 1, 16, 16, 4], strides = [1, 1, 1, 1, 1]} : vector<3x1x16x18x4xf32> to vector<1x1x16x16x4xf32>
    %109 = vector.shape_cast %108 : vector<1x1x16x16x4xf32> to vector<16x16x4xf32>
    %110 = vector.shape_cast %109 : vector<16x16x4xf32> to vector<256x4xf32>
    %111 = vector.extract_strided_slice %6 {offsets = [3, 3, 0, 0], sizes = [1, 1, 8, 4], strides = [1, 1, 1, 1]} : vector<4x4x8x4xf32> to vector<1x1x8x4xf32>
    %112 = vector.shape_cast %111 : vector<1x1x8x4xf32> to vector<8x4xf32>
    %cst_24 = arith.constant dense<0.000000e+00> : vector<8x256xf32>
    %113 = tpu.matmul %112, %110, %cst_24 {dimension_numbers = #tpu.dot_dimension_numbers<[1], [1], [0], [0], [0, 0, 1, 0], [], []>} : vector<8x4xf32>, vector<256x4xf32>, vector<8x256xf32> -> vector<8x256xf32>
    %114 = arith.addf %107, %113 : vector<8x256xf32>
    %c0_25 = arith.constant 0 : index
    %c0_26 = arith.constant 0 : index
    %c0_27 = arith.constant 0 : index
    %c0_28 = arith.constant 0 : index
    %115 = vector.load %arg4[%c0_25, %c0_26, %c0_27, %c0_28] : memref<4x1x8x256xf32, #tpu.memory_space<vmem>>, vector<1x1x8x256xf32>
    %116 = vector.shape_cast %115 : vector<1x1x8x256xf32> to vector<8x256xf32>
    %117 = vector.shape_cast %33 : vector<8x256xf32> to vector<1x1x8x256xf32>
    tpu.vector_store %arg4[%c0_25, %c0_26, %c0_27, %c0_28], %117 {strides = array<i32>} : memref<4x1x8x256xf32, #tpu.memory_space<vmem>>, vector<1x1x8x256xf32>,
    %cst_29 = arith.constant dense<0.000000e+00> : vector<8xf32>
    %118 = vector.multi_reduction <add>, %33, %cst_29 [1] : vector<8x256xf32> to vector<8xf32>
    %119 = vector.shape_cast %118 : vector<8xf32> to vector<8x1xf32>
    %120 = arith.mulf %33, %33 : vector<8x256xf32>
    %cst_30 = arith.constant dense<0.000000e+00> : vector<8xf32>
    %121 = vector.multi_reduction <add>, %120, %cst_30 [1] : vector<8x256xf32> to vector<8xf32>
    %122 = vector.shape_cast %121 : vector<8xf32> to vector<8x1xf32>
    %c1 = arith.constant 1 : index
    %c0_31 = arith.constant 0 : index
    %c0_32 = arith.constant 0 : index
    %c0_33 = arith.constant 0 : index
    %123 = vector.load %arg4[%c1, %c0_31, %c0_32, %c0_33] : memref<4x1x8x256xf32, #tpu.memory_space<vmem>>, vector<1x1x8x256xf32>
    %124 = vector.shape_cast %123 : vector<1x1x8x256xf32> to vector<8x256xf32>
    %125 = vector.shape_cast %60 : vector<8x256xf32> to vector<1x1x8x256xf32>
    tpu.vector_store %arg4[%c1, %c0_31, %c0_32, %c0_33], %125 {strides = array<i32>} : memref<4x1x8x256xf32, #tpu.memory_space<vmem>>, vector<1x1x8x256xf32>,
    %cst_34 = arith.constant dense<0.000000e+00> : vector<8xf32>
    %126 = vector.multi_reduction <add>, %60, %cst_34 [1] : vector<8x256xf32> to vector<8xf32>
    %127 = vector.shape_cast %126 : vector<8xf32> to vector<8x1xf32>
    %128 = arith.mulf %60, %60 : vector<8x256xf32>
    %cst_35 = arith.constant dense<0.000000e+00> : vector<8xf32>
    %129 = vector.multi_reduction <add>, %128, %cst_35 [1] : vector<8x256xf32> to vector<8xf32>
    %130 = vector.shape_cast %129 : vector<8xf32> to vector<8x1xf32>
    %131 = arith.addf %119, %127 : vector<8x1xf32>
    %132 = arith.addf %122, %130 : vector<8x1xf32>
    %c2 = arith.constant 2 : index
    %c0_36 = arith.constant 0 : index
    %c0_37 = arith.constant 0 : index
    %c0_38 = arith.constant 0 : index
    %133 = vector.load %arg4[%c2, %c0_36, %c0_37, %c0_38] : memref<4x1x8x256xf32, #tpu.memory_space<vmem>>, vector<1x1x8x256xf32>
    %134 = vector.shape_cast %133 : vector<1x1x8x256xf32> to vector<8x256xf32>
    %135 = vector.shape_cast %87 : vector<8x256xf32> to vector<1x1x8x256xf32>
    tpu.vector_store %arg4[%c2, %c0_36, %c0_37, %c0_38], %135 {strides = array<i32>} : memref<4x1x8x256xf32, #tpu.memory_space<vmem>>, vector<1x1x8x256xf32>,
    %cst_39 = arith.constant dense<0.000000e+00> : vector<8xf32>
    %136 = vector.multi_reduction <add>, %87, %cst_39 [1] : vector<8x256xf32> to vector<8xf32>
    %137 = vector.shape_cast %136 : vector<8xf32> to vector<8x1xf32>
    %138 = arith.mulf %87, %87 : vector<8x256xf32>
    %cst_40 = arith.constant dense<0.000000e+00> : vector<8xf32>
    %139 = vector.multi_reduction <add>, %138, %cst_40 [1] : vector<8x256xf32> to vector<8xf32>
    %140 = vector.shape_cast %139 : vector<8xf32> to vector<8x1xf32>
    %141 = arith.addf %131, %137 : vector<8x1xf32>
    %142 = arith.addf %132, %140 : vector<8x1xf32>
    %c3 = arith.constant 3 : index
    %c0_41 = arith.constant 0 : index
    %c0_42 = arith.constant 0 : index
    %c0_43 = arith.constant 0 : index
    %143 = vector.load %arg4[%c3, %c0_41, %c0_42, %c0_43] : memref<4x1x8x256xf32, #tpu.memory_space<vmem>>, vector<1x1x8x256xf32>
    %144 = vector.shape_cast %143 : vector<1x1x8x256xf32> to vector<8x256xf32>
    %145 = vector.shape_cast %114 : vector<8x256xf32> to vector<1x1x8x256xf32>
    tpu.vector_store %arg4[%c3, %c0_41, %c0_42, %c0_43], %145 {strides = array<i32>} : memref<4x1x8x256xf32, #tpu.memory_space<vmem>>, vector<1x1x8x256xf32>,
    %cst_44 = arith.constant dense<0.000000e+00> : vector<8xf32>
    %146 = vector.multi_reduction <add>, %114, %cst_44 [1] : vector<8x256xf32> to vector<8xf32>
    %147 = vector.shape_cast %146 : vector<8xf32> to vector<8x1xf32>
    %148 = arith.mulf %114, %114 : vector<8x256xf32>
    %cst_45 = arith.constant dense<0.000000e+00> : vector<8xf32>
    %149 = vector.multi_reduction <add>, %148, %cst_45 [1] : vector<8x256xf32> to vector<8xf32>
    %150 = vector.shape_cast %149 : vector<8xf32> to vector<8x1xf32>
    %151 = arith.addf %141, %147 : vector<8x1xf32>
    %152 = arith.addf %142, %150 : vector<8x1xf32>
    %c0_46 = arith.constant 0 : index
    %c0_47 = arith.constant 0 : index
    %153 = vector.load %arg5[%c0_46, %c0_47] : memref<8x1xf32, #tpu.memory_space<vmem>>, vector<8x1xf32>
    %154 = arith.addf %153, %151 : vector<8x1xf32>
    %c0_48 = arith.constant 0 : index
    %c0_49 = arith.constant 0 : index
    %155 = vector.load %arg5[%c0_48, %c0_49] : memref<8x1xf32, #tpu.memory_space<vmem>>, vector<8x1xf32>
    tpu.vector_store %arg5[%c0_48, %c0_49], %154 {strides = array<i32>} : memref<8x1xf32, #tpu.memory_space<vmem>>, vector<8x1xf32>,
    %c0_50 = arith.constant 0 : index
    %c0_51 = arith.constant 0 : index
    %156 = vector.load %arg6[%c0_50, %c0_51] : memref<8x1xf32, #tpu.memory_space<vmem>>, vector<8x1xf32>
    %157 = arith.addf %156, %152 : vector<8x1xf32>
    %c0_52 = arith.constant 0 : index
    %c0_53 = arith.constant 0 : index
    %158 = vector.load %arg6[%c0_52, %c0_53] : memref<8x1xf32, #tpu.memory_space<vmem>>, vector<8x1xf32>
    tpu.vector_store %arg6[%c0_52, %c0_53], %157 {strides = array<i32>} : memref<8x1xf32, #tpu.memory_space<vmem>>, vector<8x1xf32>,
    return
  }
  func.func @transform_0(%arg0: i32, %arg1: i32) -> (i32, i32, i32, i32, i32) {
    %c0_i32 = arith.constant 0 : i32
    %c0_i32_0 = arith.constant 0 : i32
    %c0_i32_1 = arith.constant 0 : i32
    %c0_i32_2 = arith.constant 0 : i32
    return %c0_i32, %arg0, %arg1, %c0_i32_0, %c0_i32_1 : i32, i32, i32, i32, i32
  }
  func.func @transform_1(%arg0: i32, %arg1: i32) -> (i32, i32, i32, i32) {
    %c0_i32 = arith.constant 0 : i32
    %c0_i32_0 = arith.constant 0 : i32
    %c0_i32_1 = arith.constant 0 : i32
    %c0_i32_2 = arith.constant 0 : i32
    %c0_i32_3 = arith.constant 0 : i32
    return %c0_i32, %c0_i32_0, %c0_i32_1, %c0_i32_2 : i32, i32, i32, i32
  }
  func.func @transform_2(%arg0: i32, %arg1: i32) -> (i32, i32, i32, i32) {
    %c0_i32 = arith.constant 0 : i32
    %c0_i32_0 = arith.constant 0 : i32
    %c0_i32_1 = arith.constant 0 : i32
    return %c0_i32, %arg0, %c0_i32_0, %arg1 : i32, i32, i32, i32
  }
  func.func @transform_3(%arg0: i32, %arg1: i32) -> (i32, i32) {
    %c0_i32 = arith.constant 0 : i32
    %c0_i32_0 = arith.constant 0 : i32
    %c0_i32_1 = arith.constant 0 : i32
    return %c0_i32, %c0_i32_0 : i32, i32
  }
  func.func @transform_4(%arg0: i32, %arg1: i32) -> (i32, i32) {
    %c0_i32 = arith.constant 0 : i32
    %c0_i32_0 = arith.constant 0 : i32
    %c0_i32_1 = arith.constant 0 : i32
    return %c0_i32, %c0_i32_0 : i32, i32
  }
}

module attributes {stable_mosaic.version = 11 : i64} {
  func.func @_bn_relu_kernel(%arg0: i32, %arg1: i32, %arg2: memref<4x1x8x256xf32, #tpu.memory_space<vmem>>, %arg3: memref<8x1xf32, #tpu.memory_space<vmem>>, %arg4: memref<8x1xf32, #tpu.memory_space<vmem>>, %arg5: memref<4x1x8x256xf32, #tpu.memory_space<vmem>>) attributes {dimension_semantics = [#tpu.dimension_semantics<parallel>, #tpu.dimension_semantics<parallel>], iteration_bounds = array<i64: 2, 1>, scalar_prefetch = 0 : i64, scratch_operands = 0 : i64, tpu.core_type = #tpu.core_type<tc>, window_params = [{transform_indices = @transform_0, window_bounds = array<i64: 4, 1, 8, 256>}, {pipeline_mode = #tpu.pipeline_mode<synchronous>, transform_indices = @transform_1, window_bounds = array<i64: 8, 1>}, {pipeline_mode = #tpu.pipeline_mode<synchronous>, transform_indices = @transform_2, window_bounds = array<i64: 8, 1>}, {transform_indices = @transform_3, window_bounds = array<i64: 4, 1, 8, 256>}]} {
    %c0 = arith.constant 0 : index
    %c0_0 = arith.constant 0 : index
    %0 = vector.load %arg3[%c0, %c0_0] : memref<8x1xf32, #tpu.memory_space<vmem>>, vector<8x1xf32>
    %c0_1 = arith.constant 0 : index
    %c0_2 = arith.constant 0 : index
    %1 = vector.load %arg4[%c0_1, %c0_2] : memref<8x1xf32, #tpu.memory_space<vmem>>, vector<8x1xf32>
    %c0_3 = arith.constant 0 : index
    %c0_4 = arith.constant 0 : index
    %c0_5 = arith.constant 0 : index
    %c0_6 = arith.constant 0 : index
    %2 = vector.load %arg2[%c0_3, %c0_4, %c0_5, %c0_6] : memref<4x1x8x256xf32, #tpu.memory_space<vmem>>, vector<1x1x8x256xf32>
    %3 = vector.shape_cast %2 : vector<1x1x8x256xf32> to vector<8x256xf32>
    %4 = vector.broadcast %0 : vector<8x1xf32> to vector<8x256xf32>
    %5 = arith.mulf %3, %4 : vector<8x256xf32>
    %6 = vector.broadcast %1 : vector<8x1xf32> to vector<8x256xf32>
    %7 = arith.addf %5, %6 : vector<8x256xf32>
    %cst = arith.constant 0.000000e+00 : f32
    %8 = vector.broadcast %cst : f32 to vector<8x256xf32>
    %9 = arith.maximumf %7, %8 : vector<8x256xf32>
    %c0_7 = arith.constant 0 : index
    %c0_8 = arith.constant 0 : index
    %c0_9 = arith.constant 0 : index
    %c0_10 = arith.constant 0 : index
    %10 = vector.load %arg5[%c0_7, %c0_8, %c0_9, %c0_10] : memref<4x1x8x256xf32, #tpu.memory_space<vmem>>, vector<1x1x8x256xf32>
    %11 = vector.shape_cast %10 : vector<1x1x8x256xf32> to vector<8x256xf32>
    %12 = vector.shape_cast %9 : vector<8x256xf32> to vector<1x1x8x256xf32>
    tpu.vector_store %arg5[%c0_7, %c0_8, %c0_9, %c0_10], %12 {strides = array<i32>} : memref<4x1x8x256xf32, #tpu.memory_space<vmem>>, vector<1x1x8x256xf32>,
    %c1 = arith.constant 1 : index
    %c0_11 = arith.constant 0 : index
    %c0_12 = arith.constant 0 : index
    %c0_13 = arith.constant 0 : index
    %13 = vector.load %arg2[%c1, %c0_11, %c0_12, %c0_13] : memref<4x1x8x256xf32, #tpu.memory_space<vmem>>, vector<1x1x8x256xf32>
    %14 = vector.shape_cast %13 : vector<1x1x8x256xf32> to vector<8x256xf32>
    %15 = vector.broadcast %0 : vector<8x1xf32> to vector<8x256xf32>
    %16 = arith.mulf %14, %15 : vector<8x256xf32>
    %17 = vector.broadcast %1 : vector<8x1xf32> to vector<8x256xf32>
    %18 = arith.addf %16, %17 : vector<8x256xf32>
    %cst_14 = arith.constant 0.000000e+00 : f32
    %19 = vector.broadcast %cst_14 : f32 to vector<8x256xf32>
    %20 = arith.maximumf %18, %19 : vector<8x256xf32>
    %c1_15 = arith.constant 1 : index
    %c0_16 = arith.constant 0 : index
    %c0_17 = arith.constant 0 : index
    %c0_18 = arith.constant 0 : index
    %21 = vector.load %arg5[%c1_15, %c0_16, %c0_17, %c0_18] : memref<4x1x8x256xf32, #tpu.memory_space<vmem>>, vector<1x1x8x256xf32>
    %22 = vector.shape_cast %21 : vector<1x1x8x256xf32> to vector<8x256xf32>
    %23 = vector.shape_cast %20 : vector<8x256xf32> to vector<1x1x8x256xf32>
    tpu.vector_store %arg5[%c1_15, %c0_16, %c0_17, %c0_18], %23 {strides = array<i32>} : memref<4x1x8x256xf32, #tpu.memory_space<vmem>>, vector<1x1x8x256xf32>,
    %c2 = arith.constant 2 : index
    %c0_19 = arith.constant 0 : index
    %c0_20 = arith.constant 0 : index
    %c0_21 = arith.constant 0 : index
    %24 = vector.load %arg2[%c2, %c0_19, %c0_20, %c0_21] : memref<4x1x8x256xf32, #tpu.memory_space<vmem>>, vector<1x1x8x256xf32>
    %25 = vector.shape_cast %24 : vector<1x1x8x256xf32> to vector<8x256xf32>
    %26 = vector.broadcast %0 : vector<8x1xf32> to vector<8x256xf32>
    %27 = arith.mulf %25, %26 : vector<8x256xf32>
    %28 = vector.broadcast %1 : vector<8x1xf32> to vector<8x256xf32>
    %29 = arith.addf %27, %28 : vector<8x256xf32>
    %cst_22 = arith.constant 0.000000e+00 : f32
    %30 = vector.broadcast %cst_22 : f32 to vector<8x256xf32>
    %31 = arith.maximumf %29, %30 : vector<8x256xf32>
    %c2_23 = arith.constant 2 : index
    %c0_24 = arith.constant 0 : index
    %c0_25 = arith.constant 0 : index
    %c0_26 = arith.constant 0 : index
    %32 = vector.load %arg5[%c2_23, %c0_24, %c0_25, %c0_26] : memref<4x1x8x256xf32, #tpu.memory_space<vmem>>, vector<1x1x8x256xf32>
    %33 = vector.shape_cast %32 : vector<1x1x8x256xf32> to vector<8x256xf32>
    %34 = vector.shape_cast %31 : vector<8x256xf32> to vector<1x1x8x256xf32>
    tpu.vector_store %arg5[%c2_23, %c0_24, %c0_25, %c0_26], %34 {strides = array<i32>} : memref<4x1x8x256xf32, #tpu.memory_space<vmem>>, vector<1x1x8x256xf32>,
    %c3 = arith.constant 3 : index
    %c0_27 = arith.constant 0 : index
    %c0_28 = arith.constant 0 : index
    %c0_29 = arith.constant 0 : index
    %35 = vector.load %arg2[%c3, %c0_27, %c0_28, %c0_29] : memref<4x1x8x256xf32, #tpu.memory_space<vmem>>, vector<1x1x8x256xf32>
    %36 = vector.shape_cast %35 : vector<1x1x8x256xf32> to vector<8x256xf32>
    %37 = vector.broadcast %0 : vector<8x1xf32> to vector<8x256xf32>
    %38 = arith.mulf %36, %37 : vector<8x256xf32>
    %39 = vector.broadcast %1 : vector<8x1xf32> to vector<8x256xf32>
    %40 = arith.addf %38, %39 : vector<8x256xf32>
    %cst_30 = arith.constant 0.000000e+00 : f32
    %41 = vector.broadcast %cst_30 : f32 to vector<8x256xf32>
    %42 = arith.maximumf %40, %41 : vector<8x256xf32>
    %c3_31 = arith.constant 3 : index
    %c0_32 = arith.constant 0 : index
    %c0_33 = arith.constant 0 : index
    %c0_34 = arith.constant 0 : index
    %43 = vector.load %arg5[%c3_31, %c0_32, %c0_33, %c0_34] : memref<4x1x8x256xf32, #tpu.memory_space<vmem>>, vector<1x1x8x256xf32>
    %44 = vector.shape_cast %43 : vector<1x1x8x256xf32> to vector<8x256xf32>
    %45 = vector.shape_cast %42 : vector<8x256xf32> to vector<1x1x8x256xf32>
    tpu.vector_store %arg5[%c3_31, %c0_32, %c0_33, %c0_34], %45 {strides = array<i32>} : memref<4x1x8x256xf32, #tpu.memory_space<vmem>>, vector<1x1x8x256xf32>,
    return
  }
  func.func @transform_0(%arg0: i32, %arg1: i32) -> (i32, i32, i32, i32) {
    %c0_i32 = arith.constant 0 : i32
    %c0_i32_0 = arith.constant 0 : i32
    %c0_i32_1 = arith.constant 0 : i32
    return %c0_i32, %arg0, %c0_i32_0, %arg1 : i32, i32, i32, i32
  }
  func.func @transform_1(%arg0: i32, %arg1: i32) -> (i32, i32) {
    %c0_i32 = arith.constant 0 : i32
    %c0_i32_0 = arith.constant 0 : i32
    %c0_i32_1 = arith.constant 0 : i32
    return %c0_i32, %c0_i32_0 : i32, i32
  }
  func.func @transform_2(%arg0: i32, %arg1: i32) -> (i32, i32) {
    %c0_i32 = arith.constant 0 : i32
    %c0_i32_0 = arith.constant 0 : i32
    %c0_i32_1 = arith.constant 0 : i32
    return %c0_i32, %c0_i32_0 : i32, i32
  }
  func.func @transform_3(%arg0: i32, %arg1: i32) -> (i32, i32, i32, i32) {
    %c0_i32 = arith.constant 0 : i32
    %c0_i32_0 = arith.constant 0 : i32
    %c0_i32_1 = arith.constant 0 : i32
    return %c0_i32, %arg0, %c0_i32_0, %arg1 : i32, i32, i32, i32
  }
}

</mosaic_0001>

<llo_original>
// kernel: upsample2x_block.3
$region0: #{upsample2x_block.3}
  #allocation0 [shape = 'u32[]', space=smem, size = 0x4, offset = 0x4, fixed_abs, tag = 'smem constant byte address 0x4 - core index']
  #allocation1 [shape = 'u32[144,128]{1,0:T(1,128)}', space=vmem, size = 0x12000, scoped, tag = 'internal scratch']
  %s0 = inlined_call_operand.vmem [shape: f32[4,2,8,256], index: 0, kind: input, shape index: {}]
  %s1 = inlined_call_operand.vmem [shape: f32[8,1], index: 1, kind: input, shape index: {}]
  %s2 = inlined_call_operand.vmem [shape: f32[8,1], index: 2, kind: input, shape index: {}]
  %s3 = inlined_call_operand.vmem [shape: f32[4,2,8,256], index: 3, kind: output, shape index: {}]
  %s4 = sld [smem:[#allocation0]]
  $region87: #{upsample2x_block.3} parent=0
    _
  %s6 = ssub.s32 1, %s4
  %s7 = scalar_select 0, %s6, %s4
  $region1: #{upsample2x_block.3} parent=0
    #allocation2 [shape = 'u8[65536]{0}', space=vmem, size = 0x10000, scoped, tag = 'input window, operand 0']
    #allocation3 [shape = 'u8[65536]{0}', space=vmem, size = 0x10000, scoped, tag = 'output window, operand 0']
    loop: start=0, step=1, limit=4
    $region2: #{upsample2x_block.3} parent=1 // loop_pre_header
      _
    $region3: #{upsample2x_block.3} parent=1 // loop_header
      %s9 = sphi 0, %s13
      %p10 = scmp.ge.s32.totalorder %s9, 4
      %s16 = sphi 0, %s28
      %s17 = sphi 0, %s24
      %s18 = sphi 0, %s16
      %s19 = sphi 0, %s17
      %s20 = sphi 0, %s18
      %s21 = sphi 0, %s19
      %s33 = sphi 0, %s35
      %s36 = sphi 0, %s33
      %s37 = sphi 0, %s36
      %s53 = sphi 0, %s37
      %s57 = sphi 0, %s57
      %s59 = sphi 0, %s57
      %s60 = sphi 0, %s59
      %s74 = sphi 0, %s60
      %s78 = sphi 0, %s78
      %s80 = sphi 0, %s78
      %s81 = sphi 0, %s80
      %s95 = sphi 0, %s81
      %s103 = sphi 0, %s105
      %s106 = sphi 0, %s103
      %s107 = sphi 0, %s106
      %s123 = sphi 0, %s107
    $region4: #{upsample2x_block.3} parent=1 // loop_header_branch
      %12 = sbr.rel (%p10) target = $region8
    $region5: #{upsample2x_block.3} parent=1 // loop_body
      %s14 = ssub.s32 %s9, 1
      %s15 = ssub.s32 %s9, 2
      %s22 = sadd.s32 1, %s17
      %p23 = scmp.ge.s32.totalorder %s22, 1
      %s24 = scalar_select %p23, 0, %s22
      %s25 = sadd.s32 1, %s16
      %s26 = scalar_select %p23, %s25, %s16
      %p27 = scmp.ge.s32.totalorder %s26, 2
      %s28 = scalar_select %p27, 0, %s26
      %s29 = ssub.s32 %s16, %s28
      %s30 = ssub.s32 %s17, %s24
      %s31 = sor.u32 %s29, %s30
      %p32 = scmp.eq.s32.totalorder %s31, 0
      %s34 = sadd.s32 %s33, 1
      %s35 = scalar_select %p32, %s33, %s34
      %p38 = pneg %p32
      %p39 = scmp.eq.s32.totalorder %s9, 1
      %p40 = por %p38, %p39
      %p41 = scmp.ne.s32.totalorder %s33, %s36
      %p42 = scmp.eq.s32.totalorder %s9, 0
      %p43 = por %p41, %p42
      %p44 = scmp.ne.s32.totalorder %s33, %s36
      %p45 = scmp.eq.s32.totalorder %s14, 1
      %p46 = por %p44, %p45
      %p47 = scmp.ne.s32.totalorder %s36, %s37
      %p48 = scmp.eq.s32.totalorder %s14, 0
      %p49 = por %p47, %p48
      %p50 = scmp.ne.s32.totalorder %s36, %s37
      %p51 = scmp.eq.s32.totalorder %s15, 1
      %p52 = por %p50, %p51
      %p54 = scmp.ne.s32.totalorder %s37, %s53
      %p55 = scmp.eq.s32.totalorder %s15, 0
      %p56 = por %p54, %p55
      %s58 = sadd.s32 %s57, 1
      %p61 = scmp.eq.s32.totalorder %s9, 1
      %p62 = scmp.ne.s32.totalorder %s57, %s59
      %p63 = scmp.eq.s32.totalorder %s9, 0
      %p64 = por %p62, %p63
      %p65 = scmp.ne.s32.totalorder %s57, %s59
      %p66 = scmp.eq.s32.totalorder %s14, 1
      %p67 = por %p65, %p66
      %p68 = scmp.ne.s32.totalorder %s59, %s60
      %p69 = scmp.eq.s32.totalorder %s14, 0
      %p70 = por %p68, %p69
      %p71 = scmp.ne.s32.totalorder %s59, %s60
      %p72 = scmp.eq.s32.totalorder %s15, 1
      %p73 = por %p71, %p72
      %p75 = scmp.ne.s32.totalorder %s60, %s74
      %p76 = scmp.eq.s32.totalorder %s15, 0
      %p77 = por %p75, %p76
      %s79 = sadd.s32 %s78, 1
      %p82 = scmp.eq.s32.totalorder %s9, 1
      %p83 = scmp.ne.s32.totalorder %s78, %s80
      %p84 = scmp.eq.s32.totalorder %s9, 0
      %p85 = por %p83, %p84
      %p86 = scmp.ne.s32.totalorder %s78, %s80
      %p87 = scmp.eq.s32.totalorder %s14, 1
      %p88 = por %p86, %p87
      %p89 = scmp.ne.s32.totalorder %s80, %s81
      %p90 = scmp.eq.s32.totalorder %s14, 0
      %p91 = por %p89, %p90
      %p92 = scmp.ne.s32.totalorder %s80, %s81
      %p93 = scmp.eq.s32.totalorder %s15, 1
      %p94 = por %p92, %p93
      %p96 = scmp.ne.s32.totalorder %s81, %s95
      %p97 = scmp.eq.s32.totalorder %s15, 0
      %p98 = por %p96, %p97
      %s99 = ssub.s32 %s16, %s28
      %s100 = ssub.s32 %s17, %s24
      %s101 = sor.u32 %s99, %s100
      %p102 = scmp.eq.s32.totalorder %s101, 0
      %s104 = sadd.s32 %s103, 1
      %s105 = scalar_select %p102, %s103, %s104
      %p108 = pneg %p102
      %p109 = scmp.eq.s32.totalorder %s9, 1
      %p110 = por %p108, %p109
      %p111 = scmp.ne.s32.totalorder %s103, %s106
      %p112 = scmp.eq.s32.totalorder %s9, 0
      %p113 = por %p111, %p112
      %p114 = scmp.ne.s32.totalorder %s103, %s106
      %p115 = scmp.eq.s32.totalorder %s14, 1
      %p116 = por %p114, %p115
      %p117 = scmp.ne.s32.totalorder %s106, %s107
      %p118 = scmp.eq.s32.totalorder %s14, 0
      %p119 = por %p117, %p118
      %p120 = scmp.ne.s32.totalorder %s106, %s107
      %p121 = scmp.eq.s32.totalorder %s15, 1
      %p122 = por %p120, %p121
      %p124 = scmp.ne.s32.totalorder %s107, %s123
      %p125 = scmp.eq.s32.totalorder %s15, 0
      %p126 = por %p124, %p125
      %p127 = scmp.le.s32.totalorder 1, %s9
      %p128 = scmp.lt.s32.totalorder %s9, 3
      %p129 = pnand %p127, %p128
      %p130 = pneg %p129
      // Predicated region
      $region9: #{upsample2x_block.3} parent=5 // pred_check
        _
      $region10: #{upsample2x_block.3} parent=5 // pred_check_branch
        %132 = sbr.rel (%p129) target = $region12
      $region11: #{upsample2x_block.3} parent=5 // pred_region
        %s133 = ssub.s32 %s9, 1
        // Predicated region
        $region13: #{upsample2x_block.3} parent=11 // pred_check
          %p134 = pneg %p70
        $region14: #{upsample2x_block.3} parent=11 // pred_check_branch
          %136 = sbr.rel (%p134) target = $region16
        $region15: #{upsample2x_block.3} parent=11 // pred_region
          _
        $region16: #{upsample2x_block.3} parent=11 // pred_fallthru
          _
        // Predicated region
        $region17: #{upsample2x_block.3} parent=11 // pred_check
          %p137 = pneg %p91
        $region18: #{upsample2x_block.3} parent=11 // pred_check_branch
          %139 = sbr.rel (%p137) target = $region20
        $region19: #{upsample2x_block.3} parent=11 // pred_region
          _
        $region20: #{upsample2x_block.3} parent=11 // pred_fallthru
          _
      $region12: #{upsample2x_block.3} parent=5 // pred_fallthru
        _
      %p140 = scmp.lt.s32.totalorder %s9, 2
      // Predicated region
      $region21: #{upsample2x_block.3} parent=5 // pred_check
        %p141 = pneg %p140
      $region22: #{upsample2x_block.3} parent=5 // pred_check_branch
        %143 = sbr.rel (%p141) target = $region24
      $region23: #{upsample2x_block.3} parent=5 // pred_region
        // Predicated region
        $region25: #{upsample2x_block.3} parent=23 // pred_check
          %p144 = pneg %p43
        $region26: #{upsample2x_block.3} parent=23 // pred_check_branch
          %146 = sbr.rel (%p144) target = $region28
        $region27: #{upsample2x_block.3} parent=23 // pred_region
          %s147 = sand.u32 %s33, 1
          %s148 = sand.u32 %s33, 1
          %s149 = smul.addr %s148, 64
          %s150 = scalar_lea.vmem [#allocation2], %s149
          %s151 = smul.u32 2, %s17
          %s152 = smul.addr %s16, 2
          %s153 = sadd.s32 %s151, %s152
          %s154 = smul.addr %s153, 8
          %s155 = scalar_lea.vmem %s0, %s154
          // Predicated region
          $region29: #{upsample2x_block.3} parent=27 // pred_check
            _
          $region30: #{upsample2x_block.3} parent=27 // pred_check_branch
            %157 = sbr.rel (0) target = $region32
          $region31: #{upsample2x_block.3} parent=27 // pred_region
            // Predicated region
            $region33: #{upsample2x_block.3} parent=31 // pred_check
              _
            $region34: #{upsample2x_block.3} parent=31 // pred_check_branch
              %159 = sbr.rel (0) target = $region36
            $region35: #{upsample2x_block.3} parent=31 // pred_region
              loop: start=0, step=1, limit=1
              $region37: #{upsample2x_block.3} parent=35 // loop_pre_header
                _
              $region38: #{upsample2x_block.3} parent=35 // loop_header
                %s161 = sphi 0, %s165
                %p162 = scmp.ge.s32.totalorder %s161, 1
                %s166 = sphi %s155, %s155
                %s167 = sphi %s150, %s150
              $region39: #{upsample2x_block.3} parent=35 // loop_header_branch
                %164 = sbr.rel (%p162) target = $region43
              $region40: #{upsample2x_block.3} parent=35 // loop_body
                %v168 = vld [vmem:[%s166] sm:$0xff]
                %169 = vst [vmem:[%s167] sm:$0xff] %v168
                %v170 = vld [vmem:[%s166 + $0x8] sm:$0xff]
                %171 = vst [vmem:[%s167 + $0x8] sm:$0xff] %v170
                %v172 = vld [vmem:[%s166 + $0x20] sm:$0xff]
                %173 = vst [vmem:[%s167 + $0x10] sm:$0xff] %v172
                %v174 = vld [vmem:[%s166 + $0x28] sm:$0xff]
                %175 = vst [vmem:[%s167 + $0x18] sm:$0xff] %v174
                %v176 = vld [vmem:[%s166 + $0x40] sm:$0xff]
                %177 = vst [vmem:[%s167 + $0x20] sm:$0xff] %v176
                %v178 = vld [vmem:[%s166 + $0x48] sm:$0xff]
                %179 = vst [vmem:[%s167 + $0x28] sm:$0xff] %v178
                %v180 = vld [vmem:[%s166 + $0x60] sm:$0xff]
                %181 = vst [vmem:[%s167 + $0x30] sm:$0xff] %v180
                %v182 = vld [vmem:[%s166 + $0x68] sm:$0xff]
                %183 = vst [vmem:[%s167 + $0x38] sm:$0xff] %v182
              $region41: #{upsample2x_block.3} parent=35 // loop_footer
                %s165 = sadd.s32 1, %s161
              $region42: #{upsample2x_block.3} parent=35 // loop_footer_branch
                %160 = sbr.rel target = $region38
              $region43: #{upsample2x_block.3} parent=35 // loop_exit
                _
            $region36: #{upsample2x_block.3} parent=31 // pred_fallthru
              _
            // Predicated region
            $region44: #{upsample2x_block.3} parent=31 // pred_check
              _
            $region45: #{upsample2x_block.3} parent=31 // pred_check_branch
              %185 = sbr.rel target = $region47
            $region46: #{upsample2x_block.3} parent=31 // pred_region
              _
            $region47: #{upsample2x_block.3} parent=31 // pred_fallthru
              _
          $region32: #{upsample2x_block.3} parent=27 // pred_fallthru
            _
          %186 = vnop
        $region28: #{upsample2x_block.3} parent=23 // pred_fallthru
          _
      $region24: #{upsample2x_block.3} parent=5 // pred_fallthru
        _
      %p187 = scmp.le.s32.totalorder 1, %s9
      %p188 = scmp.lt.s32.totalorder %s9, 3
      %p189 = pnand %p187, %p188
      %p190 = pneg %p189
      // Predicated region
      $region48: #{upsample2x_block.3} parent=5 // pred_check
        _
      $region49: #{upsample2x_block.3} parent=5 // pred_check_branch
        %192 = sbr.rel (%p189) target = $region51
      $region50: #{upsample2x_block.3} parent=5 // pred_region
        %s193 = ssub.s32 %s9, 1
        %s194 = sand.u32 %s36, 1
        %s195 = sand.u32 %s36, 1
        %s196 = smul.addr %s195, 64
        %s197 = scalar_lea.vmem [#allocation2], %s196
        // Predicated region
        $region52: #{upsample2x_block.3} parent=50 // pred_check
          %p198 = pneg %p49
        $region53: #{upsample2x_block.3} parent=50 // pred_check_branch
          %200 = sbr.rel (%p198) target = $region55
        $region54: #{upsample2x_block.3} parent=50 // pred_region
          _
        $region55: #{upsample2x_block.3} parent=50 // pred_fallthru
          _
        %s201 = sand.u32 %s36, 1
        %s202 = sand.u32 %s36, 1
        %s203 = smul.addr %s202, 64
        %s204 = scalar_lea.vmem [#allocation2], %s203
        %p205 = pneg %p49
        %p206 = pneg %p46
        %p207 = pneg %p70
        %p208 = pneg %p67
        %p209 = pneg %p91
        %p210 = pneg %p88
        %p211 = pneg %p119
        %p212 = pneg %p116
        %s213 = sand.u32 %s106, 1
        %s214 = sand.u32 %s106, 1
        %s215 = smul.addr %s214, 64
        %s216 = scalar_lea.vmem [#allocation3], %s215
        %s217 = smul.u32 2, %s19
        %s218 = smul.u32 2, %s19
        %v219 = vld [vmem:[%s1] sm:$0xff]
        %v220 = vld [vmem:[%s2] sm:$0xff]
        %v221 = vld [vmem:[%s197] sm:$0xff]
        %v222 = vld [vmem:[%s197 + $0x8] sm:$0xff]
        %224 = vset.pattern.permute.xlu0 0
        %225 = vperm.xlu0 %224, %v219
        %v226 = vpop.permute.xlu0 %225
        %v228 = vmul.f32 %v221, %v226
        %v229 = vmul.f32 %v222, %v226
        %231 = vset.pattern.permute.xlu0 0
        %232 = vperm.xlu0 %231, %v220
        %v233 = vpop.permute.xlu0 %232
        %v235 = vadd.f32 %v228, %v233
        %v236 = vadd.f32 %v229, %v233
        %v237 = vmax.f32 %v235, 0.0
        %v238 = vmax.f32 %v236, 0.0
        %239 = vst [vmem:[%s216] sm:$0xff] %v237
        %240 = vst [vmem:[%s216 + $0x8] sm:$0xff] %v238
        %s241 = scalar_lea.vmem %s197, 16 [#allocation2]
        %v242 = vld [vmem:[%s241] sm:$0xff]
        %v243 = vld [vmem:[%s241 + $0x8] sm:$0xff]
        %v244 = vmul.f32 %v242, %v226
        %v245 = vmul.f32 %v243, %v226
        %v246 = vadd.f32 %v244, %v233
        %v247 = vadd.f32 %v245, %v233
        %v248 = vmax.f32 %v246, 0.0
        %v249 = vmax.f32 %v247, 0.0
        %s250 = scalar_lea.vmem %s216, 16 [#allocation3]
        %251 = vst [vmem:[%s250] sm:$0xff] %v248
        %252 = vst [vmem:[%s250 + $0x8] sm:$0xff] %v249
        %s253 = scalar_lea.vmem %s197, 32 [#allocation2]
        %v254 = vld [vmem:[%s253] sm:$0xff]
        %v255 = vld [vmem:[%s253 + $0x8] sm:$0xff]
        %v256 = vmul.f32 %v254, %v226
        %v257 = vmul.f32 %v255, %v226
        %v258 = vadd.f32 %v256, %v233
        %v259 = vadd.f32 %v257, %v233
        %v260 = vmax.f32 %v258, 0.0
        %v261 = vmax.f32 %v259, 0.0
        %s262 = scalar_lea.vmem %s216, 32 [#allocation3]
        %263 = vst [vmem:[%s262] sm:$0xff] %v260
        %264 = vst [vmem:[%s262 + $0x8] sm:$0xff] %v261
        %s265 = scalar_lea.vmem %s197, 48 [#allocation2]
        %v266 = vld [vmem:[%s265] sm:$0xff]
        %v267 = vld [vmem:[%s265 + $0x8] sm:$0xff]
        %v268 = vmul.f32 %v266, %v226
        %v269 = vmul.f32 %v267, %v226
        %v270 = vadd.f32 %v268, %v233
        %v271 = vadd.f32 %v269, %v233
        %v272 = vmax.f32 %v270, 0.0
        %v273 = vmax.f32 %v271, 0.0
        %s274 = scalar_lea.vmem %s216, 48 [#allocation3]
        %275 = vst [vmem:[%s274] sm:$0xff] %v272
        %276 = vst [vmem:[%s274 + $0x8] sm:$0xff] %v273
        %s277 = sand.u32 %s106, 1
        %s278 = sand.u32 %s106, 1
        %s279 = smul.addr %s278, 64
        %s280 = scalar_lea.vmem [#allocation3], %s279
        // Predicated region
        $region56: #{upsample2x_block.3} parent=50 // pred_check
          %p281 = pneg %p116
        $region57: #{upsample2x_block.3} parent=50 // pred_check_branch
          %283 = sbr.rel (%p281) target = $region59
        $region58: #{upsample2x_block.3} parent=50 // pred_region
          %s284 = smul.u32 2, %s19
          %s285 = smul.addr %s18, 2
          %s286 = sadd.s32 %s284, %s285
          %s287 = smul.addr %s286, 8
          %s288 = scalar_lea.vmem %s3, %s287
          // Predicated region
          $region60: #{upsample2x_block.3} parent=58 // pred_check
            _
          $region61: #{upsample2x_block.3} parent=58 // pred_check_branch
            %290 = sbr.rel (0) target = $region63
          $region62: #{upsample2x_block.3} parent=58 // pred_region
            // Predicated region
            $region64: #{upsample2x_block.3} parent=62 // pred_check
              _
            $region65: #{upsample2x_block.3} parent=62 // pred_check_branch
              %292 = sbr.rel (0) target = $region67
            $region66: #{upsample2x_block.3} parent=62 // pred_region
              loop: start=0, step=1, limit=1
              $region68: #{upsample2x_block.3} parent=66 // loop_pre_header
                _
              $region69: #{upsample2x_block.3} parent=66 // loop_header
                %s294 = sphi 0, %s298
                %p295 = scmp.ge.s32.totalorder %s294, 1
                %s299 = sphi %s280, %s280
                %s300 = sphi %s288, %s288
              $region70: #{upsample2x_block.3} parent=66 // loop_header_branch
                %297 = sbr.rel (%p295) target = $region74
              $region71: #{upsample2x_block.3} parent=66 // loop_body
                %v301 = vld [vmem:[%s299] sm:$0xff]
                %302 = vst [vmem:[%s300] sm:$0xff] %v301
                %v303 = vld [vmem:[%s299 + $0x8] sm:$0xff]
                %304 = vst [vmem:[%s300 + $0x8] sm:$0xff] %v303
                %v305 = vld [vmem:[%s299 + $0x10] sm:$0xff]
                %306 = vst [vmem:[%s300 + $0x20] sm:$0xff] %v305
                %v307 = vld [vmem:[%s299 + $0x18] sm:$0xff]
                %308 = vst [vmem:[%s300 + $0x28] sm:$0xff] %v307
                %v309 = vld [vmem:[%s299 + $0x20] sm:$0xff]
                %310 = vst [vmem:[%s300 + $0x40] sm:$0xff] %v309
                %v311 = vld [vmem:[%s299 + $0x28] sm:$0xff]
                %312 = vst [vmem:[%s300 + $0x48] sm:$0xff] %v311
                %v313 = vld [vmem:[%s299 + $0x30] sm:$0xff]
                %314 = vst [vmem:[%s300 + $0x60] sm:$0xff] %v313
                %v315 = vld [vmem:[%s299 + $0x38] sm:$0xff]
                %316 = vst [vmem:[%s300 + $0x68] sm:$0xff] %v315
              $region72: #{upsample2x_block.3} parent=66 // loop_footer
                %s298 = sadd.s32 1, %s294
              $region73: #{upsample2x_block.3} parent=66 // loop_footer_branch
                %293 = sbr.rel target = $region69
              $region74: #{upsample2x_block.3} parent=66 // loop_exit
                _
            $region67: #{upsample2x_block.3} parent=62 // pred_fallthru
              _
            // Predicated region
            $region75: #{upsample2x_block.3} parent=62 // pred_check
              _
            $region76: #{upsample2x_block.3} parent=62 // pred_check_branch
              %318 = sbr.rel target = $region78
            $region77: #{upsample2x_block.3} parent=62 // pred_region
              _
            $region78: #{upsample2x_block.3} parent=62 // pred_fallthru
              _
          $region63: #{upsample2x_block.3} parent=58 // pred_fallthru
            _
          %319 = vnop
        $region59: #{upsample2x_block.3} parent=50 // pred_fallthru
          _
      $region51: #{upsample2x_block.3} parent=5 // pred_fallthru
        _
      %p320 = scmp.le.s32.totalorder 2, %s9
      // Predicated region
      $region79: #{upsample2x_block.3} parent=5 // pred_check
        %p321 = pneg %p320
      $region80: #{upsample2x_block.3} parent=5 // pred_check_branch
        %323 = sbr.rel (%p321) target = $region82
      $region81: #{upsample2x_block.3} parent=5 // pred_region
        %s324 = ssub.s32 %s9, 2
        // Predicated region
        $region83: #{upsample2x_block.3} parent=81 // pred_check
          %p325 = pneg %p122
        $region84: #{upsample2x_block.3} parent=81 // pred_check_branch
          %327 = sbr.rel (%p325) target = $region86
        $region85: #{upsample2x_block.3} parent=81 // pred_region
          %s328 = sand.u32 %s107, 1
          %s329 = sand.u32 %s107, 1
          %s330 = smul.addr %s329, 64
          %s331 = scalar_lea.vmem [#allocation3], %s330
        $region86: #{upsample2x_block.3} parent=81 // pred_fallthru
          _
      $region82: #{upsample2x_block.3} parent=5 // pred_fallthru
        _
    $region6: #{upsample2x_block.3} parent=1 // loop_footer
      %s13 = sadd.s32 1, %s9
    $region7: #{upsample2x_block.3} parent=1 // loop_footer_branch
      %8 = sbr.rel target = $region3
    $region8: #{upsample2x_block.3} parent=1 // loop_exit
      _

// kernel: upsample2x_block.2
$region0: #{upsample2x_block.2}
  #allocation0 [shape = 'u32[]', space=smem, size = 0x4, offset = 0x4, fixed_abs, tag = 'smem constant byte address 0x4 - core index']
  #allocation1 [shape = 'u32[144,128]{1,0:T(1,128)}', space=vmem, size = 0x12000, scoped, tag = 'internal scratch']
  %s0 = inlined_call_operand.vmem [shape: f32[3,2,16,18,4], index: 0, kind: input, shape index: {}]
  %s1 = inlined_call_operand.vmem [shape: f32[4,4,8,4], index: 1, kind: input, shape index: {}]
  %s2 = inlined_call_operand.vmem [shape: f32[4,2,8,256], index: 2, kind: output, shape index: {0}]
  %s3 = inlined_call_operand.vmem [shape: f32[8,1], index: 3, kind: output, shape index: {1}]
  %s4 = inlined_call_operand.vmem [shape: f32[8,1], index: 4, kind: output, shape index: {2}]
  %5 = xla_tuple %s2, %s3, %s4
  %s6 = sld [smem:[#allocation0]]
  $region118: #{upsample2x_block.2} parent=0
    _
  %s8 = ssub.s32 1, %s6
  %s9 = scalar_select 0, %s8, %s6
  $region1: #{upsample2x_block.2} parent=0
    #allocation2 [shape = 'u8[1179648]{0}', space=vmem, size = 0x120000, scoped, tag = 'input window, operand 0']
    #allocation3 [shape = 'u8[65536]{0}', space=vmem, size = 0x10000, scoped, tag = 'output window, operand 0']
    loop: start=0, step=1, limit=4
    $region2: #{upsample2x_block.2} parent=1 // loop_pre_header
      _
    $region3: #{upsample2x_block.2} parent=1 // loop_header
      %s11 = sphi 0, %s15
      %p12 = scmp.ge.s32.totalorder %s11, 4
      %s18 = sphi 0, %s30
      %s19 = sphi 0, %s26
      %s20 = sphi 0, %s18
      %s21 = sphi 0, %s19
      %s22 = sphi 0, %s20
      %s23 = sphi 0, %s21
      %s35 = sphi 0, %s37
      %s38 = sphi 0, %s35
      %s39 = sphi 0, %s38
      %s55 = sphi 0, %s39
      %s59 = sphi 0, %s59
      %s61 = sphi 0, %s59
      %s62 = sphi 0, %s61
      %s76 = sphi 0, %s62
      %s84 = sphi 0, %s86
      %s87 = sphi 0, %s84
      %s88 = sphi 0, %s87
      %s104 = sphi 0, %s88
      %s108 = sphi 0, %s108
      %s110 = sphi 0, %s108
      %s111 = sphi 0, %s110
      %s125 = sphi 0, %s111
      %s129 = sphi 0, %s129
      %s131 = sphi 0, %s129
      %s132 = sphi 0, %s131
      %s146 = sphi 0, %s132
    $region4: #{upsample2x_block.2} parent=1 // loop_header_branch
      %14 = sbr.rel (%p12) target = $region8
    $region5: #{upsample2x_block.2} parent=1 // loop_body
      %s16 = ssub.s32 %s11, 1
      %s17 = ssub.s32 %s11, 2
      %s24 = sadd.s32 1, %s19
      %p25 = scmp.ge.s32.totalorder %s24, 1
      %s26 = scalar_select %p25, 0, %s24
      %s27 = sadd.s32 1, %s18
      %s28 = scalar_select %p25, %s27, %s18
      %p29 = scmp.ge.s32.totalorder %s28, 2
      %s30 = scalar_select %p29, 0, %s28
      %s31 = ssub.s32 %s18, %s30
      %s32 = ssub.s32 %s19, %s26
      %s33 = sor.u32 %s31, %s32
      %p34 = scmp.eq.s32.totalorder %s33, 0
      %s36 = sadd.s32 %s35, 1
      %s37 = scalar_select %p34, %s35, %s36
      %p40 = pneg %p34
      %p41 = scmp.eq.s32.totalorder %s11, 1
      %p42 = por %p40, %p41
      %p43 = scmp.ne.s32.totalorder %s35, %s38
      %p44 = scmp.eq.s32.totalorder %s11, 0
      %p45 = por %p43, %p44
      %p46 = scmp.ne.s32.totalorder %s35, %s38
      %p47 = scmp.eq.s32.totalorder %s16, 1
      %p48 = por %p46, %p47
      %p49 = scmp.ne.s32.totalorder %s38, %s39
      %p50 = scmp.eq.s32.totalorder %s16, 0
      %p51 = por %p49, %p50
      %p52 = scmp.ne.s32.totalorder %s38, %s39
      %p53 = scmp.eq.s32.totalorder %s17, 1
      %p54 = por %p52, %p53
      %p56 = scmp.ne.s32.totalorder %s39, %s55
      %p57 = scmp.eq.s32.totalorder %s17, 0
      %p58 = por %p56, %p57
      %s60 = sadd.s32 %s59, 1
      %p63 = scmp.eq.s32.totalorder %s11, 1
      %p64 = scmp.ne.s32.totalorder %s59, %s61
      %p65 = scmp.eq.s32.totalorder %s11, 0
      %p66 = por %p64, %p65
      %p67 = scmp.ne.s32.totalorder %s59, %s61
      %p68 = scmp.eq.s32.totalorder %s16, 1
      %p69 = por %p67, %p68
      %p70 = scmp.ne.s32.totalorder %s61, %s62
      %p71 = scmp.eq.s32.totalorder %s16, 0
      %p72 = por %p70, %p71
      %p73 = scmp.ne.s32.totalorder %s61, %s62
      %p74 = scmp.eq.s32.totalorder %s17, 1
      %p75 = por %p73, %p74
      %p77 = scmp.ne.s32.totalorder %s62, %s76
      %p78 = scmp.eq.s32.totalorder %s17, 0
      %p79 = por %p77, %p78
      %s80 = ssub.s32 %s18, %s30
      %s81 = ssub.s32 %s19, %s26
      %s82 = sor.u32 %s80, %s81
      %p83 = scmp.eq.s32.totalorder %s82, 0
      %s85 = sadd.s32 %s84, 1
      %s86 = scalar_select %p83, %s84, %s85
      %p89 = pneg %p83
      %p90 = scmp.eq.s32.totalorder %s11, 1
      %p91 = por %p89, %p90
      %p92 = scmp.ne.s32.totalorder %s84, %s87
      %p93 = scmp.eq.s32.totalorder %s11, 0
      %p94 = por %p92, %p93
      %p95 = scmp.ne.s32.totalorder %s84, %s87
      %p96 = scmp.eq.s32.totalorder %s16, 1
      %p97 = por %p95, %p96
      %p98 = scmp.ne.s32.totalorder %s87, %s88
      %p99 = scmp.eq.s32.totalorder %s16, 0
      %p100 = por %p98, %p99
      %p101 = scmp.ne.s32.totalorder %s87, %s88
      %p102 = scmp.eq.s32.totalorder %s17, 1
      %p103 = por %p101, %p102
      %p105 = scmp.ne.s32.totalorder %s88, %s104
      %p106 = scmp.eq.s32.totalorder %s17, 0
      %p107 = por %p105, %p106
      %s109 = sadd.s32 %s108, 1
      %p112 = scmp.eq.s32.totalorder %s11, 1
      %p113 = scmp.ne.s32.totalorder %s108, %s110
      %p114 = scmp.eq.s32.totalorder %s11, 0
      %p115 = por %p113, %p114
      %p116 = scmp.ne.s32.totalorder %s108, %s110
      %p117 = scmp.eq.s32.totalorder %s16, 1
      %p118 = por %p116, %p117
      %p119 = scmp.ne.s32.totalorder %s110, %s111
      %p120 = scmp.eq.s32.totalorder %s16, 0
      %p121 = por %p119, %p120
      %p122 = scmp.ne.s32.totalorder %s110, %s111
      %p123 = scmp.eq.s32.totalorder %s17, 1
      %p124 = por %p122, %p123
      %p126 = scmp.ne.s32.totalorder %s111, %s125
      %p127 = scmp.eq.s32.totalorder %s17, 0
      %p128 = por %p126, %p127
      %s130 = sadd.s32 %s129, 1
      %p133 = scmp.eq.s32.totalorder %s11, 1
      %p134 = scmp.ne.s32.totalorder %s129, %s131
      %p135 = scmp.eq.s32.totalorder %s11, 0
      %p136 = por %p134, %p135
      %p137 = scmp.ne.s32.totalorder %s129, %s131
      %p138 = scmp.eq.s32.totalorder %s16, 1
      %p139 = por %p137, %p138
      %p140 = scmp.ne.s32.totalorder %s131, %s132
      %p141 = scmp.eq.s32.totalorder %s16, 0
      %p142 = por %p140, %p141
      %p143 = scmp.ne.s32.totalorder %s131, %s132
      %p144 = scmp.eq.s32.totalorder %s17, 1
      %p145 = por %p143, %p144
      %p147 = scmp.ne.s32.totalorder %s132, %s146
      %p148 = scmp.eq.s32.totalorder %s17, 0
      %p149 = por %p147, %p148
      %p150 = scmp.le.s32.totalorder 1, %s11
      %p151 = scmp.lt.s32.totalorder %s11, 3
      %p152 = pnand %p150, %p151
      %p153 = pneg %p152
      // Predicated region
      $region9: #{upsample2x_block.2} parent=5 // pred_check
        _
      $region10: #{upsample2x_block.2} parent=5 // pred_check_branch
        %155 = sbr.rel (%p152) target = $region12
      $region11: #{upsample2x_block.2} parent=5 // pred_region
        %s156 = ssub.s32 %s11, 1
        // Predicated region
        $region13: #{upsample2x_block.2} parent=11 // pred_check
          %p157 = pneg %p72
        $region14: #{upsample2x_block.2} parent=11 // pred_check_branch
          %159 = sbr.rel (%p157) target = $region16
        $region15: #{upsample2x_block.2} parent=11 // pred_region
          _
        $region16: #{upsample2x_block.2} parent=11 // pred_fallthru
          _
      $region12: #{upsample2x_block.2} parent=5 // pred_fallthru
        _
      %p160 = scmp.lt.s32.totalorder %s11, 2
      // Predicated region
      $region17: #{upsample2x_block.2} parent=5 // pred_check
        %p161 = pneg %p160
      $region18: #{upsample2x_block.2} parent=5 // pred_check_branch
        %163 = sbr.rel (%p161) target = $region20
      $region19: #{upsample2x_block.2} parent=5 // pred_region
        // Predicated region
        $region21: #{upsample2x_block.2} parent=19 // pred_check
          %p164 = pneg %p45
        $region22: #{upsample2x_block.2} parent=19 // pred_check_branch
          %166 = sbr.rel (%p164) target = $region24
        $region23: #{upsample2x_block.2} parent=19 // pred_region
          %s167 = sand.u32 %s35, 1
          %s168 = sand.u32 %s35, 1
          %s169 = smul.addr %s168, 1152
          %s170 = scalar_lea.vmem [#allocation2], %s169
          %s171 = smul.u32 16, %s19
          %s172 = smul.addr %s171, 3
          %s173 = smul.addr %s18, 48
          %s174 = sadd.s32 %s172, %s173
          %s175 = smul.addr %s174, 8
          %s176 = scalar_lea.vmem %s0, %s175
          // Predicated region
          $region25: #{upsample2x_block.2} parent=23 // pred_check
            _
          $region26: #{upsample2x_block.2} parent=23 // pred_check_branch
            %178 = sbr.rel (0) target = $region28
          $region27: #{upsample2x_block.2} parent=23 // pred_region
            // Predicated region
            $region29: #{upsample2x_block.2} parent=27 // pred_check
              _
            $region30: #{upsample2x_block.2} parent=27 // pred_check_branch
              %180 = sbr.rel (0) target = $region32
            $region31: #{upsample2x_block.2} parent=27 // pred_region
              // Predicated region
              $region44: #{upsample2x_block.2} parent=31 // pred_check
                _
              $region45: #{upsample2x_block.2} parent=31 // pred_check_branch
                %481 = sbr.rel (0) target = $region47
              $region46: #{upsample2x_block.2} parent=31 // pred_region
                loop: start=0, step=1, limit=1
                $region48: #{upsample2x_block.2} parent=46 // loop_pre_header
                  _
                $region49: #{upsample2x_block.2} parent=46 // loop_header
                  %s483 = sphi 0, %s487
                  %p484 = scmp.ge.s32.totalorder %s483, 1
                  %s488 = sphi %s176, %s176
                  %s489 = sphi %s170, %s170
                $region50: #{upsample2x_block.2} parent=46 // loop_header_branch
                  %486 = sbr.rel (%p484) target = $region54
                $region51: #{upsample2x_block.2} parent=46 // loop_body
                  %v490 = vld [vmem:[%s488] sm:$0xff]
                  %491 = vst [vmem:[%s489] sm:$0xff] %v490
                  %v492 = vld [vmem:[%s488 + $0x8] sm:$0xff]
                  %493 = vst [vmem:[%s489 + $0x8] sm:$0xff] %v492
                  %v494 = vld [vmem:[%s488 + $0x10] sm:$0xff]
                  %495 = vst [vmem:[%s489 + $0x10] sm:$0xff] %v494
                  %v496 = vld [vmem:[%s488 + $0x18] sm:$0xff]
                  %497 = vst [vmem:[%s489 + $0x18] sm:$0xff] %v496
                  %v498 = vld [vmem:[%s488 + $0x20] sm:$0xff]
                  %499 = vst [vmem:[%s489 + $0x20] sm:$0xff] %v498
                  %v500 = vld [vmem:[%s488 + $0x28] sm:$0xff]
                  %501 = vst [vmem:[%s489 + $0x28] sm:$0xff] %v500
                  %v502 = vld [vmem:[%s488 + $0x30] sm:$0xff]
                  %503 = vst [vmem:[%s489 + $0x30] sm:$0xff] %v502
                  %v504 = vld [vmem:[%s488 + $0x38] sm:$0xff]
                  %505 = vst [vmem:[%s489 + $0x38] sm:$0xff] %v504
                  %v506 = vld [vmem:[%s488 + $0x40] sm:$0xff]
                  %507 = vst [vmem:[%s489 + $0x40] sm:$0xff] %v506
                  %v508 = vld [vmem:[%s488 + $0x48] sm:$0xff]
                  %509 = vst [vmem:[%s489 + $0x48] sm:$0xff] %v508
                  %v510 = vld [vmem:[%s488 + $0x50] sm:$0xff]
                  %511 = vst [vmem:[%s489 + $0x50] sm:$0xff] %v510
                  %v512 = vld [vmem:[%s488 + $0x58] sm:$0xff]
                  %513 = vst [vmem:[%s489 + $0x58] sm:$0xff] %v512
                  %v514 = vld [vmem:[%s488 + $0x60] sm:$0xff]
                  %515 = vst [vmem:[%s489 + $0x60] sm:$0xff] %v514
                  %v516 = vld [vmem:[%s488 + $0x68] sm:$0xff]
                  %517 = vst [vmem:[%s489 + $0x68] sm:$0xff] %v516
                  %v518 = vld [vmem:[%s488 + $0x70] sm:$0xff]
                  %519 = vst [vmem:[%s489 + $0x70] sm:$0xff] %v518
                  %v520 = vld [vmem:[%s488 + $0x78] sm:$0xff]
                  %521 = vst [vmem:[%s489 + $0x78] sm:$0xff] %v520
                  %v522 = vld [vmem:[%s488 + $0x80] sm:$0xff]
                  %523 = vst [vmem:[%s489 + $0x80] sm:$0xff] %v522
                  %v524 = vld [vmem:[%s488 + $0x88] sm:$0xff]
                  %525 = vst [vmem:[%s489 + $0x88] sm:$0xff] %v524
                  %v526 = vld [vmem:[%s488 + $0x90] sm:$0xff]
                  %527 = vst [vmem:[%s489 + $0x90] sm:$0xff] %v526
                  %v528 = vld [vmem:[%s488 + $0x98] sm:$0xff]
                  %529 = vst [vmem:[%s489 + $0x98] sm:$0xff] %v528
                  %v530 = vld [vmem:[%s488 + $0xa0] sm:$0xff]
                  %531 = vst [vmem:[%s489 + $0xa0] sm:$0xff] %v530
                  %v532 = vld [vmem:[%s488 + $0xa8] sm:$0xff]
                  %533 = vst [vmem:[%s489 + $0xa8] sm:$0xff] %v532
                  %v534 = vld [vmem:[%s488 + $0xb0] sm:$0xff]
                  %535 = vst [vmem:[%s489 + $0xb0] sm:$0xff] %v534
                  %v536 = vld [vmem:[%s488 + $0xb8] sm:$0xff]
                  %537 = vst [vmem:[%s489 + $0xb8] sm:$0xff] %v536
                  %v538 = vld [vmem:[%s488 + $0xc0] sm:$0xff]
                  %539 = vst [vmem:[%s489 + $0xc0] sm:$0xff] %v538
                  %v540 = vld [vmem:[%s488 + $0xc8] sm:$0xff]
                  %541 = vst [vmem:[%s489 + $0xc8] sm:$0xff] %v540
                  %v542 = vld [vmem:[%s488 + $0xd0] sm:$0xff]
                  %543 = vst [vmem:[%s489 + $0xd0] sm:$0xff] %v542
                  %v544 = vld [vmem:[%s488 + $0xd8] sm:$0xff]
                  %545 = vst [vmem:[%s489 + $0xd8] sm:$0xff] %v544
                  %v546 = vld [vmem:[%s488 + $0xe0] sm:$0xff]
                  %547 = vst [vmem:[%s489 + $0xe0] sm:$0xff] %v546
                  %v548 = vld [vmem:[%s488 + $0xe8] sm:$0xff]
                  %549 = vst [vmem:[%s489 + $0xe8] sm:$0xff] %v548
                  %v550 = vld [vmem:[%s488 + $0xf0] sm:$0xff]
                  %551 = vst [vmem:[%s489 + $0xf0] sm:$0xff] %v550
                  %v552 = vld [vmem:[%s488 + $0xf8] sm:$0xff]
                  %553 = vst [vmem:[%s489 + $0xf8] sm:$0xff] %v552
                  %v554 = vld [vmem:[%s488 + $0x100] sm:$0xff]
                  %555 = vst [vmem:[%s489 + $0x100] sm:$0xff] %v554
                  %v556 = vld [vmem:[%s488 + $0x108] sm:$0xff]
                  %557 = vst [vmem:[%s489 + $0x108] sm:$0xff] %v556
                  %v558 = vld [vmem:[%s488 + $0x110] sm:$0xff]
                  %559 = vst [vmem:[%s489 + $0x110] sm:$0xff] %v558
                  %v560 = vld [vmem:[%s488 + $0x118] sm:$0xff]
                  %561 = vst [vmem:[%s489 + $0x118] sm:$0xff] %v560
                  %v562 = vld [vmem:[%s488 + $0x120] sm:$0xff]
                  %563 = vst [vmem:[%s489 + $0x120] sm:$0xff] %v562
                  %v564 = vld [vmem:[%s488 + $0x128] sm:$0xff]
                  %565 = vst [vmem:[%s489 + $0x128] sm:$0xff] %v564
                  %v566 = vld [vmem:[%s488 + $0x130] sm:$0xff]
                  %567 = vst [vmem:[%s489 + $0x130] sm:$0xff] %v566
                  %v568 = vld [vmem:[%s488 + $0x138] sm:$0xff]
                  %569 = vst [vmem:[%s489 + $0x138] sm:$0xff] %v568
                  %v570 = vld [vmem:[%s488 + $0x140] sm:$0xff]
                  %571 = vst [vmem:[%s489 + $0x140] sm:$0xff] %v570
                  %v572 = vld [vmem:[%s488 + $0x148] sm:$0xff]
                  %573 = vst [vmem:[%s489 + $0x148] sm:$0xff] %v572
                  %v574 = vld [vmem:[%s488 + $0x150] sm:$0xff]
                  %575 = vst [vmem:[%s489 + $0x150] sm:$0xff] %v574
                  %v576 = vld [vmem:[%s488 + $0x158] sm:$0xff]
                  %577 = vst [vmem:[%s489 + $0x158] sm:$0xff] %v576
                  %v578 = vld [vmem:[%s488 + $0x160] sm:$0xff]
                  %579 = vst [vmem:[%s489 + $0x160] sm:$0xff] %v578
                  %v580 = vld [vmem:[%s488 + $0x168] sm:$0xff]
                  %581 = vst [vmem:[%s489 + $0x168] sm:$0xff] %v580
                  %v582 = vld [vmem:[%s488 + $0x170] sm:$0xff]
                  %583 = vst [vmem:[%s489 + $0x170] sm:$0xff] %v582
                  %v584 = vld [vmem:[%s488 + $0x178] sm:$0xff]
                  %585 = vst [vmem:[%s489 + $0x178] sm:$0xff] %v584
                  %v586 = vld [vmem:[%s488 + $0x300] sm:$0xff]
                  %587 = vst [vmem:[%s489 + $0x180] sm:$0xff] %v586
                  %v588 = vld [vmem:[%s488 + $0x308] sm:$0xff]
                  %589 = vst [vmem:[%s489 + $0x188] sm:$0xff] %v588
                  %v590 = vld [vmem:[%s488 + $0x310] sm:$0xff]
                  %591 = vst [vmem:[%s489 + $0x190] sm:$0xff] %v590
                  %v592 = vld [vmem:[%s488 + $0x318] sm:$0xff]
                  %593 = vst [vmem:[%s489 + $0x198] sm:$0xff] %v592
                  %v594 = vld [vmem:[%s488 + $0x320] sm:$0xff]
                  %595 = vst [vmem:[%s489 + $0x1a0] sm:$0xff] %v594
                  %v596 = vld [vmem:[%s488 + $0x328] sm:$0xff]
                  %597 = vst [vmem:[%s489 + $0x1a8] sm:$0xff] %v596
                  %v598 = vld [vmem:[%s488 + $0x330] sm:$0xff]
                  %599 = vst [vmem:[%s489 + $0x1b0] sm:$0xff] %v598
                  %v600 = vld [vmem:[%s488 + $0x338] sm:$0xff]
                  %601 = vst [vmem:[%s489 + $0x1b8] sm:$0xff] %v600
                  %v602 = vld [vmem:[%s488 + $0x340] sm:$0xff]
                  %603 = vst [vmem:[%s489 + $0x1c0] sm:$0xff] %v602
                  %v604 = vld [vmem:[%s488 + $0x348] sm:$0xff]
                  %605 = vst [vmem:[%s489 + $0x1c8] sm:$0xff] %v604
                  %v606 = vld [vmem:[%s488 + $0x350] sm:$0xff]
                  %607 = vst [vmem:[%s489 + $0x1d0] sm:$0xff] %v606
                  %v608 = vld [vmem:[%s488 + $0x358] sm:$0xff]
                  %609 = vst [vmem:[%s489 + $0x1d8] sm:$0xff] %v608
                  %v610 = vld [vmem:[%s488 + $0x360] sm:$0xff]
                  %611 = vst [vmem:[%s489 + $0x1e0] sm:$0xff] %v610
                  %v612 = vld [vmem:[%s488 + $0x368] sm:$0xff]
                  %613 = vst [vmem:[%s489 + $0x1e8] sm:$0xff] %v612
                  %v614 = vld [vmem:[%s488 + $0x370] sm:$0xff]
                  %615 = vst [vmem:[%s489 + $0x1f0] sm:$0xff] %v614
                  %v616 = vld [vmem:[%s488 + $0x378] sm:$0xff]
                  %617 = vst [vmem:[%s489 + $0x1f8] sm:$0xff] %v616
                  %v618 = vld [vmem:[%s488 + $0x380] sm:$0xff]
                  %619 = vst [vmem:[%s489 + $0x200] sm:$0xff] %v618
                  %v620 = vld [vmem:[%s488 + $0x388] sm:$0xff]
                  %621 = vst [vmem:[%s489 + $0x208] sm:$0xff] %v620
                  %v622 = vld [vmem:[%s488 + $0x390] sm:$0xff]
                  %623 = vst [vmem:[%s489 + $0x210] sm:$0xff] %v622
                  %v624 = vld [vmem:[%s488 + $0x398] sm:$0xff]
                  %625 = vst [vmem:[%s489 + $0x218] sm:$0xff] %v624
                  %v626 = vld [vmem:[%s488 + $0x3a0] sm:$0xff]
                  %627 = vst [vmem:[%s489 + $0x220] sm:$0xff] %v626
                  %v628 = vld [vmem:[%s488 + $0x3a8] sm:$0xff]
                  %629 = vst [vmem:[%s489 + $0x228] sm:$0xff] %v628
                  %v630 = vld [vmem:[%s488 + $0x3b0] sm:$0xff]
                  %631 = vst [vmem:[%s489 + $0x230] sm:$0xff] %v630
                  %v632 = vld [vmem:[%s488 + $0x3b8] sm:$0xff]
                  %633 = vst [vmem:[%s489 + $0x238] sm:$0xff] %v632
                  %v634 = vld [vmem:[%s488 + $0x3c0] sm:$0xff]
                  %635 = vst [vmem:[%s489 + $0x240] sm:$0xff] %v634
                  %v636 = vld [vmem:[%s488 + $0x3c8] sm:$0xff]
                  %637 = vst [vmem:[%s489 + $0x248] sm:$0xff] %v636
                  %v638 = vld [vmem:[%s488 + $0x3d0] sm:$0xff]
                  %639 = vst [vmem:[%s489 + $0x250] sm:$0xff] %v638
                  %v640 = vld [vmem:[%s488 + $0x3d8] sm:$0xff]
                  %641 = vst [vmem:[%s489 + $0x258] sm:$0xff] %v640
                  %v642 = vld [vmem:[%s488 + $0x3e0] sm:$0xff]
                  %643 = vst [vmem:[%s489 + $0x260] sm:$0xff] %v642
                  %v644 = vld [vmem:[%s488 + $0x3e8] sm:$0xff]
                  %645 = vst [vmem:[%s489 + $0x268] sm:$0xff] %v644
                  %v646 = vld [vmem:[%s488 + $0x3f0] sm:$0xff]
                  %647 = vst [vmem:[%s489 + $0x270] sm:$0xff] %v646
                  %v648 = vld [vmem:[%s488 + $0x3f8] sm:$0xff]
                  %649 = vst [vmem:[%s489 + $0x278] sm:$0xff] %v648
                  %v650 = vld [vmem:[%s488 + $0x400] sm:$0xff]
                  %651 = vst [vmem:[%s489 + $0x280] sm:$0xff] %v650
                  %v652 = vld [vmem:[%s488 + $0x408] sm:$0xff]
                  %653 = vst [vmem:[%s489 + $0x288] sm:$0xff] %v652
                  %v654 = vld [vmem:[%s488 + $0x410] sm:$0xff]
                  %655 = vst [vmem:[%s489 + $0x290] sm:$0xff] %v654
                  %v656 = vld [vmem:[%s488 + $0x418] sm:$0xff]
                  %657 = vst [vmem:[%s489 + $0x298] sm:$0xff] %v656
                  %v658 = vld [vmem:[%s488 + $0x420] sm:$0xff]
                  %659 = vst [vmem:[%s489 + $0x2a0] sm:$0xff] %v658
                  %v660 = vld [vmem:[%s488 + $0x428] sm:$0xff]
                  %661 = vst [vmem:[%s489 + $0x2a8] sm:$0xff] %v660
                  %v662 = vld [vmem:[%s488 + $0x430] sm:$0xff]
                  %663 = vst [vmem:[%s489 + $0x2b0] sm:$0xff] %v662
                  %v664 = vld [vmem:[%s488 + $0x438] sm:$0xff]
                  %665 = vst [vmem:[%s489 + $0x2b8] sm:$0xff] %v664
                  %v666 = vld [vmem:[%s488 + $0x440] sm:$0xff]
                  %667 = vst [vmem:[%s489 + $0x2c0] sm:$0xff] %v666
                  %v668 = vld [vmem:[%s488 + $0x448] sm:$0xff]
                  %669 = vst [vmem:[%s489 + $0x2c8] sm:$0xff] %v668
                  %v670 = vld [vmem:[%s488 + $0x450] sm:$0xff]
                  %671 = vst [vmem:[%s489 + $0x2d0] sm:$0xff] %v670
                  %v672 = vld [vmem:[%s488 + $0x458] sm:$0xff]
                  %673 = vst [vmem:[%s489 + $0x2d8] sm:$0xff] %v672
                  %v674 = vld [vmem:[%s488 + $0x460] sm:$0xff]
                  %675 = vst [vmem:[%s489 + $0x2e0] sm:$0xff] %v674
                  %v676 = vld [vmem:[%s488 + $0x468] sm:$0xff]
                  %677 = vst [vmem:[%s489 + $0x2e8] sm:$0xff] %v676
                  %v678 = vld [vmem:[%s488 + $0x470] sm:$0xff]
                  %679 = vst [vmem:[%s489 + $0x2f0] sm:$0xff] %v678
                  %v680 = vld [vmem:[%s488 + $0x478] sm:$0xff]
                  %681 = vst [vmem:[%s489 + $0x2f8] sm:$0xff] %v680
                  %v682 = vld [vmem:[%s488 + $0x600] sm:$0xff]
                  %683 = vst [vmem:[%s489 + $0x300] sm:$0xff] %v682
                  %v684 = vld [vmem:[%s488 + $0x608] sm:$0xff]
                  %685 = vst [vmem:[%s489 + $0x308] sm:$0xff] %v684
                  %v686 = vld [vmem:[%s488 + $0x610] sm:$0xff]
                  %687 = vst [vmem:[%s489 + $0x310] sm:$0xff] %v686
                  %v688 = vld [vmem:[%s488 + $0x618] sm:$0xff]
                  %689 = vst [vmem:[%s489 + $0x318] sm:$0xff] %v688
                  %v690 = vld [vmem:[%s488 + $0x620] sm:$0xff]
                  %691 = vst [vmem:[%s489 + $0x320] sm:$0xff] %v690
                  %v692 = vld [vmem:[%s488 + $0x628] sm:$0xff]
                  %693 = vst [vmem:[%s489 + $0x328] sm:$0xff] %v692
                  %v694 = vld [vmem:[%s488 + $0x630] sm:$0xff]
                  %695 = vst [vmem:[%s489 + $0x330] sm:$0xff] %v694
                  %v696 = vld [vmem:[%s488 + $0x638] sm:$0xff]
                  %697 = vst [vmem:[%s489 + $0x338] sm:$0xff] %v696
                  %v698 = vld [vmem:[%s488 + $0x640] sm:$0xff]
                  %699 = vst [vmem:[%s489 + $0x340] sm:$0xff] %v698
                  %v700 = vld [vmem:[%s488 + $0x648] sm:$0xff]
                  %701 = vst [vmem:[%s489 + $0x348] sm:$0xff] %v700
                  %v702 = vld [vmem:[%s488 + $0x650] sm:$0xff]
                  %703 = vst [vmem:[%s489 + $0x350] sm:$0xff] %v702
                  %v704 = vld [vmem:[%s488 + $0x658] sm:$0xff]
                  %705 = vst [vmem:[%s489 + $0x358] sm:$0xff] %v704
                  %v706 = vld [vmem:[%s488 + $0x660] sm:$0xff]
                  %707 = vst [vmem:[%s489 + $0x360] sm:$0xff] %v706
                  %v708 = vld [vmem:[%s488 + $0x668] sm:$0xff]
                  %709 = vst [vmem:[%s489 + $0x368] sm:$0xff] %v708
                  %v710 = vld [vmem:[%s488 + $0x670] sm:$0xff]
                  %711 = vst [vmem:[%s489 + $0x370] sm:$0xff] %v710
                  %v712 = vld [vmem:[%s488 + $0x678] sm:$0xff]
                  %713 = vst [vmem:[%s489 + $0x378] sm:$0xff] %v712
                  %v714 = vld [vmem:[%s488 + $0x680] sm:$0xff]
                  %715 = vst [vmem:[%s489 + $0x380] sm:$0xff] %v714
                  %v716 = vld [vmem:[%s488 + $0x688] sm:$0xff]
                  %717 = vst [vmem:[%s489 + $0x388] sm:$0xff] %v716
                  %v718 = vld [vmem:[%s488 + $0x690] sm:$0xff]
                  %719 = vst [vmem:[%s489 + $0x390] sm:$0xff] %v718
                  %v720 = vld [vmem:[%s488 + $0x698] sm:$0xff]
                  %721 = vst [vmem:[%s489 + $0x398] sm:$0xff] %v720
                  %v722 = vld [vmem:[%s488 + $0x6a0] sm:$0xff]
                  %723 = vst [vmem:[%s489 + $0x3a0] sm:$0xff] %v722
                  %v724 = vld [vmem:[%s488 + $0x6a8] sm:$0xff]
                  %725 = vst [vmem:[%s489 + $0x3a8] sm:$0xff] %v724
                  %v726 = vld [vmem:[%s488 + $0x6b0] sm:$0xff]
                  %727 = vst [vmem:[%s489 + $0x3b0] sm:$0xff] %v726
                  %v728 = vld [vmem:[%s488 + $0x6b8] sm:$0xff]
                  %729 = vst [vmem:[%s489 + $0x3b8] sm:$0xff] %v728
                  %v730 = vld [vmem:[%s488 + $0x6c0] sm:$0xff]
                  %731 = vst [vmem:[%s489 + $0x3c0] sm:$0xff] %v730
                  %v732 = vld [vmem:[%s488 + $0x6c8] sm:$0xff]
                  %733 = vst [vmem:[%s489 + $0x3c8] sm:$0xff] %v732
                  %v734 = vld [vmem:[%s488 + $0x6d0] sm:$0xff]
                  %735 = vst [vmem:[%s489 + $0x3d0] sm:$0xff] %v734
                  %v736 = vld [vmem:[%s488 + $0x6d8] sm:$0xff]
                  %737 = vst [vmem:[%s489 + $0x3d8] sm:$0xff] %v736
                  %v738 = vld [vmem:[%s488 + $0x6e0] sm:$0xff]
                  %739 = vst [vmem:[%s489 + $0x3e0] sm:$0xff] %v738
                  %v740 = vld [vmem:[%s488 + $0x6e8] sm:$0xff]
                  %741 = vst [vmem:[%s489 + $0x3e8] sm:$0xff] %v740
                  %v742 = vld [vmem:[%s488 + $0x6f0] sm:$0xff]
                  %743 = vst [vmem:[%s489 + $0x3f0] sm:$0xff] %v742
                  %v744 = vld [vmem:[%s488 + $0x6f8] sm:$0xff]
                  %745 = vst [vmem:[%s489 + $0x3f8] sm:$0xff] %v744
                  %v746 = vld [vmem:[%s488 + $0x700] sm:$0xff]
                  %747 = vst [vmem:[%s489 + $0x400] sm:$0xff] %v746
                  %v748 = vld [vmem:[%s488 + $0x708] sm:$0xff]
                  %749 = vst [vmem:[%s489 + $0x408] sm:$0xff] %v748
                  %v750 = vld [vmem:[%s488 + $0x710] sm:$0xff]
                  %751 = vst [vmem:[%s489 + $0x410] sm:$0xff] %v750
                  %v752 = vld [vmem:[%s488 + $0x718] sm:$0xff]
                  %753 = vst [vmem:[%s489 + $0x418] sm:$0xff] %v752
                  %v754 = vld [vmem:[%s488 + $0x720] sm:$0xff]
                  %755 = vst [vmem:[%s489 + $0x420] sm:$0xff] %v754
                  %v756 = vld [vmem:[%s488 + $0x728] sm:$0xff]
                  %757 = vst [vmem:[%s489 + $0x428] sm:$0xff] %v756
                  %v758 = vld [vmem:[%s488 + $0x730] sm:$0xff]
                  %759 = vst [vmem:[%s489 + $0x430] sm:$0xff] %v758
                  %v760 = vld [vmem:[%s488 + $0x738] sm:$0xff]
                  %761 = vst [vmem:[%s489 + $0x438] sm:$0xff] %v760
                  %v762 = vld [vmem:[%s488 + $0x740] sm:$0xff]
                  %763 = vst [vmem:[%s489 + $0x440] sm:$0xff] %v762
                  %v764 = vld [vmem:[%s488 + $0x748] sm:$0xff]
                  %765 = vst [vmem:[%s489 + $0x448] sm:$0xff] %v764
                  %v766 = vld [vmem:[%s488 + $0x750] sm:$0xff]
                  %767 = vst [vmem:[%s489 + $0x450] sm:$0xff] %v766
                  %v768 = vld [vmem:[%s488 + $0x758] sm:$0xff]
                  %769 = vst [vmem:[%s489 + $0x458] sm:$0xff] %v768
                  %v770 = vld [vmem:[%s488 + $0x760] sm:$0xff]
                  %771 = vst [vmem:[%s489 + $0x460] sm:$0xff] %v770
                  %v772 = vld [vmem:[%s488 + $0x768] sm:$0xff]
                  %773 = vst [vmem:[%s489 + $0x468] sm:$0xff] %v772
                  %v774 = vld [vmem:[%s488 + $0x770] sm:$0xff]
                  %775 = vst [vmem:[%s489 + $0x470] sm:$0xff] %v774
                  %v776 = vld [vmem:[%s488 + $0x778] sm:$0xff]
                  %777 = vst [vmem:[%s489 + $0x478] sm:$0xff] %v776
                $region52: #{upsample2x_block.2} parent=46 // loop_footer
                  %s487 = sadd.s32 1, %s483
                $region53: #{upsample2x_block.2} parent=46 // loop_footer_branch
                  %482 = sbr.rel target = $region49
                $region54: #{upsample2x_block.2} parent=46 // loop_exit
                  _
              $region47: #{upsample2x_block.2} parent=31 // pred_fallthru
                _
              // Predicated region
              $region55: #{upsample2x_block.2} parent=31 // pred_check
                _
              $region56: #{upsample2x_block.2} parent=31 // pred_check_branch
                %779 = sbr.rel target = $region58
              $region57: #{upsample2x_block.2} parent=31 // pred_region
                _
              $region58: #{upsample2x_block.2} parent=31 // pred_fallthru
                _
            $region32: #{upsample2x_block.2} parent=27 // pred_fallthru
              _
            // Predicated region
            $region33: #{upsample2x_block.2} parent=27 // pred_check
              _
            $region34: #{upsample2x_block.2} parent=27 // pred_check_branch
              %182 = sbr.rel target = $region36
            $region35: #{upsample2x_block.2} parent=27 // pred_region
              loop: start=0, step=1, limit=1
              $region37: #{upsample2x_block.2} parent=35 // loop_pre_header
                _
              $region38: #{upsample2x_block.2} parent=35 // loop_header
                %s185 = sphi 0, %s189
                %p186 = scmp.ge.s32.totalorder %s185, 1
                %s190 = sphi %s176, %s176
                %s191 = sphi %s170, %s170
              $region39: #{upsample2x_block.2} parent=35 // loop_header_branch
                %188 = sbr.rel (%p186) target = $region43
              $region40: #{upsample2x_block.2} parent=35 // loop_body
                %v192 = vld [vmem:[%s190] sm:$0xff]
                %193 = vst [vmem:[%s191] sm:$0xff] %v192
                %v194 = vld [vmem:[%s190 + $0x8] sm:$0xff]
                %195 = vst [vmem:[%s191 + $0x8] sm:$0xff] %v194
                %v196 = vld [vmem:[%s190 + $0x10] sm:$0xff]
                %197 = vst [vmem:[%s191 + $0x10] sm:$0xff] %v196
                %v198 = vld [vmem:[%s190 + $0x18] sm:$0xff]
                %199 = vst [vmem:[%s191 + $0x18] sm:$0xff] %v198
                %v200 = vld [vmem:[%s190 + $0x20] sm:$0xff]
                %201 = vst [vmem:[%s191 + $0x20] sm:$0xff] %v200
                %v202 = vld [vmem:[%s190 + $0x28] sm:$0xff]
                %203 = vst [vmem:[%s191 + $0x28] sm:$0xff] %v202
                %v204 = vld [vmem:[%s190 + $0x30] sm:$0xff]
                %205 = vst [vmem:[%s191 + $0x30] sm:$0xff] %v204
                %v206 = vld [vmem:[%s190 + $0x38] sm:$0xff]
                %207 = vst [vmem:[%s191 + $0x38] sm:$0xff] %v206
                %v208 = vld [vmem:[%s190 + $0x40] sm:$0xff]
                %209 = vst [vmem:[%s191 + $0x40] sm:$0xff] %v208
                %v210 = vld [vmem:[%s190 + $0x48] sm:$0xff]
                %211 = vst [vmem:[%s191 + $0x48] sm:$0xff] %v210
                %v212 = vld [vmem:[%s190 + $0x50] sm:$0xff]
                %213 = vst [vmem:[%s191 + $0x50] sm:$0xff] %v212
                %v214 = vld [vmem:[%s190 + $0x58] sm:$0xff]
                %215 = vst [vmem:[%s191 + $0x58] sm:$0xff] %v214
                %v216 = vld [vmem:[%s190 + $0x60] sm:$0xff]
                %217 = vst [vmem:[%s191 + $0x60] sm:$0xff] %v216
                %v218 = vld [vmem:[%s190 + $0x68] sm:$0xff]
                %219 = vst [vmem:[%s191 + $0x68] sm:$0xff] %v218
                %v220 = vld [vmem:[%s190 + $0x70] sm:$0xff]
                %221 = vst [vmem:[%s191 + $0x70] sm:$0xff] %v220
                %v222 = vld [vmem:[%s190 + $0x78] sm:$0xff]
                %223 = vst [vmem:[%s191 + $0x78] sm:$0xff] %v222
                %v224 = vld [vmem:[%s190 + $0x80] sm:$0xff]
                %225 = vst [vmem:[%s191 + $0x80] sm:$0xff] %v224
                %v226 = vld [vmem:[%s190 + $0x88] sm:$0xff]
                %227 = vst [vmem:[%s191 + $0x88] sm:$0xff] %v226
                %v228 = vld [vmem:[%s190 + $0x90] sm:$0xff]
                %229 = vst [vmem:[%s191 + $0x90] sm:$0xff] %v228
                %v230 = vld [vmem:[%s190 + $0x98] sm:$0xff]
                %231 = vst [vmem:[%s191 + $0x98] sm:$0xff] %v230
                %v232 = vld [vmem:[%s190 + $0xa0] sm:$0xff]
                %233 = vst [vmem:[%s191 + $0xa0] sm:$0xff] %v232
                %v234 = vld [vmem:[%s190 + $0xa8] sm:$0xff]
                %235 = vst [vmem:[%s191 + $0xa8] sm:$0xff] %v234
                %v236 = vld [vmem:[%s190 + $0xb0] sm:$0xff]
                %237 = vst [vmem:[%s191 + $0xb0] sm:$0xff] %v236
                %v238 = vld [vmem:[%s190 + $0xb8] sm:$0xff]
                %239 = vst [vmem:[%s191 + $0xb8] sm:$0xff] %v238
                %v240 = vld [vmem:[%s190 + $0xc0] sm:$0xff]
                %241 = vst [vmem:[%s191 + $0xc0] sm:$0xff] %v240
                %v242 = vld [vmem:[%s190 + $0xc8] sm:$0xff]
                %243 = vst [vmem:[%s191 + $0xc8] sm:$0xff] %v242
                %v244 = vld [vmem:[%s190 + $0xd0] sm:$0xff]
                %245 = vst [vmem:[%s191 + $0xd0] sm:$0xff] %v244
                %v246 = vld [vmem:[%s190 + $0xd8] sm:$0xff]
                %247 = vst [vmem:[%s191 + $0xd8] sm:$0xff] %v246
                %v248 = vld [vmem:[%s190 + $0xe0] sm:$0xff]
                %249 = vst [vmem:[%s191 + $0xe0] sm:$0xff] %v248
                %v250 = vld [vmem:[%s190 + $0xe8] sm:$0xff]
                %251 = vst [vmem:[%s191 + $0xe8] sm:$0xff] %v250
                %v252 = vld [vmem:[%s190 + $0xf0] sm:$0xff]
                %253 = vst [vmem:[%s191 + $0xf0] sm:$0xff] %v252
                %v254 = vld [vmem:[%s190 + $0xf8] sm:$0xff]
                %255 = vst [vmem:[%s191 + $0xf8] sm:$0xff] %v254
                %v256 = vld [vmem:[%s190 + $0x100] sm:$0xff]
                %257 = vst [vmem:[%s191 + $0x100] sm:$0xff] %v256
                %v258 = vld [vmem:[%s190 + $0x108] sm:$0xff]
                %259 = vst [vmem:[%s191 + $0x108] sm:$0xff] %v258
                %v260 = vld [vmem:[%s190 + $0x110] sm:$0xff]
                %261 = vst [vmem:[%s191 + $0x110] sm:$0xff] %v260
                %v262 = vld [vmem:[%s190 + $0x118] sm:$0xff]
                %263 = vst [vmem:[%s191 + $0x118] sm:$0xff] %v262
                %v264 = vld [vmem:[%s190 + $0x120] sm:$0xff]
                %265 = vst [vmem:[%s191 + $0x120] sm:$0xff] %v264
                %v266 = vld [vmem:[%s190 + $0x128] sm:$0xff]
                %267 = vst [vmem:[%s191 + $0x128] sm:$0xff] %v266
                %v268 = vld [vmem:[%s190 + $0x130] sm:$0xff]
                %269 = vst [vmem:[%s191 + $0x130] sm:$0xff] %v268
                %v270 = vld [vmem:[%s190 + $0x138] sm:$0xff]
                %271 = vst [vmem:[%s191 + $0x138] sm:$0xff] %v270
                %v272 = vld [vmem:[%s190 + $0x140] sm:$0xff]
                %273 = vst [vmem:[%s191 + $0x140] sm:$0xff] %v272
                %v274 = vld [vmem:[%s190 + $0x148] sm:$0xff]
                %275 = vst [vmem:[%s191 + $0x148] sm:$0xff] %v274
                %v276 = vld [vmem:[%s190 + $0x150] sm:$0xff]
                %277 = vst [vmem:[%s191 + $0x150] sm:$0xff] %v276
                %v278 = vld [vmem:[%s190 + $0x158] sm:$0xff]
                %279 = vst [vmem:[%s191 + $0x158] sm:$0xff] %v278
                %v280 = vld [vmem:[%s190 + $0x160] sm:$0xff]
                %281 = vst [vmem:[%s191 + $0x160] sm:$0xff] %v280
                %v282 = vld [vmem:[%s190 + $0x168] sm:$0xff]
                %283 = vst [vmem:[%s191 + $0x168] sm:$0xff] %v282
                %v284 = vld [vmem:[%s190 + $0x170] sm:$0xff]
                %285 = vst [vmem:[%s191 + $0x170] sm:$0xff] %v284
                %v286 = vld [vmem:[%s190 + $0x178] sm:$0xff]
                %287 = vst [vmem:[%s191 + $0x178] sm:$0xff] %v286
                %v288 = vld [vmem:[%s190 + $0x300] sm:$0xff]
                %289 = vst [vmem:[%s191 + $0x180] sm:$0xff] %v288
                %v290 = vld [vmem:[%s190 + $0x308] sm:$0xff]
                %291 = vst [vmem:[%s191 + $0x188] sm:$0xff] %v290
                %v292 = vld [vmem:[%s190 + $0x310] sm:$0xff]
                %293 = vst [vmem:[%s191 + $0x190] sm:$0xff] %v292
                %v294 = vld [vmem:[%s190 + $0x318] sm:$0xff]
                %295 = vst [vmem:[%s191 + $0x198] sm:$0xff] %v294
                %v296 = vld [vmem:[%s190 + $0x320] sm:$0xff]
                %297 = vst [vmem:[%s191 + $0x1a0] sm:$0xff] %v296
                %v298 = vld [vmem:[%s190 + $0x328] sm:$0xff]
                %299 = vst [vmem:[%s191 + $0x1a8] sm:$0xff] %v298
                %v300 = vld [vmem:[%s190 + $0x330] sm:$0xff]
                %301 = vst [vmem:[%s191 + $0x1b0] sm:$0xff] %v300
                %v302 = vld [vmem:[%s190 + $0x338] sm:$0xff]
                %303 = vst [vmem:[%s191 + $0x1b8] sm:$0xff] %v302
                %v304 = vld [vmem:[%s190 + $0x340] sm:$0xff]
                %305 = vst [vmem:[%s191 + $0x1c0] sm:$0xff] %v304
                %v306 = vld [vmem:[%s190 + $0x348] sm:$0xff]
                %307 = vst [vmem:[%s191 + $0x1c8] sm:$0xff] %v306
                %v308 = vld [vmem:[%s190 + $0x350] sm:$0xff]
                %309 = vst [vmem:[%s191 + $0x1d0] sm:$0xff] %v308
                %v310 = vld [vmem:[%s190 + $0x358] sm:$0xff]
                %311 = vst [vmem:[%s191 + $0x1d8] sm:$0xff] %v310
                %v312 = vld [vmem:[%s190 + $0x360] sm:$0xff]
                %313 = vst [vmem:[%s191 + $0x1e0] sm:$0xff] %v312
                %v314 = vld [vmem:[%s190 + $0x368] sm:$0xff]
                %315 = vst [vmem:[%s191 + $0x1e8] sm:$0xff] %v314
                %v316 = vld [vmem:[%s190 + $0x370] sm:$0xff]
                %317 = vst [vmem:[%s191 + $0x1f0] sm:$0xff] %v316
                %v318 = vld [vmem:[%s190 + $0x378] sm:$0xff]
                %319 = vst [vmem:[%s191 + $0x1f8] sm:$0xff] %v318
                %v320 = vld [vmem:[%s190 + $0x380] sm:$0xff]
                %321 = vst [vmem:[%s191 + $0x200] sm:$0xff] %v320
                %v322 = vld [vmem:[%s190 + $0x388] sm:$0xff]
                %323 = vst [vmem:[%s191 + $0x208] sm:$0xff] %v322
                %v324 = vld [vmem:[%s190 + $0x390] sm:$0xff]
                %325 = vst [vmem:[%s191 + $0x210] sm:$0xff] %v324
                %v326 = vld [vmem:[%s190 + $0x398] sm:$0xff]
                %327 = vst [vmem:[%s191 + $0x218] sm:$0xff] %v326
                %v328 = vld [vmem:[%s190 + $0x3a0] sm:$0xff]
                %329 = vst [vmem:[%s191 + $0x220] sm:$0xff] %v328
                %v330 = vld [vmem:[%s190 + $0x3a8] sm:$0xff]
                %331 = vst [vmem:[%s191 + $0x228] sm:$0xff] %v330
                %v332 = vld [vmem:[%s190 + $0x3b0] sm:$0xff]
                %333 = vst [vmem:[%s191 + $0x230] sm:$0xff] %v332
                %v334 = vld [vmem:[%s190 + $0x3b8] sm:$0xff]
                %335 = vst [vmem:[%s191 + $0x238] sm:$0xff] %v334
                %v336 = vld [vmem:[%s190 + $0x3c0] sm:$0xff]
                %337 = vst [vmem:[%s191 + $0x240] sm:$0xff] %v336
                %v338 = vld [vmem:[%s190 + $0x3c8] sm:$0xff]
                %339 = vst [vmem:[%s191 + $0x248] sm:$0xff] %v338
                %v340 = vld [vmem:[%s190 + $0x3d0] sm:$0xff]
                %341 = vst [vmem:[%s191 + $0x250] sm:$0xff] %v340
                %v342 = vld [vmem:[%s190 + $0x3d8] sm:$0xff]
                %343 = vst [vmem:[%s191 + $0x258] sm:$0xff] %v342
                %v344 = vld [vmem:[%s190 + $0x3e0] sm:$0xff]
                %345 = vst [vmem:[%s191 + $0x260] sm:$0xff] %v344
                %v346 = vld [vmem:[%s190 + $0x3e8] sm:$0xff]
                %347 = vst [vmem:[%s191 + $0x268] sm:$0xff] %v346
                %v348 = vld [vmem:[%s190 + $0x3f0] sm:$0xff]
                %349 = vst [vmem:[%s191 + $0x270] sm:$0xff] %v348
                %v350 = vld [vmem:[%s190 + $0x3f8] sm:$0xff]
                %351 = vst [vmem:[%s191 + $0x278] sm:$0xff] %v350
                %v352 = vld [vmem:[%s190 + $0x400] sm:$0xff]
                %353 = vst [vmem:[%s191 + $0x280] sm:$0xff] %v352
                %v354 = vld [vmem:[%s190 + $0x408] sm:$0xff]
                %355 = vst [vmem:[%s191 + $0x288] sm:$0xff] %v354
                %v356 = vld [vmem:[%s190 + $0x410] sm:$0xff]
                %357 = vst [vmem:[%s191 + $0x290] sm:$0xff] %v356
                %v358 = vld [vmem:[%s190 + $0x418] sm:$0xff]
                %359 = vst [vmem:[%s191 + $0x298] sm:$0xff] %v358
                %v360 = vld [vmem:[%s190 + $0x420] sm:$0xff]
                %361 = vst [vmem:[%s191 + $0x2a0] sm:$0xff] %v360
                %v362 = vld [vmem:[%s190 + $0x428] sm:$0xff]
                %363 = vst [vmem:[%s191 + $0x2a8] sm:$0xff] %v362
                %v364 = vld [vmem:[%s190 + $0x430] sm:$0xff]
                %365 = vst [vmem:[%s191 + $0x2b0] sm:$0xff] %v364
                %v366 = vld [vmem:[%s190 + $0x438] sm:$0xff]
                %367 = vst [vmem:[%s191 + $0x2b8] sm:$0xff] %v366
                %v368 = vld [vmem:[%s190 + $0x440] sm:$0xff]
                %369 = vst [vmem:[%s191 + $0x2c0] sm:$0xff] %v368
                %v370 = vld [vmem:[%s190 + $0x448] sm:$0xff]
                %371 = vst [vmem:[%s191 + $0x2c8] sm:$0xff] %v370
                %v372 = vld [vmem:[%s190 + $0x450] sm:$0xff]
                %373 = vst [vmem:[%s191 + $0x2d0] sm:$0xff] %v372
                %v374 = vld [vmem:[%s190 + $0x458] sm:$0xff]
                %375 = vst [vmem:[%s191 + $0x2d8] sm:$0xff] %v374
                %v376 = vld [vmem:[%s190 + $0x460] sm:$0xff]
                %377 = vst [vmem:[%s191 + $0x2e0] sm:$0xff] %v376
                %v378 = vld [vmem:[%s190 + $0x468] sm:$0xff]
                %379 = vst [vmem:[%s191 + $0x2e8] sm:$0xff] %v378
                %v380 = vld [vmem:[%s190 + $0x470] sm:$0xff]
                %381 = vst [vmem:[%s191 + $0x2f0] sm:$0xff] %v380
                %v382 = vld [vmem:[%s190 + $0x478] sm:$0xff]
                %383 = vst [vmem:[%s191 + $0x2f8] sm:$0xff] %v382
                %v384 = vld [vmem:[%s190 + $0x600] sm:$0xff]
                %385 = vst [vmem:[%s191 + $0x300] sm:$0xff] %v384
                %v386 = vld [vmem:[%s190 + $0x608] sm:$0xff]
                %387 = vst [vmem:[%s191 + $0x308] sm:$0xff] %v386
                %v388 = vld [vmem:[%s190 + $0x610] sm:$0xff]
                %389 = vst [vmem:[%s191 + $0x310] sm:$0xff] %v388
                %v390 = vld [vmem:[%s190 + $0x618] sm:$0xff]
                %391 = vst [vmem:[%s191 + $0x318] sm:$0xff] %v390
                %v392 = vld [vmem:[%s190 + $0x620] sm:$0xff]
                %393 = vst [vmem:[%s191 + $0x320] sm:$0xff] %v392
                %v394 = vld [vmem:[%s190 + $0x628] sm:$0xff]
                %395 = vst [vmem:[%s191 + $0x328] sm:$0xff] %v394
                %v396 = vld [vmem:[%s190 + $0x630] sm:$0xff]
                %397 = vst [vmem:[%s191 + $0x330] sm:$0xff] %v396
                %v398 = vld [vmem:[%s190 + $0x638] sm:$0xff]
                %399 = vst [vmem:[%s191 + $0x338] sm:$0xff] %v398
                %v400 = vld [vmem:[%s190 + $0x640] sm:$0xff]
                %401 = vst [vmem:[%s191 + $0x340] sm:$0xff] %v400
                %v402 = vld [vmem:[%s190 + $0x648] sm:$0xff]
                %403 = vst [vmem:[%s191 + $0x348] sm:$0xff] %v402
                %v404 = vld [vmem:[%s190 + $0x650] sm:$0xff]
                %405 = vst [vmem:[%s191 + $0x350] sm:$0xff] %v404
                %v406 = vld [vmem:[%s190 + $0x658] sm:$0xff]
                %407 = vst [vmem:[%s191 + $0x358] sm:$0xff] %v406
                %v408 = vld [vmem:[%s190 + $0x660] sm:$0xff]
                %409 = vst [vmem:[%s191 + $0x360] sm:$0xff] %v408
                %v410 = vld [vmem:[%s190 + $0x668] sm:$0xff]
                %411 = vst [vmem:[%s191 + $0x368] sm:$0xff] %v410
                %v412 = vld [vmem:[%s190 + $0x670] sm:$0xff]
                %413 = vst [vmem:[%s191 + $0x370] sm:$0xff] %v412
                %v414 = vld [vmem:[%s190 + $0x678] sm:$0xff]
                %415 = vst [vmem:[%s191 + $0x378] sm:$0xff] %v414
                %v416 = vld [vmem:[%s190 + $0x680] sm:$0xff]
                %417 = vst [vmem:[%s191 + $0x380] sm:$0xff] %v416
                %v418 = vld [vmem:[%s190 + $0x688] sm:$0xff]
                %419 = vst [vmem:[%s191 + $0x388] sm:$0xff] %v418
                %v420 = vld [vmem:[%s190 + $0x690] sm:$0xff]
                %421 = vst [vmem:[%s191 + $0x390] sm:$0xff] %v420
                %v422 = vld [vmem:[%s190 + $0x698] sm:$0xff]
                %423 = vst [vmem:[%s191 + $0x398] sm:$0xff] %v422
                %v424 = vld [vmem:[%s190 + $0x6a0] sm:$0xff]
                %425 = vst [vmem:[%s191 + $0x3a0] sm:$0xff] %v424
                %v426 = vld [vmem:[%s190 + $0x6a8] sm:$0xff]
                %427 = vst [vmem:[%s191 + $0x3a8] sm:$0xff] %v426
                %v428 = vld [vmem:[%s190 + $0x6b0] sm:$0xff]
                %429 = vst [vmem:[%s191 + $0x3b0] sm:$0xff] %v428
                %v430 = vld [vmem:[%s190 + $0x6b8] sm:$0xff]
                %431 = vst [vmem:[%s191 + $0x3b8] sm:$0xff] %v430
                %v432 = vld [vmem:[%s190 + $0x6c0] sm:$0xff]
                %433 = vst [vmem:[%s191 + $0x3c0] sm:$0xff] %v432
                %v434 = vld [vmem:[%s190 + $0x6c8] sm:$0xff]
                %435 = vst [vmem:[%s191 + $0x3c8] sm:$0xff] %v434
                %v436 = vld [vmem:[%s190 + $0x6d0] sm:$0xff]
                %437 = vst [vmem:[%s191 + $0x3d0] sm:$0xff] %v436
                %v438 = vld [vmem:[%s190 + $0x6d8] sm:$0xff]
                %439 = vst [vmem:[%s191 + $0x3d8] sm:$0xff] %v438
                %v440 = vld [vmem:[%s190 + $0x6e0] sm:$0xff]
                %441 = vst [vmem:[%s191 + $0x3e0] sm:$0xff] %v440
                %v442 = vld [vmem:[%s190 + $0x6e8] sm:$0xff]
                %443 = vst [vmem:[%s191 + $0x3e8] sm:$0xff] %v442
                %v444 = vld [vmem:[%s190 + $0x6f0] sm:$0xff]
                %445 = vst [vmem:[%s191 + $0x3f0] sm:$0xff] %v444
                %v446 = vld [vmem:[%s190 + $0x6f8] sm:$0xff]
                %447 = vst [vmem:[%s191 + $0x3f8] sm:$0xff] %v446
                %v448 = vld [vmem:[%s190 + $0x700] sm:$0xff]
                %449 = vst [vmem:[%s191 + $0x400] sm:$0xff] %v448
                %v450 = vld [vmem:[%s190 + $0x708] sm:$0xff]
                %451 = vst [vmem:[%s191 + $0x408] sm:$0xff] %v450
                %v452 = vld [vmem:[%s190 + $0x710] sm:$0xff]
                %453 = vst [vmem:[%s191 + $0x410] sm:$0xff] %v452
                %v454 = vld [vmem:[%s190 + $0x718] sm:$0xff]
                %455 = vst [vmem:[%s191 + $0x418] sm:$0xff] %v454
                %v456 = vld [vmem:[%s190 + $0x720] sm:$0xff]
                %457 = vst [vmem:[%s191 + $0x420] sm:$0xff] %v456
                %v458 = vld [vmem:[%s190 + $0x728] sm:$0xff]
                %459 = vst [vmem:[%s191 + $0x428] sm:$0xff] %v458
                %v460 = vld [vmem:[%s190 + $0x730] sm:$0xff]
                %461 = vst [vmem:[%s191 + $0x430] sm:$0xff] %v460
                %v462 = vld [vmem:[%s190 + $0x738] sm:$0xff]
                %463 = vst [vmem:[%s191 + $0x438] sm:$0xff] %v462
                %v464 = vld [vmem:[%s190 + $0x740] sm:$0xff]
                %465 = vst [vmem:[%s191 + $0x440] sm:$0xff] %v464
                %v466 = vld [vmem:[%s190 + $0x748] sm:$0xff]
                %467 = vst [vmem:[%s191 + $0x448] sm:$0xff] %v466
                %v468 = vld [vmem:[%s190 + $0x750] sm:$0xff]
                %469 = vst [vmem:[%s191 + $0x450] sm:$0xff] %v468
                %v470 = vld [vmem:[%s190 + $0x758] sm:$0xff]
                %471 = vst [vmem:[%s191 + $0x458] sm:$0xff] %v470
                %v472 = vld [vmem:[%s190 + $0x760] sm:$0xff]
                %473 = vst [vmem:[%s191 + $0x460] sm:$0xff] %v472
                %v474 = vld [vmem:[%s190 + $0x768] sm:$0xff]
                %475 = vst [vmem:[%s191 + $0x468] sm:$0xff] %v474
                %v476 = vld [vmem:[%s190 + $0x770] sm:$0xff]
                %477 = vst [vmem:[%s191 + $0x470] sm:$0xff] %v476
                %v478 = vld [vmem:[%s190 + $0x778] sm:$0xff]
                %479 = vst [vmem:[%s191 + $0x478] sm:$0xff] %v478
              $region41: #{upsample2x_block.2} parent=35 // loop_footer
                %s189 = sadd.s32 1, %s185
              $region42: #{upsample2x_block.2} parent=35 // loop_footer_branch
                %184 = sbr.rel target = $region38
              $region43: #{upsample2x_block.2} parent=35 // loop_exit
                _
            $region36: #{upsample2x_block.2} parent=27 // pred_fallthru
              _
          $region28: #{upsample2x_block.2} parent=23 // pred_fallthru
            _
          %780 = vnop
        $region24: #{upsample2x_block.2} parent=19 // pred_fallthru
          _
      $region20: #{upsample2x_block.2} parent=5 // pred_fallthru
        _
      %p781 = scmp.le.s32.totalorder 1, %s11
      %p782 = scmp.lt.s32.totalorder %s11, 3
      %p783 = pnand %p781, %p782
      %p784 = pneg %p783
      // Predicated region
      $region59: #{upsample2x_block.2} parent=5 // pred_check
        _
      $region60: #{upsample2x_block.2} parent=5 // pred_check_branch
        %786 = sbr.rel (%p783) target = $region62
      $region61: #{upsample2x_block.2} parent=5 // pred_region
        %s787 = ssub.s32 %s11, 1
        %s788 = sand.u32 %s38, 1
        %s789 = sand.u32 %s38, 1
        %s790 = smul.addr %s789, 1152
        %s791 = scalar_lea.vmem [#allocation2], %s790
        // Predicated region
        $region63: #{upsample2x_block.2} parent=61 // pred_check
          %p792 = pneg %p51
        $region64: #{upsample2x_block.2} parent=61 // pred_check_branch
          %794 = sbr.rel (%p792) target = $region66
        $region65: #{upsample2x_block.2} parent=61 // pred_region
          _
        $region66: #{upsample2x_block.2} parent=61 // pred_fallthru
          _
        %s795 = sand.u32 %s38, 1
        %s796 = sand.u32 %s38, 1
        %s797 = smul.addr %s796, 1152
        %s798 = scalar_lea.vmem [#allocation2], %s797
        %p799 = pneg %p51
        %p800 = pneg %p48
        %p801 = pneg %p72
        %p802 = pneg %p69
        %p803 = pneg %p100
        %p804 = pneg %p97
        %s805 = sand.u32 %s87, 1
        %s806 = sand.u32 %s87, 1
        %s807 = smul.addr %s806, 64
        %s808 = scalar_lea.vmem [#allocation3], %s807
        %p809 = pneg %p121
        %p810 = pneg %p118
        %p811 = pneg %p142
        %p812 = pneg %p139
        %s813 = smul.u32 16, %s21
        %s814 = smul.u32 2, %s21
        %p815 = scmp.eq.s32.totalorder %s20, 0
        %p816 = scmp.eq.s32.totalorder %s21, 0
        %p817 = pnand %p815, %p816
        %p818 = pneg %p817
        // Predicated region
        $region67: #{upsample2x_block.2} parent=61 // pred_check
          _
        $region68: #{upsample2x_block.2} parent=61 // pred_check_branch
          %820 = sbr.rel (%p817) target = $region70
        $region69: #{upsample2x_block.2} parent=61 // pred_region
          %vm821 = vcmask 7168
          %822 = vst.msk [vmem:[%s3] sm:$0xff] %vm821, 0.0
          %823 = vst.msk [vmem:[%s4] sm:$0xff] %vm821, 0.0
        $region70: #{upsample2x_block.2} parent=61 // pred_fallthru
          _
        %v824 = vld [vmem:[%s791] sm:$0xff]
        %v825 = vld [vmem:[%s791 + $0x8] sm:$0xff]
        %v826 = vld [vmem:[%s791 + $0x10] sm:$0x3]
        %v827 = vld [vmem:[%s791 + $0x18] sm:$0xff]
        %v828 = vld [vmem:[%s791 + $0x20] sm:$0xff]
        %v829 = vld [vmem:[%s791 + $0x28] sm:$0x3]
        %v830 = vld [vmem:[%s791 + $0x30] sm:$0xff]
        %v831 = vld [vmem:[%s791 + $0x38] sm:$0xff]
        %v832 = vld [vmem:[%s791 + $0x40] sm:$0x3]
        %v833 = vld [vmem:[%s791 + $0x48] sm:$0xff]
        %v834 = vld [vmem:[%s791 + $0x50] sm:$0xff]
        %v835 = vld [vmem:[%s791 + $0x58] sm:$0x3]
        %v836 = vld [vmem:[%s791 + $0x60] sm:$0xff]
        %v837 = vld [vmem:[%s791 + $0x68] sm:$0xff]
        %v838 = vld [vmem:[%s791 + $0x70] sm:$0x3]
        %v839 = vld [vmem:[%s791 + $0x78] sm:$0xff]
        %v840 = vld [vmem:[%s791 + $0x80] sm:$0xff]
        %v841 = vld [vmem:[%s791 + $0x88] sm:$0x3]
        %v842 = vld [vmem:[%s791 + $0x90] sm:$0xff]
        %v843 = vld [vmem:[%s791 + $0x98] sm:$0xff]
        %v844 = vld [vmem:[%s791 + $0xa0] sm:$0x3]
        %v845 = vld [vmem:[%s791 + $0xa8] sm:$0xff]
        %v846 = vld [vmem:[%s791 + $0xb0] sm:$0xff]
        %v847 = vld [vmem:[%s791 + $0xb8] sm:$0x3]
        %v848 = vld [vmem:[%s791 + $0xc0] sm:$0xff]
        %v849 = vld [vmem:[%s791 + $0xc8] sm:$0xff]
        %v850 = vld [vmem:[%s791 + $0xd0] sm:$0x3]
        %v851 = vld [vmem:[%s791 + $0xd8] sm:$0xff]
        %v852 = vld [vmem:[%s791 + $0xe0] sm:$0xff]
        %v853 = vld [vmem:[%s791 + $0xe8] sm:$0x3]
        %v854 = vld [vmem:[%s791 + $0xf0] sm:$0xff]
        %v855 = vld [vmem:[%s791 + $0xf8] sm:$0xff]
        %v856 = vld [vmem:[%s791 + $0x100] sm:$0x3]
        %v857 = vld [vmem:[%s791 + $0x108] sm:$0xff]
        %v858 = vld [vmem:[%s791 + $0x110] sm:$0xff]
        %v859 = vld [vmem:[%s791 + $0x118] sm:$0x3]
        %v860 = vld [vmem:[%s791 + $0x120] sm:$0xff]
        %v861 = vld [vmem:[%s791 + $0x128] sm:$0xff]
        %v862 = vld [vmem:[%s791 + $0x130] sm:$0x3]
        %v863 = vld [vmem:[%s791 + $0x138] sm:$0xff]
        %v864 = vld [vmem:[%s791 + $0x140] sm:$0xff]
        %v865 = vld [vmem:[%s791 + $0x148] sm:$0x3]
        %v866 = vld [vmem:[%s791 + $0x150] sm:$0xff]
        %v867 = vld [vmem:[%s791 + $0x158] sm:$0xff]
        %v868 = vld [vmem:[%s791 + $0x160] sm:$0x3]
        %v869 = vld [vmem:[%s791 + $0x168] sm:$0xff]
        %v870 = vld [vmem:[%s791 + $0x170] sm:$0xff]
        %v871 = vld [vmem:[%s791 + $0x178] sm:$0x3]
        %v872 = vld [vmem:[%s791 + $0x180] sm:$0xff]
        %v873 = vld [vmem:[%s791 + $0x188] sm:$0xff]
        %v874 = vld [vmem:[%s791 + $0x190] sm:$0x3]
        %v875 = vld [vmem:[%s791 + $0x198] sm:$0xff]
        %v876 = vld [vmem:[%s791 + $0x1a0] sm:$0xff]
        %v877 = vld [vmem:[%s791 + $0x1a8] sm:$0x3]
        %v878 = vld [vmem:[%s791 + $0x1b0] sm:$0xff]
        %v879 = vld [vmem:[%s791 + $0x1b8] sm:$0xff]
        %v880 = vld [vmem:[%s791 + $0x1c0] sm:$0x3]
        %v881 = vld [vmem:[%s791 + $0x1c8] sm:$0xff]
        %v882 = vld [vmem:[%s791 + $0x1d0] sm:$0xff]
        %v883 = vld [vmem:[%s791 + $0x1d8] sm:$0x3]
        %v884 = vld [vmem:[%s791 + $0x1e0] sm:$0xff]
        %v885 = vld [vmem:[%s791 + $0x1e8] sm:$0xff]
        %v886 = vld [vmem:[%s791 + $0x1f0] sm:$0x3]
        %v887 = vld [vmem:[%s791 + $0x1f8] sm:$0xff]
        %v888 = vld [vmem:[%s791 + $0x200] sm:$0xff]
        %v889 = vld [vmem:[%s791 + $0x208] sm:$0x3]
        %v890 = vld [vmem:[%s791 + $0x210] sm:$0xff]
        %v891 = vld [vmem:[%s791 + $0x218] sm:$0xff]
        %v892 = vld [vmem:[%s791 + $0x220] sm:$0x3]
        %v893 = vld [vmem:[%s791 + $0x228] sm:$0xff]
        %v894 = vld [vmem:[%s791 + $0x230] sm:$0xff]
        %v895 = vld [vmem:[%s791 + $0x238] sm:$0x3]
        %v896 = vld [vmem:[%s791 + $0x240] sm:$0xff]
        %v897 = vld [vmem:[%s791 + $0x248] sm:$0xff]
        %v898 = vld [vmem:[%s791 + $0x250] sm:$0x3]
        %v899 = vld [vmem:[%s791 + $0x258] sm:$0xff]
        %v900 = vld [vmem:[%s791 + $0x260] sm:$0xff]
        %v901 = vld [vmem:[%s791 + $0x268] sm:$0x3]
        %v902 = vld [vmem:[%s791 + $0x270] sm:$0xff]
        %v903 = vld [vmem:[%s791 + $0x278] sm:$0xff]
        %v904 = vld [vmem:[%s791 + $0x280] sm:$0x3]
        %v905 = vld [vmem:[%s791 + $0x288] sm:$0xff]
        %v906 = vld [vmem:[%s791 + $0x290] sm:$0xff]
        %v907 = vld [vmem:[%s791 + $0x298] sm:$0x3]
        %v908 = vld [vmem:[%s791 + $0x2a0] sm:$0xff]
        %v909 = vld [vmem:[%s791 + $0x2a8] sm:$0xff]
        %v910 = vld [vmem:[%s791 + $0x2b0] sm:$0x3]
        %v911 = vld [vmem:[%s791 + $0x2b8] sm:$0xff]
        %v912 = vld [vmem:[%s791 + $0x2c0] sm:$0xff]
        %v913 = vld [vmem:[%s791 + $0x2c8] sm:$0x3]
        %v914 = vld [vmem:[%s791 + $0x2d0] sm:$0xff]
        %v915 = vld [vmem:[%s791 + $0x2d8] sm:$0xff]
        %v916 = vld [vmem:[%s791 + $0x2e0] sm:$0x3]
        %v917 = vld [vmem:[%s791 + $0x2e8] sm:$0xff]
        %v918 = vld [vmem:[%s791 + $0x2f0] sm:$0xff]
        %v919 = vld [vmem:[%s791 + $0x2f8] sm:$0x3]
        %v920 = vld [vmem:[%s791 + $0x300] sm:$0xff]
        %v921 = vld [vmem:[%s791 + $0x308] sm:$0xff]
        %v922 = vld [vmem:[%s791 + $0x310] sm:$0x3]
        %v923 = vld [vmem:[%s791 + $0x318] sm:$0xff]
        %v924 = vld [vmem:[%s791 + $0x320] sm:$0xff]
        %v925 = vld [vmem:[%s791 + $0x328] sm:$0x3]
        %v926 = vld [vmem:[%s791 + $0x330] sm:$0xff]
        %v927 = vld [vmem:[%s791 + $0x338] sm:$0xff]
        %v928 = vld [vmem:[%s791 + $0x340] sm:$0x3]
        %v929 = vld [vmem:[%s791 + $0x348] sm:$0xff]
        %v930 = vld [vmem:[%s791 + $0x350] sm:$0xff]
        %v931 = vld [vmem:[%s791 + $0x358] sm:$0x3]
        %v932 = vld [vmem:[%s791 + $0x360] sm:$0xff]
        %v933 = vld [vmem:[%s791 + $0x368] sm:$0xff]
        %v934 = vld [vmem:[%s791 + $0x370] sm:$0x3]
        %v935 = vld [vmem:[%s791 + $0x378] sm:$0xff]
        %v936 = vld [vmem:[%s791 + $0x380] sm:$0xff]
        %v937 = vld [vmem:[%s791 + $0x388] sm:$0x3]
        %v938 = vld [vmem:[%s791 + $0x390] sm:$0xff]
        %v939 = vld [vmem:[%s791 + $0x398] sm:$0xff]
        %v940 = vld [vmem:[%s791 + $0x3a0] sm:$0x3]
        %v941 = vld [vmem:[%s791 + $0x3a8] sm:$0xff]
        %v942 = vld [vmem:[%s791 + $0x3b0] sm:$0xff]
        %v943 = vld [vmem:[%s791 + $0x3b8] sm:$0x3]
        %v944 = vld [vmem:[%s791 + $0x3c0] sm:$0xff]
        %v945 = vld [vmem:[%s791 + $0x3c8] sm:$0xff]
        %v946 = vld [vmem:[%s791 + $0x3d0] sm:$0x3]
        %v947 = vld [vmem:[%s791 + $0x3d8] sm:$0xff]
        %v948 = vld [vmem:[%s791 + $0x3e0] sm:$0xff]
        %v949 = vld [vmem:[%s791 + $0x3e8] sm:$0x3]
        %v950 = vld [vmem:[%s791 + $0x3f0] sm:$0xff]
        %v951 = vld [vmem:[%s791 + $0x3f8] sm:$0xff]
        %v952 = vld [vmem:[%s791 + $0x400] sm:$0x3]
        %v953 = vld [vmem:[%s791 + $0x408] sm:$0xff]
        %v954 = vld [vmem:[%s791 + $0x410] sm:$0xff]
        %v955 = vld [vmem:[%s791 + $0x418] sm:$0x3]
        %v956 = vld [vmem:[%s791 + $0x420] sm:$0xff]
        %v957 = vld [vmem:[%s791 + $0x428] sm:$0xff]
        %v958 = vld [vmem:[%s791 + $0x430] sm:$0x3]
        %v959 = vld [vmem:[%s791 + $0x438] sm:$0xff]
        %v960 = vld [vmem:[%s791 + $0x440] sm:$0xff]
        %v961 = vld [vmem:[%s791 + $0x448] sm:$0x3]
        %v962 = vld [vmem:[%s791 + $0x450] sm:$0xff]
        %v963 = vld [vmem:[%s791 + $0x458] sm:$0xff]
        %v964 = vld [vmem:[%s791 + $0x460] sm:$0x3]
        %v965 = vld [vmem:[%s791 + $0x468] sm:$0xff]
        %v966 = vld [vmem:[%s791 + $0x470] sm:$0xff]
        %v967 = vld [vmem:[%s791 + $0x478] sm:$0x3]
        %v968 = vld [vmem:[%s1] sm:$0xff]
        %v969 = vld [vmem:[%s1 + $0x8] sm:$0xff]
        %v970 = vld [vmem:[%s1 + $0x10] sm:$0xff]
        %v971 = vld [vmem:[%s1 + $0x18] sm:$0xff]
        %v972 = vld [vmem:[%s1 + $0x20] sm:$0xff]
        %v973 = vld [vmem:[%s1 + $0x28] sm:$0xff]
        %v974 = vld [vmem:[%s1 + $0x30] sm:$0xff]
        %v975 = vld [vmem:[%s1 + $0x38] sm:$0xff]
        %v976 = vld [vmem:[%s1 + $0x40] sm:$0xff]
        %v977 = vld [vmem:[%s1 + $0x48] sm:$0xff]
        %v978 = vld [vmem:[%s1 + $0x50] sm:$0xff]
        %v979 = vld [vmem:[%s1 + $0x58] sm:$0xff]
        %v980 = vld [vmem:[%s1 + $0x60] sm:$0xff]
        %v981 = vld [vmem:[%s1 + $0x68] sm:$0xff]
        %v982 = vld [vmem:[%s1 + $0x70] sm:$0xff]
        %v983 = vld [vmem:[%s1 + $0x78] sm:$0xff]
        %vm1032 = vcmask 1046528
        %v1033 = vrot.slane %v824, 1
        %v1034 = vrot.slane %v825, 1
        %v1035 = vsel %vm1032, %v1033, %v1034
        %v1036 = vrot.slane %v826, 1
        %v1037 = vsel %vm1032, %v1034, %v1036
        %v1038 = vrot.slane %v827, 1
        %v1039 = vrot.slane %v828, 1
        %v1040 = vsel %vm1032, %v1038, %v1039
        %v1041 = vrot.slane %v829, 1
        %v1042 = vsel %vm1032, %v1039, %v1041
        %v1043 = vrot.slane %v830, 1
        %v1044 = vrot.slane %v831, 1
        %v1045 = vsel %vm1032, %v1043, %v1044
        %v1046 = vrot.slane %v832, 1
        %v1047 = vsel %vm1032, %v1044, %v1046
        %v1048 = vrot.slane %v833, 1
        %v1049 = vrot.slane %v834, 1
        %v1050 = vsel %vm1032, %v1048, %v1049
        %v1051 = vrot.slane %v835, 1
        %v1052 = vsel %vm1032, %v1049, %v1051
        %v1053 = vrot.slane %v836, 1
        %v1054 = vrot.slane %v837, 1
        %v1055 = vsel %vm1032, %v1053, %v1054
        %v1056 = vrot.slane %v838, 1
        %v1057 = vsel %vm1032, %v1054, %v1056
        %v1058 = vrot.slane %v839, 1
        %v1059 = vrot.slane %v840, 1
        %v1060 = vsel %vm1032, %v1058, %v1059
        %v1061 = vrot.slane %v841, 1
        %v1062 = vsel %vm1032, %v1059, %v1061
        %v1063 = vrot.slane %v842, 1
        %v1064 = vrot.slane %v843, 1
        %v1065 = vsel %vm1032, %v1063, %v1064
        %v1066 = vrot.slane %v844, 1
        %v1067 = vsel %vm1032, %v1064, %v1066
        %v1068 = vrot.slane %v845, 1
        %v1069 = vrot.slane %v846, 1
        %v1070 = vsel %vm1032, %v1068, %v1069
        %v1071 = vrot.slane %v847, 1
        %v1072 = vsel %vm1032, %v1069, %v1071
        %v1073 = vrot.slane %v848, 1
        %v1074 = vrot.slane %v849, 1
        %v1075 = vsel %vm1032, %v1073, %v1074
        %v1076 = vrot.slane %v850, 1
        %v1077 = vsel %vm1032, %v1074, %v1076
        %v1078 = vrot.slane %v851, 1
        %v1079 = vrot.slane %v852, 1
        %v1080 = vsel %vm1032, %v1078, %v1079
        %v1081 = vrot.slane %v853, 1
        %v1082 = vsel %vm1032, %v1079, %v1081
        %v1083 = vrot.slane %v854, 1
        %v1084 = vrot.slane %v855, 1
        %v1085 = vsel %vm1032, %v1083, %v1084
        %v1086 = vrot.slane %v856, 1
        %v1087 = vsel %vm1032, %v1084, %v1086
        %v1088 = vrot.slane %v857, 1
        %v1089 = vrot.slane %v858, 1
        %v1090 = vsel %vm1032, %v1088, %v1089
        %v1091 = vrot.slane %v859, 1
        %v1092 = vsel %vm1032, %v1089, %v1091
        %v1093 = vrot.slane %v860, 1
        %v1094 = vrot.slane %v861, 1
        %v1095 = vsel %vm1032, %v1093, %v1094
        %v1096 = vrot.slane %v862, 1
        %v1097 = vsel %vm1032, %v1094, %v1096
        %v1098 = vrot.slane %v863, 1
        %v1099 = vrot.slane %v864, 1
        %v1100 = vsel %vm1032, %v1098, %v1099
        %v1101 = vrot.slane %v865, 1
        %v1102 = vsel %vm1032, %v1099, %v1101
        %v1103 = vrot.slane %v866, 1
        %v1104 = vrot.slane %v867, 1
        %v1105 = vsel %vm1032, %v1103, %v1104
        %v1106 = vrot.slane %v868, 1
        %v1107 = vsel %vm1032, %v1104, %v1106
        %v1108 = vrot.slane %v869, 1
        %v1109 = vrot.slane %v870, 1
        %v1110 = vsel %vm1032, %v1108, %v1109
        %v1111 = vrot.slane %v871, 1
        %v1112 = vsel %vm1032, %v1109, %v1111
        %vm1113 = vcmask 31744
        %v1115 = vsel %vm1113, %v969, 0
        %v1117 = vsel %vm1113, %v1035, 0
        %v1119 = vsel %vm1113, %v1037, 0
        %v1121 = vsel %vm1113, %v1040, 0
        %v1123 = vsel %vm1113, %v1042, 0
        %v1125 = vsel %vm1113, %v1045, 0
        %v1127 = vsel %vm1113, %v1047, 0
        %v1129 = vsel %vm1113, %v1050, 0
        %v1131 = vsel %vm1113, %v1052, 0
        %v1133 = vsel %vm1113, %v1055, 0
        %v1135 = vsel %vm1113, %v1057, 0
        %v1137 = vsel %vm1113, %v1060, 0
        %v1139 = vsel %vm1113, %v1062, 0
        %v1141 = vsel %vm1113, %v1065, 0
        %v1143 = vsel %vm1113, %v1067, 0
        %v1145 = vsel %vm1113, %v1070, 0
        %v1147 = vsel %vm1113, %v1072, 0
        %v1149 = vsel %vm1113, %v1075, 0
        %v1151 = vsel %vm1113, %v1077, 0
        %v1153 = vsel %vm1113, %v1080, 0
        %v1155 = vsel %vm1113, %v1082, 0
        %v1157 = vsel %vm1113, %v1085, 0
        %v1159 = vsel %vm1113, %v1087, 0
        %v1161 = vsel %vm1113, %v1090, 0
        %v1163 = vsel %vm1113, %v1092, 0
        %v1165 = vsel %vm1113, %v1095, 0
        %v1167 = vsel %vm1113, %v1097, 0
        %v1169 = vsel %vm1113, %v1100, 0
        %v1171 = vsel %vm1113, %v1102, 0
        %v1173 = vsel %vm1113, %v1105, 0
        %v1175 = vsel %vm1113, %v1107, 0
        %v1177 = vsel %vm1113, %v1110, 0
        %v1179 = vsel %vm1113, %v1112, 0
        %1181 = vmatprep.subr.mxu0 0.0
        %1182 = vmatpush1.xpose.msra.mxu0 %v1117
        %1183 = vmatprep.subr.mxu0 0.0
        %1184 = vmatpush1.xpose.msra.mxu0 %v1119
        %1185 = vmatprep.subr.mxu0 0.0
        %1186 = vmatpush1.xpose.msra.mxu0 %v1121
        %1187 = vmatprep.subr.mxu0 0.0
        %1188 = vmatpush1.xpose.msra.mxu0 %v1123
        %1189 = vmatprep.subr.mxu0 0.0
        %1190 = vmatpush1.xpose.msra.mxu0 %v1125
        %1191 = vmatprep.subr.mxu0 0.0
        %1192 = vmatpush1.xpose.msra.mxu0 %v1127
        %1193 = vmatprep.subr.mxu0 0.0
        %1194 = vmatpush1.xpose.msra.mxu0 %v1129
        %1195 = vmatprep.subr.mxu0 0.0
        %1196 = vmatpush1.xpose.msra.mxu0 %v1131
        %1197 = vmatprep.subr.mxu0 0.0
        %1198 = vmatpush1.xpose.msra.mxu0 %v1133
        %1199 = vmatprep.subr.mxu0 0.0
        %1200 = vmatpush1.xpose.msra.mxu0 %v1135
        %1201 = vmatprep.subr.mxu0 0.0
        %1202 = vmatpush1.xpose.msra.mxu0 %v1137
        %1203 = vmatprep.subr.mxu0 0.0
        %1204 = vmatpush1.xpose.msra.mxu0 %v1139
        %1205 = vmatprep.subr.mxu0 0.0
        %1206 = vmatpush1.xpose.msra.mxu0 %v1141
        %1207 = vmatprep.subr.mxu0 0.0
        %1208 = vmatpush1.xpose.msra.mxu0 %v1143
        %1209 = vmatprep.subr.mxu0 0.0
        %1210 = vmatpush1.xpose.msra.mxu0 %v1145
        %1211 = vmatprep.subr.mxu0 0.0
        %1212 = vmatpush1.xpose.msra.mxu0 %v1147
        %1213 = vmatprep.subr.mxu0 0.0
        %1214 = vmatpush1.xpose.msra.mxu0 %v1149
        %1215 = vmatprep.subr.mxu0 0.0
        %1216 = vmatpush1.xpose.msra.mxu0 %v1151
        %1217 = vmatprep.subr.mxu0 0.0
        %1218 = vmatpush1.xpose.msra.mxu0 %v1153
        %1219 = vmatprep.subr.mxu0 0.0
        %1220 = vmatpush1.xpose.msra.mxu0 %v1155
        %1221 = vmatprep.subr.mxu0 0.0
        %1222 = vmatpush1.xpose.msra.mxu0 %v1157
        %1223 = vmatprep.subr.mxu0 0.0
        %1224 = vmatpush1.xpose.msra.mxu0 %v1159
        %1225 = vmatprep.subr.mxu0 0.0
        %1226 = vmatpush1.xpose.msra.mxu0 %v1161
        %1227 = vmatprep.subr.mxu0 0.0
        %1228 = vmatpush1.xpose.msra.mxu0 %v1163
        %1229 = vmatprep.subr.mxu0 0.0
        %1230 = vmatpush1.xpose.msra.mxu0 %v1165
        %1231 = vmatprep.subr.mxu0 0.0
        %1232 = vmatpush1.xpose.msra.mxu0 %v1167
        %1233 = vmatprep.subr.mxu0 0.0
        %1234 = vmatpush1.xpose.msra.mxu0 %v1169
        %1235 = vmatprep.subr.mxu0 0.0
        %1236 = vmatpush1.xpose.msra.mxu0 %v1171
        %1237 = vmatprep.subr.mxu0 0.0
        %1238 = vmatpush1.xpose.msra.mxu0 %v1173
        %1239 = vmatprep.subr.mxu0 0.0
        %1240 = vmatpush1.xpose.msra.mxu0 %v1175
        %1241 = vmatprep.subr.mxu0 0.0
        %1242 = vmatpush1.xpose.msra.mxu0 %v1177
        %1243 = vmatprep.subr.mxu0 0.0
        %1244 = vmatpush1.xpose.msra.mxu0 %v1179
        %1245 = vmatprep.mubr.f32.mxu0 0.0
        %1246 = vmatmul.mubr.f32.gmra.mrb[0].mxu0 %v1115
        %v1247 = vpop.f32.mrb[0].mxu0
        %v1248 = vadd.f32 0.0, %v1247
        %v1249 = vpop.f32.mrb[0].mxu0
        %v1250 = vadd.f32 0.0, %v1249
        %1251 = vdwg.mxu0
        %v1253 = vsel %vm1113, %v968, 0
        %v1255 = vsel %vm1113, %v824, 0
        %v1257 = vsel %vm1113, %v825, 0
        %v1259 = vsel %vm1113, %v827, 0
        %v1261 = vsel %vm1113, %v828, 0
        %v1263 = vsel %vm1113, %v830, 0
        %v1265 = vsel %vm1113, %v831, 0
        %v1267 = vsel %vm1113, %v833, 0
        %v1269 = vsel %vm1113, %v834, 0
        %v1271 = vsel %vm1113, %v836, 0
        %v1273 = vsel %vm1113, %v837, 0
        %v1275 = vsel %vm1113, %v839, 0
        %v1277 = vsel %vm1113, %v840, 0
        %v1279 = vsel %vm1113, %v842, 0
        %v1281 = vsel %vm1113, %v843, 0
        %v1283 = vsel %vm1113, %v845, 0
        %v1285 = vsel %vm1113, %v846, 0
        %v1287 = vsel %vm1113, %v848, 0
        %v1289 = vsel %vm1113, %v849, 0
        %v1291 = vsel %vm1113, %v851, 0
        %v1293 = vsel %vm1113, %v852, 0
        %v1295 = vsel %vm1113, %v854, 0
        %v1297 = vsel %vm1113, %v855, 0
        %v1299 = vsel %vm1113, %v857, 0
        %v1301 = vsel %vm1113, %v858, 0
        %v1303 = vsel %vm1113, %v860, 0
        %v1305 = vsel %vm1113, %v861, 0
        %v1307 = vsel %vm1113, %v863, 0
        %v1309 = vsel %vm1113, %v864, 0
        %v1311 = vsel %vm1113, %v866, 0
        %v1313 = vsel %vm1113, %v867, 0
        %v1315 = vsel %vm1113, %v869, 0
        %v1317 = vsel %vm1113, %v870, 0
        %1319 = vmatprep.subr.mxu0 0.0
        %1320 = vmatpush1.xpose.msra.mxu0 %v1255
        %1321 = vmatprep.subr.mxu0 0.0
        %1322 = vmatpush1.xpose.msra.mxu0 %v1257
        %1323 = vmatprep.subr.mxu0 0.0
        %1324 = vmatpush1.xpose.msra.mxu0 %v1259
        %1325 = vmatprep.subr.mxu0 0.0
        %1326 = vmatpush1.xpose.msra.mxu0 %v1261
        %1327 = vmatprep.subr.mxu0 0.0
        %1328 = vmatpush1.xpose.msra.mxu0 %v1263
        %1329 = vmatprep.subr.mxu0 0.0
        %1330 = vmatpush1.xpose.msra.mxu0 %v1265
        %1331 = vmatprep.subr.mxu0 0.0
        %1332 = vmatpush1.xpose.msra.mxu0 %v1267
        %1333 = vmatprep.subr.mxu0 0.0
        %1334 = vmatpush1.xpose.msra.mxu0 %v1269
        %1335 = vmatprep.subr.mxu0 0.0
        %1336 = vmatpush1.xpose.msra.mxu0 %v1271
        %1337 = vmatprep.subr.mxu0 0.0
        %1338 = vmatpush1.xpose.msra.mxu0 %v1273
        %1339 = vmatprep.subr.mxu0 0.0
        %1340 = vmatpush1.xpose.msra.mxu0 %v1275
        %1341 = vmatprep.subr.mxu0 0.0
        %1342 = vmatpush1.xpose.msra.mxu0 %v1277
        %1343 = vmatprep.subr.mxu0 0.0
        %1344 = vmatpush1.xpose.msra.mxu0 %v1279
        %1345 = vmatprep.subr.mxu0 0.0
        %1346 = vmatpush1.xpose.msra.mxu0 %v1281
        %1347 = vmatprep.subr.mxu0 0.0
        %1348 = vmatpush1.xpose.msra.mxu0 %v1283
        %1349 = vmatprep.subr.mxu0 0.0
        %1350 = vmatpush1.xpose.msra.mxu0 %v1285
        %1351 = vmatprep.subr.mxu0 0.0
        %1352 = vmatpush1.xpose.msra.mxu0 %v1287
        %1353 = vmatprep.subr.mxu0 0.0
        %1354 = vmatpush1.xpose.msra.mxu0 %v1289
        %1355 = vmatprep.subr.mxu0 0.0
        %1356 = vmatpush1.xpose.msra.mxu0 %v1291
        %1357 = vmatprep.subr.mxu0 0.0
        %1358 = vmatpush1.xpose.msra.mxu0 %v1293
        %1359 = vmatprep.subr.mxu0 0.0
        %1360 = vmatpush1.xpose.msra.mxu0 %v1295
        %1361 = vmatprep.subr.mxu0 0.0
        %1362 = vmatpush1.xpose.msra.mxu0 %v1297
        %1363 = vmatprep.subr.mxu0 0.0
        %1364 = vmatpush1.xpose.msra.mxu0 %v1299
        %1365 = vmatprep.subr.mxu0 0.0
        %1366 = vmatpush1.xpose.msra.mxu0 %v1301
        %1367 = vmatprep.subr.mxu0 0.0
        %1368 = vmatpush1.xpose.msra.mxu0 %v1303
        %1369 = vmatprep.subr.mxu0 0.0
        %1370 = vmatpush1.xpose.msra.mxu0 %v1305
        %1371 = vmatprep.subr.mxu0 0.0
        %1372 = vmatpush1.xpose.msra.mxu0 %v1307
        %1373 = vmatprep.subr.mxu0 0.0
        %1374 = vmatpush1.xpose.msra.mxu0 %v1309
        %1375 = vmatprep.subr.mxu0 0.0
        %1376 = vmatpush1.xpose.msra.mxu0 %v1311
        %1377 = vmatprep.subr.mxu0 0.0
        %1378 = vmatpush1.xpose.msra.mxu0 %v1313
        %1379 = vmatprep.subr.mxu0 0.0
        %1380 = vmatpush1.xpose.msra.mxu0 %v1315
        %1381 = vmatprep.subr.mxu0 0.0
        %1382 = vmatpush1.xpose.msra.mxu0 %v1317
        %1383 = vmatprep.mubr.f32.mxu0 0.0
        %1384 = vmatmul.mubr.f32.gmra.mrb[0].mxu0 %v1253
        %v1385 = vpop.f32.mrb[0].mxu0
        %v1386 = vadd.f32 %v1248, %v1385
        %v1387 = vpop.f32.mrb[0].mxu0
        %v1388 = vadd.f32 %v1250, %v1387
        %1389 = vdwg.mxu0
        %v1391 = vsel %vm1113, %v970, 0
        %v1394 = vsel %vm1113, %v872, 0
        %v1397 = vsel %vm1113, %v873, 0
        %v1400 = vsel %vm1113, %v875, 0
        %v1403 = vsel %vm1113, %v876, 0
        %v1406 = vsel %vm1113, %v878, 0
        %v1409 = vsel %vm1113, %v879, 0
        %v1412 = vsel %vm1113, %v881, 0
        %v1415 = vsel %vm1113, %v882, 0
        %v1418 = vsel %vm1113, %v884, 0
        %v1421 = vsel %vm1113, %v885, 0
        %v1424 = vsel %vm1113, %v887, 0
        %v1427 = vsel %vm1113, %v888, 0
        %v1430 = vsel %vm1113, %v890, 0
        %v1433 = vsel %vm1113, %v891, 0
        %v1436 = vsel %vm1113, %v893, 0
        %v1439 = vsel %vm1113, %v894, 0
        %v1442 = vsel %vm1113, %v896, 0
        %v1445 = vsel %vm1113, %v897, 0
        %v1448 = vsel %vm1113, %v899, 0
        %v1451 = vsel %vm1113, %v900, 0
        %v1454 = vsel %vm1113, %v902, 0
        %v1457 = vsel %vm1113, %v903, 0
        %v1460 = vsel %vm1113, %v905, 0
        %v1463 = vsel %vm1113, %v906, 0
        %v1466 = vsel %vm1113, %v908, 0
        %v1469 = vsel %vm1113, %v909, 0
        %v1472 = vsel %vm1113, %v911, 0
        %v1475 = vsel %vm1113, %v912, 0
        %v1478 = vsel %vm1113, %v914, 0
        %v1481 = vsel %vm1113, %v915, 0
        %v1484 = vsel %vm1113, %v917, 0
        %v1487 = vsel %vm1113, %v918, 0
        %1489 = vmatprep.subr.mxu0 0.0
        %1490 = vmatpush1.xpose.msra.mxu0 %v1394
        %1491 = vmatprep.subr.mxu0 0.0
        %1492 = vmatpush1.xpose.msra.mxu0 %v1397
        %1493 = vmatprep.subr.mxu0 0.0
        %1494 = vmatpush1.xpose.msra.mxu0 %v1400
        %1495 = vmatprep.subr.mxu0 0.0
        %1496 = vmatpush1.xpose.msra.mxu0 %v1403
        %1497 = vmatprep.subr.mxu0 0.0
        %1498 = vmatpush1.xpose.msra.mxu0 %v1406
        %1499 = vmatprep.subr.mxu0 0.0
        %1500 = vmatpush1.xpose.msra.mxu0 %v1409
        %1501 = vmatprep.subr.mxu0 0.0
        %1502 = vmatpush1.xpose.msra.mxu0 %v1412
        %1503 = vmatprep.subr.mxu0 0.0
        %1504 = vmatpush1.xpose.msra.mxu0 %v1415
        %1505 = vmatprep.subr.mxu0 0.0
        %1506 = vmatpush1.xpose.msra.mxu0 %v1418
        %1507 = vmatprep.subr.mxu0 0.0
        %1508 = vmatpush1.xpose.msra.mxu0 %v1421
        %1509 = vmatprep.subr.mxu0 0.0
        %1510 = vmatpush1.xpose.msra.mxu0 %v1424
        %1511 = vmatprep.subr.mxu0 0.0
        %1512 = vmatpush1.xpose.msra.mxu0 %v1427
        %1513 = vmatprep.subr.mxu0 0.0
        %1514 = vmatpush1.xpose.msra.mxu0 %v1430
        %1515 = vmatprep.subr.mxu0 0.0
        %1516 = vmatpush1.xpose.msra.mxu0 %v1433
        %1517 = vmatprep.subr.mxu0 0.0
        %1518 = vmatpush1.xpose.msra.mxu0 %v1436
        %1519 = vmatprep.subr.mxu0 0.0
        %1520 = vmatpush1.xpose.msra.mxu0 %v1439
        %1521 = vmatprep.subr.mxu0 0.0
        %1522 = vmatpush1.xpose.msra.mxu0 %v1442
        %1523 = vmatprep.subr.mxu0 0.0
        %1524 = vmatpush1.xpose.msra.mxu0 %v1445
        %1525 = vmatprep.subr.mxu0 0.0
        %1526 = vmatpush1.xpose.msra.mxu0 %v1448
        %1527 = vmatprep.subr.mxu0 0.0
        %1528 = vmatpush1.xpose.msra.mxu0 %v1451
        %1529 = vmatprep.subr.mxu0 0.0
        %1530 = vmatpush1.xpose.msra.mxu0 %v1454
        %1531 = vmatprep.subr.mxu0 0.0
        %1532 = vmatpush1.xpose.msra.mxu0 %v1457
        %1533 = vmatprep.subr.mxu0 0.0
        %1534 = vmatpush1.xpose.msra.mxu0 %v1460
        %1535 = vmatprep.subr.mxu0 0.0
        %1536 = vmatpush1.xpose.msra.mxu0 %v1463
        %1537 = vmatprep.subr.mxu0 0.0
        %1538 = vmatpush1.xpose.msra.mxu0 %v1466
        %1539 = vmatprep.subr.mxu0 0.0
        %1540 = vmatpush1.xpose.msra.mxu0 %v1469
        %1541 = vmatprep.subr.mxu0 0.0
        %1542 = vmatpush1.xpose.msra.mxu0 %v1472
        %1543 = vmatprep.subr.mxu0 0.0
        %1544 = vmatpush1.xpose.msra.mxu0 %v1475
        %1545 = vmatprep.subr.mxu0 0.0
        %1546 = vmatpush1.xpose.msra.mxu0 %v1478
        %1547 = vmatprep.subr.mxu0 0.0
        %1548 = vmatpush1.xpose.msra.mxu0 %v1481
        %1549 = vmatprep.subr.mxu0 0.0
        %1550 = vmatpush1.xpose.msra.mxu0 %v1484
        %1551 = vmatprep.subr.mxu0 0.0
        %1552 = vmatpush1.xpose.msra.mxu0 %v1487
        %1553 = vmatprep.mubr.f32.mxu0 0.0
        %1554 = vmatmul.mubr.f32.gmra.mrb[0].mxu0 %v1391
        %v1555 = vpop.f32.mrb[0].mxu0
        %v1556 = vadd.f32 0.0, %v1555
        %v1557 = vpop.f32.mrb[0].mxu0
        %v1558 = vadd.f32 0.0, %v1557
        %1559 = vdwg.mxu0
        %v1560 = vadd.f32 %v1386, %v1556
        %v1561 = vadd.f32 %v1388, %v1558
        %v1578 = vrot.slane %v872, 1
        %v1579 = vrot.slane %v873, 1
        %v1580 = vsel %vm1032, %v1578, %v1579
        %v1581 = vrot.slane %v874, 1
        %v1582 = vsel %vm1032, %v1579, %v1581
        %v1583 = vrot.slane %v875, 1
        %v1584 = vrot.slane %v876, 1
        %v1585 = vsel %vm1032, %v1583, %v1584
        %v1586 = vrot.slane %v877, 1
        %v1587 = vsel %vm1032, %v1584, %v1586
        %v1588 = vrot.slane %v878, 1
        %v1589 = vrot.slane %v879, 1
        %v1590 = vsel %vm1032, %v1588, %v1589
        %v1591 = vrot.slane %v880, 1
        %v1592 = vsel %vm1032, %v1589, %v1591
        %v1593 = vrot.slane %v881, 1
        %v1594 = vrot.slane %v882, 1
        %v1595 = vsel %vm1032, %v1593, %v1594
        %v1596 = vrot.slane %v883, 1
        %v1597 = vsel %vm1032, %v1594, %v1596
        %v1598 = vrot.slane %v884, 1
        %v1599 = vrot.slane %v885, 1
        %v1600 = vsel %vm1032, %v1598, %v1599
        %v1601 = vrot.slane %v886, 1
        %v1602 = vsel %vm1032, %v1599, %v1601
        %v1603 = vrot.slane %v887, 1
        %v1604 = vrot.slane %v888, 1
        %v1605 = vsel %vm1032, %v1603, %v1604
        %v1606 = vrot.slane %v889, 1
        %v1607 = vsel %vm1032, %v1604, %v1606
        %v1608 = vrot.slane %v890, 1
        %v1609 = vrot.slane %v891, 1
        %v1610 = vsel %vm1032, %v1608, %v1609
        %v1611 = vrot.slane %v892, 1
        %v1612 = vsel %vm1032, %v1609, %v1611
        %v1613 = vrot.slane %v893, 1
        %v1614 = vrot.slane %v894, 1
        %v1615 = vsel %vm1032, %v1613, %v1614
        %v1616 = vrot.slane %v895, 1
        %v1617 = vsel %vm1032, %v1614, %v1616
        %v1618 = vrot.slane %v896, 1
        %v1619 = vrot.slane %v897, 1
        %v1620 = vsel %vm1032, %v1618, %v1619
        %v1621 = vrot.slane %v898, 1
        %v1622 = vsel %vm1032, %v1619, %v1621
        %v1623 = vrot.slane %v899, 1
        %v1624 = vrot.slane %v900, 1
        %v1625 = vsel %vm1032, %v1623, %v1624
        %v1626 = vrot.slane %v901, 1
        %v1627 = vsel %vm1032, %v1624, %v1626
        %v1628 = vrot.slane %v902, 1
        %v1629 = vrot.slane %v903, 1
        %v1630 = vsel %vm1032, %v1628, %v1629
        %v1631 = vrot.slane %v904, 1
        %v1632 = vsel %vm1032, %v1629, %v1631
        %v1633 = vrot.slane %v905, 1
        %v1634 = vrot.slane %v906, 1
        %v1635 = vsel %vm1032, %v1633, %v1634
        %v1636 = vrot.slane %v907, 1
        %v1637 = vsel %vm1032, %v1634, %v1636
        %v1638 = vrot.slane %v908, 1
        %v1639 = vrot.slane %v909, 1
        %v1640 = vsel %vm1032, %v1638, %v1639
        %v1641 = vrot.slane %v910, 1
        %v1642 = vsel %vm1032, %v1639, %v1641
        %v1643 = vrot.slane %v911, 1
        %v1644 = vrot.slane %v912, 1
        %v1645 = vsel %vm1032, %v1643, %v1644
        %v1646 = vrot.slane %v913, 1
        %v1647 = vsel %vm1032, %v1644, %v1646
        %v1648 = vrot.slane %v914, 1
        %v1649 = vrot.slane %v915, 1
        %v1650 = vsel %vm1032, %v1648, %v1649
        %v1651 = vrot.slane %v916, 1
        %v1652 = vsel %vm1032, %v1649, %v1651
        %v1653 = vrot.slane %v917, 1
        %v1654 = vrot.slane %v918, 1
        %v1655 = vsel %vm1032, %v1653, %v1654
        %v1656 = vrot.slane %v919, 1
        %v1657 = vsel %vm1032, %v1654, %v1656
        %v1659 = vsel %vm1113, %v971, 0
        %v1661 = vsel %vm1113, %v1580, 0
        %v1663 = vsel %vm1113, %v1582, 0
        %v1665 = vsel %vm1113, %v1585, 0
        %v1667 = vsel %vm1113, %v1587, 0
        %v1669 = vsel %vm1113, %v1590, 0
        %v1671 = vsel %vm1113, %v1592, 0
        %v1673 = vsel %vm1113, %v1595, 0
        %v1675 = vsel %vm1113, %v1597, 0
        %v1677 = vsel %vm1113, %v1600, 0
        %v1679 = vsel %vm1113, %v1602, 0
        %v1681 = vsel %vm1113, %v1605, 0
        %v1683 = vsel %vm1113, %v1607, 0
        %v1685 = vsel %vm1113, %v1610, 0
        %v1687 = vsel %vm1113, %v1612, 0
        %v1689 = vsel %vm1113, %v1615, 0
        %v1691 = vsel %vm1113, %v1617, 0
        %v1693 = vsel %vm1113, %v1620, 0
        %v1695 = vsel %vm1113, %v1622, 0
        %v1697 = vsel %vm1113, %v1625, 0
        %v1699 = vsel %vm1113, %v1627, 0
        %v1701 = vsel %vm1113, %v1630, 0
        %v1703 = vsel %vm1113, %v1632, 0
        %v1705 = vsel %vm1113, %v1635, 0
        %v1707 = vsel %vm1113, %v1637, 0
        %v1709 = vsel %vm1113, %v1640, 0
        %v1711 = vsel %vm1113, %v1642, 0
        %v1713 = vsel %vm1113, %v1645, 0
        %v1715 = vsel %vm1113, %v1647, 0
        %v1717 = vsel %vm1113, %v1650, 0
        %v1719 = vsel %vm1113, %v1652, 0
        %v1721 = vsel %vm1113, %v1655, 0
        %v1723 = vsel %vm1113, %v1657, 0
        %1725 = vmatprep.subr.mxu0 0.0
        %1726 = vmatpush1.xpose.msra.mxu0 %v1661
        %1727 = vmatprep.subr.mxu0 0.0
        %1728 = vmatpush1.xpose.msra.mxu0 %v1663
        %1729 = vmatprep.subr.mxu0 0.0
        %1730 = vmatpush1.xpose.msra.mxu0 %v1665
        %1731 = vmatprep.subr.mxu0 0.0
        %1732 = vmatpush1.xpose.msra.mxu0 %v1667
        %1733 = vmatprep.subr.mxu0 0.0
        %1734 = vmatpush1.xpose.msra.mxu0 %v1669
        %1735 = vmatprep.subr.mxu0 0.0
        %1736 = vmatpush1.xpose.msra.mxu0 %v1671
        %1737 = vmatprep.subr.mxu0 0.0
        %1738 = vmatpush1.xpose.msra.mxu0 %v1673
        %1739 = vmatprep.subr.mxu0 0.0
        %1740 = vmatpush1.xpose.msra.mxu0 %v1675
        %1741 = vmatprep.subr.mxu0 0.0
        %1742 = vmatpush1.xpose.msra.mxu0 %v1677
        %1743 = vmatprep.subr.mxu0 0.0
        %1744 = vmatpush1.xpose.msra.mxu0 %v1679
        %1745 = vmatprep.subr.mxu0 0.0
        %1746 = vmatpush1.xpose.msra.mxu0 %v1681
        %1747 = vmatprep.subr.mxu0 0.0
        %1748 = vmatpush1.xpose.msra.mxu0 %v1683
        %1749 = vmatprep.subr.mxu0 0.0
        %1750 = vmatpush1.xpose.msra.mxu0 %v1685
        %1751 = vmatprep.subr.mxu0 0.0
        %1752 = vmatpush1.xpose.msra.mxu0 %v1687
        %1753 = vmatprep.subr.mxu0 0.0
        %1754 = vmatpush1.xpose.msra.mxu0 %v1689
        %1755 = vmatprep.subr.mxu0 0.0
        %1756 = vmatpush1.xpose.msra.mxu0 %v1691
        %1757 = vmatprep.subr.mxu0 0.0
        %1758 = vmatpush1.xpose.msra.mxu0 %v1693
        %1759 = vmatprep.subr.mxu0 0.0
        %1760 = vmatpush1.xpose.msra.mxu0 %v1695
        %1761 = vmatprep.subr.mxu0 0.0
        %1762 = vmatpush1.xpose.msra.mxu0 %v1697
        %1763 = vmatprep.subr.mxu0 0.0
        %1764 = vmatpush1.xpose.msra.mxu0 %v1699
        %1765 = vmatprep.subr.mxu0 0.0
        %1766 = vmatpush1.xpose.msra.mxu0 %v1701
        %1767 = vmatprep.subr.mxu0 0.0
        %1768 = vmatpush1.xpose.msra.mxu0 %v1703
        %1769 = vmatprep.subr.mxu0 0.0
        %1770 = vmatpush1.xpose.msra.mxu0 %v1705
        %1771 = vmatprep.subr.mxu0 0.0
        %1772 = vmatpush1.xpose.msra.mxu0 %v1707
        %1773 = vmatprep.subr.mxu0 0.0
        %1774 = vmatpush1.xpose.msra.mxu0 %v1709
        %1775 = vmatprep.subr.mxu0 0.0
        %1776 = vmatpush1.xpose.msra.mxu0 %v1711
        %1777 = vmatprep.subr.mxu0 0.0
        %1778 = vmatpush1.xpose.msra.mxu0 %v1713
        %1779 = vmatprep.subr.mxu0 0.0
        %1780 = vmatpush1.xpose.msra.mxu0 %v1715
        %1781 = vmatprep.subr.mxu0 0.0
        %1782 = vmatpush1.xpose.msra.mxu0 %v1717
        %1783 = vmatprep.subr.mxu0 0.0
        %1784 = vmatpush1.xpose.msra.mxu0 %v1719
        %1785 = vmatprep.subr.mxu0 0.0
        %1786 = vmatpush1.xpose.msra.mxu0 %v1721
        %1787 = vmatprep.subr.mxu0 0.0
        %1788 = vmatpush1.xpose.msra.mxu0 %v1723
        %1789 = vmatprep.mubr.f32.mxu0 0.0
        %1790 = vmatmul.mubr.f32.gmra.mrb[0].mxu0 %v1659
        %v1791 = vpop.f32.mrb[0].mxu0
        %v1792 = vadd.f32 0.0, %v1791
        %v1793 = vpop.f32.mrb[0].mxu0
        %v1794 = vadd.f32 0.0, %v1793
        %1795 = vdwg.mxu0
        %v1796 = vadd.f32 %v1560, %v1792
        %v1797 = vadd.f32 %v1561, %v1794
        %vm1798 = vcmask 1045504
        %v1799 = vrot.slane %v824, 2
        %v1800 = vrot.slane %v825, 2
        %v1801 = vsel %vm1798, %v1799, %v1800
        %v1802 = vrot.slane %v826, 2
        %v1803 = vsel %vm1798, %v1800, %v1802
        %v1804 = vrot.slane %v827, 2
        %v1805 = vrot.slane %v828, 2
        %v1806 = vsel %vm1798, %v1804, %v1805
        %v1807 = vrot.slane %v829, 2
        %v1808 = vsel %vm1798, %v1805, %v1807
        %v1809 = vrot.slane %v830, 2
        %v1810 = vrot.slane %v831, 2
        %v1811 = vsel %vm1798, %v1809, %v1810
        %v1812 = vrot.slane %v832, 2
        %v1813 = vsel %vm1798, %v1810, %v1812
        %v1814 = vrot.slane %v833, 2
        %v1815 = vrot.slane %v834, 2
        %v1816 = vsel %vm1798, %v1814, %v1815
        %v1817 = vrot.slane %v835, 2
        %v1818 = vsel %vm1798, %v1815, %v1817
        %v1819 = vrot.slane %v836, 2
        %v1820 = vrot.slane %v837, 2
        %v1821 = vsel %vm1798, %v1819, %v1820
        %v1822 = vrot.slane %v838, 2
        %v1823 = vsel %vm1798, %v1820, %v1822
        %v1824 = vrot.slane %v839, 2
        %v1825 = vrot.slane %v840, 2
        %v1826 = vsel %vm1798, %v1824, %v1825
        %v1827 = vrot.slane %v841, 2
        %v1828 = vsel %vm1798, %v1825, %v1827
        %v1829 = vrot.slane %v842, 2
        %v1830 = vrot.slane %v843, 2
        %v1831 = vsel %vm1798, %v1829, %v1830
        %v1832 = vrot.slane %v844, 2
        %v1833 = vsel %vm1798, %v1830, %v1832
        %v1834 = vrot.slane %v845, 2
        %v1835 = vrot.slane %v846, 2
        %v1836 = vsel %vm1798, %v1834, %v1835
        %v1837 = vrot.slane %v847, 2
        %v1838 = vsel %vm1798, %v1835, %v1837
        %v1839 = vrot.slane %v848, 2
        %v1840 = vrot.slane %v849, 2
        %v1841 = vsel %vm1798, %v1839, %v1840
        %v1842 = vrot.slane %v850, 2
        %v1843 = vsel %vm1798, %v1840, %v1842
        %v1844 = vrot.slane %v851, 2
        %v1845 = vrot.slane %v852, 2
        %v1846 = vsel %vm1798, %v1844, %v1845
        %v1847 = vrot.slane %v853, 2
        %v1848 = vsel %vm1798, %v1845, %v1847
        %v1849 = vrot.slane %v854, 2
        %v1850 = vrot.slane %v855, 2
        %v1851 = vsel %vm1798, %v1849, %v1850
        %v1852 = vrot.slane %v856, 2
        %v1853 = vsel %vm1798, %v1850, %v1852
        %v1854 = vrot.slane %v857, 2
        %v1855 = vrot.slane %v858, 2
        %v1856 = vsel %vm1798, %v1854, %v1855
        %v1857 = vrot.slane %v859, 2
        %v1858 = vsel %vm1798, %v1855, %v1857
        %v1859 = vrot.slane %v860, 2
        %v1860 = vrot.slane %v861, 2
        %v1861 = vsel %vm1798, %v1859, %v1860
        %v1862 = vrot.slane %v862, 2
        %v1863 = vsel %vm1798, %v1860, %v1862
        %v1864 = vrot.slane %v863, 2
        %v1865 = vrot.slane %v864, 2
        %v1866 = vsel %vm1798, %v1864, %v1865
        %v1867 = vrot.slane %v865, 2
        %v1868 = vsel %vm1798, %v1865, %v1867
        %v1869 = vrot.slane %v866, 2
        %v1870 = vrot.slane %v867, 2
        %v1871 = vsel %vm1798, %v1869, %v1870
        %v1872 = vrot.slane %v868, 2
        %v1873 = vsel %vm1798, %v1870, %v1872
        %v1874 = vrot.slane %v869, 2
        %v1875 = vrot.slane %v870, 2
        %v1876 = vsel %vm1798, %v1874, %v1875
        %v1877 = vrot.slane %v871, 2
        %v1878 = vsel %vm1798, %v1875, %v1877
        %v1880 = vsel %vm1113, %v973, 0
        %v1882 = vsel %vm1113, %v1801, 0
        %v1884 = vsel %vm1113, %v1803, 0
        %v1886 = vsel %vm1113, %v1806, 0
        %v1888 = vsel %vm1113, %v1808, 0
        %v1890 = vsel %vm1113, %v1811, 0
        %v1892 = vsel %vm1113, %v1813, 0
        %v1894 = vsel %vm1113, %v1816, 0
        %v1896 = vsel %vm1113, %v1818, 0
        %v1898 = vsel %vm1113, %v1821, 0
        %v1900 = vsel %vm1113, %v1823, 0
        %v1902 = vsel %vm1113, %v1826, 0
        %v1904 = vsel %vm1113, %v1828, 0
        %v1906 = vsel %vm1113, %v1831, 0
        %v1908 = vsel %vm1113, %v1833, 0
        %v1910 = vsel %vm1113, %v1836, 0
        %v1912 = vsel %vm1113, %v1838, 0
        %v1914 = vsel %vm1113, %v1841, 0
        %v1916 = vsel %vm1113, %v1843, 0
        %v1918 = vsel %vm1113, %v1846, 0
        %v1920 = vsel %vm1113, %v1848, 0
        %v1922 = vsel %vm1113, %v1851, 0
        %v1924 = vsel %vm1113, %v1853, 0
        %v1926 = vsel %vm1113, %v1856, 0
        %v1928 = vsel %vm1113, %v1858, 0
        %v1930 = vsel %vm1113, %v1861, 0
        %v1932 = vsel %vm1113, %v1863, 0
        %v1934 = vsel %vm1113, %v1866, 0
        %v1936 = vsel %vm1113, %v1868, 0
        %v1938 = vsel %vm1113, %v1871, 0
        %v1940 = vsel %vm1113, %v1873, 0
        %v1942 = vsel %vm1113, %v1876, 0
        %v1944 = vsel %vm1113, %v1878, 0
        %1946 = vmatprep.subr.mxu0 0.0
        %1947 = vmatpush1.xpose.msra.mxu0 %v1882
        %1948 = vmatprep.subr.mxu0 0.0
        %1949 = vmatpush1.xpose.msra.mxu0 %v1884
        %1950 = vmatprep.subr.mxu0 0.0
        %1951 = vmatpush1.xpose.msra.mxu0 %v1886
        %1952 = vmatprep.subr.mxu0 0.0
        %1953 = vmatpush1.xpose.msra.mxu0 %v1888
        %1954 = vmatprep.subr.mxu0 0.0
        %1955 = vmatpush1.xpose.msra.mxu0 %v1890
        %1956 = vmatprep.subr.mxu0 0.0
        %1957 = vmatpush1.xpose.msra.mxu0 %v1892
        %1958 = vmatprep.subr.mxu0 0.0
        %1959 = vmatpush1.xpose.msra.mxu0 %v1894
        %1960 = vmatprep.subr.mxu0 0.0
        %1961 = vmatpush1.xpose.msra.mxu0 %v1896
        %1962 = vmatprep.subr.mxu0 0.0
        %1963 = vmatpush1.xpose.msra.mxu0 %v1898
        %1964 = vmatprep.subr.mxu0 0.0
        %1965 = vmatpush1.xpose.msra.mxu0 %v1900
        %1966 = vmatprep.subr.mxu0 0.0
        %1967 = vmatpush1.xpose.msra.mxu0 %v1902
        %1968 = vmatprep.subr.mxu0 0.0
        %1969 = vmatpush1.xpose.msra.mxu0 %v1904
        %1970 = vmatprep.subr.mxu0 0.0
        %1971 = vmatpush1.xpose.msra.mxu0 %v1906
        %1972 = vmatprep.subr.mxu0 0.0
        %1973 = vmatpush1.xpose.msra.mxu0 %v1908
        %1974 = vmatprep.subr.mxu0 0.0
        %1975 = vmatpush1.xpose.msra.mxu0 %v1910
        %1976 = vmatprep.subr.mxu0 0.0
        %1977 = vmatpush1.xpose.msra.mxu0 %v1912
        %1978 = vmatprep.subr.mxu0 0.0
        %1979 = vmatpush1.xpose.msra.mxu0 %v1914
        %1980 = vmatprep.subr.mxu0 0.0
        %1981 = vmatpush1.xpose.msra.mxu0 %v1916
        %1982 = vmatprep.subr.mxu0 0.0
        %1983 = vmatpush1.xpose.msra.mxu0 %v1918
        %1984 = vmatprep.subr.mxu0 0.0
        %1985 = vmatpush1.xpose.msra.mxu0 %v1920
        %1986 = vmatprep.subr.mxu0 0.0
        %1987 = vmatpush1.xpose.msra.mxu0 %v1922
        %1988 = vmatprep.subr.mxu0 0.0
        %1989 = vmatpush1.xpose.msra.mxu0 %v1924
        %1990 = vmatprep.subr.mxu0 0.0
        %1991 = vmatpush1.xpose.msra.mxu0 %v1926
        %1992 = vmatprep.subr.mxu0 0.0
        %1993 = vmatpush1.xpose.msra.mxu0 %v1928
        %1994 = vmatprep.subr.mxu0 0.0
        %1995 = vmatpush1.xpose.msra.mxu0 %v1930
        %1996 = vmatprep.subr.mxu0 0.0
        %1997 = vmatpush1.xpose.msra.mxu0 %v1932
        %1998 = vmatprep.subr.mxu0 0.0
        %1999 = vmatpush1.xpose.msra.mxu0 %v1934
        %2000 = vmatprep.subr.mxu0 0.0
        %2001 = vmatpush1.xpose.msra.mxu0 %v1936
        %2002 = vmatprep.subr.mxu0 0.0
        %2003 = vmatpush1.xpose.msra.mxu0 %v1938
        %2004 = vmatprep.subr.mxu0 0.0
        %2005 = vmatpush1.xpose.msra.mxu0 %v1940
        %2006 = vmatprep.subr.mxu0 0.0
        %2007 = vmatpush1.xpose.msra.mxu0 %v1942
        %2008 = vmatprep.subr.mxu0 0.0
        %2009 = vmatpush1.xpose.msra.mxu0 %v1944
        %2010 = vmatprep.mubr.f32.mxu0 0.0
        %2011 = vmatmul.mubr.f32.gmra.mrb[0].mxu0 %v1880
        %v2012 = vpop.f32.mrb[0].mxu0
        %v2013 = vadd.f32 0.0, %v2012
        %v2014 = vpop.f32.mrb[0].mxu0
        %v2015 = vadd.f32 0.0, %v2014
        %2016 = vdwg.mxu0
        %v2018 = vsel %vm1113, %v972, 0
        %2020 = vmatprep.subr.mxu0 0.0
        %2021 = vmatpush1.xpose.msra.mxu0 %v1117
        %2022 = vmatprep.subr.mxu0 0.0
        %2023 = vmatpush1.xpose.msra.mxu0 %v1119
        %2024 = vmatprep.subr.mxu0 0.0
        %2025 = vmatpush1.xpose.msra.mxu0 %v1121
        %2026 = vmatprep.subr.mxu0 0.0
        %2027 = vmatpush1.xpose.msra.mxu0 %v1123
        %2028 = vmatprep.subr.mxu0 0.0
        %2029 = vmatpush1.xpose.msra.mxu0 %v1125
        %2030 = vmatprep.subr.mxu0 0.0
        %2031 = vmatpush1.xpose.msra.mxu0 %v1127
        %2032 = vmatprep.subr.mxu0 0.0
        %2033 = vmatpush1.xpose.msra.mxu0 %v1129
        %2034 = vmatprep.subr.mxu0 0.0
        %2035 = vmatpush1.xpose.msra.mxu0 %v1131
        %2036 = vmatprep.subr.mxu0 0.0
        %2037 = vmatpush1.xpose.msra.mxu0 %v1133
        %2038 = vmatprep.subr.mxu0 0.0
        %2039 = vmatpush1.xpose.msra.mxu0 %v1135
        %2040 = vmatprep.subr.mxu0 0.0
        %2041 = vmatpush1.xpose.msra.mxu0 %v1137
        %2042 = vmatprep.subr.mxu0 0.0
        %2043 = vmatpush1.xpose.msra.mxu0 %v1139
        %2044 = vmatprep.subr.mxu0 0.0
        %2045 = vmatpush1.xpose.msra.mxu0 %v1141
        %2046 = vmatprep.subr.mxu0 0.0
        %2047 = vmatpush1.xpose.msra.mxu0 %v1143
        %2048 = vmatprep.subr.mxu0 0.0
        %2049 = vmatpush1.xpose.msra.mxu0 %v1145
        %2050 = vmatprep.subr.mxu0 0.0
        %2051 = vmatpush1.xpose.msra.mxu0 %v1147
        %2052 = vmatprep.subr.mxu0 0.0
        %2053 = vmatpush1.xpose.msra.mxu0 %v1149
        %2054 = vmatprep.subr.mxu0 0.0
        %2055 = vmatpush1.xpose.msra.mxu0 %v1151
        %2056 = vmatprep.subr.mxu0 0.0
        %2057 = vmatpush1.xpose.msra.mxu0 %v1153
        %2058 = vmatprep.subr.mxu0 0.0
        %2059 = vmatpush1.xpose.msra.mxu0 %v1155
        %2060 = vmatprep.subr.mxu0 0.0
        %2061 = vmatpush1.xpose.msra.mxu0 %v1157
        %2062 = vmatprep.subr.mxu0 0.0
        %2063 = vmatpush1.xpose.msra.mxu0 %v1159
        %2064 = vmatprep.subr.mxu0 0.0
        %2065 = vmatpush1.xpose.msra.mxu0 %v1161
        %2066 = vmatprep.subr.mxu0 0.0
        %2067 = vmatpush1.xpose.msra.mxu0 %v1163
        %2068 = vmatprep.subr.mxu0 0.0
        %2069 = vmatpush1.xpose.msra.mxu0 %v1165
        %2070 = vmatprep.subr.mxu0 0.0
        %2071 = vmatpush1.xpose.msra.mxu0 %v1167
        %2072 = vmatprep.subr.mxu0 0.0
        %2073 = vmatpush1.xpose.msra.mxu0 %v1169
        %2074 = vmatprep.subr.mxu0 0.0
        %2075 = vmatpush1.xpose.msra.mxu0 %v1171
        %2076 = vmatprep.subr.mxu0 0.0
        %2077 = vmatpush1.xpose.msra.mxu0 %v1173
        %2078 = vmatprep.subr.mxu0 0.0
        %2079 = vmatpush1.xpose.msra.mxu0 %v1175
        %2080 = vmatprep.subr.mxu0 0.0
        %2081 = vmatpush1.xpose.msra.mxu0 %v1177
        %2082 = vmatprep.subr.mxu0 0.0
        %2083 = vmatpush1.xpose.msra.mxu0 %v1179
        %2084 = vmatprep.mubr.f32.mxu0 0.0
        %2085 = vmatmul.mubr.f32.gmra.mrb[0].mxu0 %v2018
        %v2086 = vpop.f32.mrb[0].mxu0
        %v2087 = vadd.f32 %v2013, %v2086
        %v2088 = vpop.f32.mrb[0].mxu0
        %v2089 = vadd.f32 %v2015, %v2088
        %2090 = vdwg.mxu0
        %v2092 = vsel %vm1113, %v974, 0
        %2094 = vmatprep.subr.mxu0 0.0
        %2095 = vmatpush1.xpose.msra.mxu0 %v1661
        %2096 = vmatprep.subr.mxu0 0.0
        %2097 = vmatpush1.xpose.msra.mxu0 %v1663
        %2098 = vmatprep.subr.mxu0 0.0
        %2099 = vmatpush1.xpose.msra.mxu0 %v1665
        %2100 = vmatprep.subr.mxu0 0.0
        %2101 = vmatpush1.xpose.msra.mxu0 %v1667
        %2102 = vmatprep.subr.mxu0 0.0
        %2103 = vmatpush1.xpose.msra.mxu0 %v1669
        %2104 = vmatprep.subr.mxu0 0.0
        %2105 = vmatpush1.xpose.msra.mxu0 %v1671
        %2106 = vmatprep.subr.mxu0 0.0
        %2107 = vmatpush1.xpose.msra.mxu0 %v1673
        %2108 = vmatprep.subr.mxu0 0.0
        %2109 = vmatpush1.xpose.msra.mxu0 %v1675
        %2110 = vmatprep.subr.mxu0 0.0
        %2111 = vmatpush1.xpose.msra.mxu0 %v1677
        %2112 = vmatprep.subr.mxu0 0.0
        %2113 = vmatpush1.xpose.msra.mxu0 %v1679
        %2114 = vmatprep.subr.mxu0 0.0
        %2115 = vmatpush1.xpose.msra.mxu0 %v1681
        %2116 = vmatprep.subr.mxu0 0.0
        %2117 = vmatpush1.xpose.msra.mxu0 %v1683
        %2118 = vmatprep.subr.mxu0 0.0
        %2119 = vmatpush1.xpose.msra.mxu0 %v1685
        %2120 = vmatprep.subr.mxu0 0.0
        %2121 = vmatpush1.xpose.msra.mxu0 %v1687
        %2122 = vmatprep.subr.mxu0 0.0
        %2123 = vmatpush1.xpose.msra.mxu0 %v1689
        %2124 = vmatprep.subr.mxu0 0.0
        %2125 = vmatpush1.xpose.msra.mxu0 %v1691
        %2126 = vmatprep.subr.mxu0 0.0
        %2127 = vmatpush1.xpose.msra.mxu0 %v1693
        %2128 = vmatprep.subr.mxu0 0.0
        %2129 = vmatpush1.xpose.msra.mxu0 %v1695
        %2130 = vmatprep.subr.mxu0 0.0
        %2131 = vmatpush1.xpose.msra.mxu0 %v1697
        %2132 = vmatprep.subr.mxu0 0.0
        %2133 = vmatpush1.xpose.msra.mxu0 %v1699
        %2134 = vmatprep.subr.mxu0 0.0
        %2135 = vmatpush1.xpose.msra.mxu0 %v1701
        %2136 = vmatprep.subr.mxu0 0.0
        %2137 = vmatpush1.xpose.msra.mxu0 %v1703
        %2138 = vmatprep.subr.mxu0 0.0
        %2139 = vmatpush1.xpose.msra.mxu0 %v1705
        %2140 = vmatprep.subr.mxu0 0.0
        %2141 = vmatpush1.xpose.msra.mxu0 %v1707
        %2142 = vmatprep.subr.mxu0 0.0
        %2143 = vmatpush1.xpose.msra.mxu0 %v1709
        %2144 = vmatprep.subr.mxu0 0.0
        %2145 = vmatpush1.xpose.msra.mxu0 %v1711
        %2146 = vmatprep.subr.mxu0 0.0
        %2147 = vmatpush1.xpose.msra.mxu0 %v1713
        %2148 = vmatprep.subr.mxu0 0.0
        %2149 = vmatpush1.xpose.msra.mxu0 %v1715
        %2150 = vmatprep.subr.mxu0 0.0
        %2151 = vmatpush1.xpose.msra.mxu0 %v1717
        %2152 = vmatprep.subr.mxu0 0.0
        %2153 = vmatpush1.xpose.msra.mxu0 %v1719
        %2154 = vmatprep.subr.mxu0 0.0
        %2155 = vmatpush1.xpose.msra.mxu0 %v1721
        %2156 = vmatprep.subr.mxu0 0.0
        %2157 = vmatpush1.xpose.msra.mxu0 %v1723
        %2158 = vmatprep.mubr.f32.mxu0 0.0
        %2159 = vmatmul.mubr.f32.gmra.mrb[0].mxu0 %v2092
        %v2160 = vpop.f32.mrb[0].mxu0
        %v2161 = vadd.f32 0.0, %v2160
        %v2162 = vpop.f32.mrb[0].mxu0
        %v2163 = vadd.f32 0.0, %v2162
        %2164 = vdwg.mxu0
        %v2165 = vadd.f32 %v2087, %v2161
        %v2166 = vadd.f32 %v2089, %v2163
        %v2167 = vrot.slane %v872, 2
        %v2168 = vrot.slane %v873, 2
        %v2169 = vsel %vm1798, %v2167, %v2168
        %v2170 = vrot.slane %v874, 2
        %v2171 = vsel %vm1798, %v2168, %v2170
        %v2172 = vrot.slane %v875, 2
        %v2173 = vrot.slane %v876, 2
        %v2174 = vsel %vm1798, %v2172, %v2173
        %v2175 = vrot.slane %v877, 2
        %v2176 = vsel %vm1798, %v2173, %v2175
        %v2177 = vrot.slane %v878, 2
        %v2178 = vrot.slane %v879, 2
        %v2179 = vsel %vm1798, %v2177, %v2178
        %v2180 = vrot.slane %v880, 2
        %v2181 = vsel %vm1798, %v2178, %v2180
        %v2182 = vrot.slane %v881, 2
        %v2183 = vrot.slane %v882, 2
        %v2184 = vsel %vm1798, %v2182, %v2183
        %v2185 = vrot.slane %v883, 2
        %v2186 = vsel %vm1798, %v2183, %v2185
        %v2187 = vrot.slane %v884, 2
        %v2188 = vrot.slane %v885, 2
        %v2189 = vsel %vm1798, %v2187, %v2188
        %v2190 = vrot.slane %v886, 2
        %v2191 = vsel %vm1798, %v2188, %v2190
        %v2192 = vrot.slane %v887, 2
        %v2193 = vrot.slane %v888, 2
        %v2194 = vsel %vm1798, %v2192, %v2193
        %v2195 = vrot.slane %v889, 2
        %v2196 = vsel %vm1798, %v2193, %v2195
        %v2197 = vrot.slane %v890, 2
        %v2198 = vrot.slane %v891, 2
        %v2199 = vsel %vm1798, %v2197, %v2198
        %v2200 = vrot.slane %v892, 2
        %v2201 = vsel %vm1798, %v2198, %v2200
        %v2202 = vrot.slane %v893, 2
        %v2203 = vrot.slane %v894, 2
        %v2204 = vsel %vm1798, %v2202, %v2203
        %v2205 = vrot.slane %v895, 2
        %v2206 = vsel %vm1798, %v2203, %v2205
        %v2207 = vrot.slane %v896, 2
        %v2208 = vrot.slane %v897, 2
        %v2209 = vsel %vm1798, %v2207, %v2208
        %v2210 = vrot.slane %v898, 2
        %v2211 = vsel %vm1798, %v2208, %v2210
        %v2212 = vrot.slane %v899, 2
        %v2213 = vrot.slane %v900, 2
        %v2214 = vsel %vm1798, %v2212, %v2213
        %v2215 = vrot.slane %v901, 2
        %v2216 = vsel %vm1798, %v2213, %v2215
        %v2217 = vrot.slane %v902, 2
        %v2218 = vrot.slane %v903, 2
        %v2219 = vsel %vm1798, %v2217, %v2218
        %v2220 = vrot.slane %v904, 2
        %v2221 = vsel %vm1798, %v2218, %v2220
        %v2222 = vrot.slane %v905, 2
        %v2223 = vrot.slane %v906, 2
        %v2224 = vsel %vm1798, %v2222, %v2223
        %v2225 = vrot.slane %v907, 2
        %v2226 = vsel %vm1798, %v2223, %v2225
        %v2227 = vrot.slane %v908, 2
        %v2228 = vrot.slane %v909, 2
        %v2229 = vsel %vm1798, %v2227, %v2228
        %v2230 = vrot.slane %v910, 2
        %v2231 = vsel %vm1798, %v2228, %v2230
        %v2232 = vrot.slane %v911, 2
        %v2233 = vrot.slane %v912, 2
        %v2234 = vsel %vm1798, %v2232, %v2233
        %v2235 = vrot.slane %v913, 2
        %v2236 = vsel %vm1798, %v2233, %v2235
        %v2237 = vrot.slane %v914, 2
        %v2238 = vrot.slane %v915, 2
        %v2239 = vsel %vm1798, %v2237, %v2238
        %v2240 = vrot.slane %v916, 2
        %v2241 = vsel %vm1798, %v2238, %v2240
        %v2242 = vrot.slane %v917, 2
        %v2243 = vrot.slane %v918, 2
        %v2244 = vsel %vm1798, %v2242, %v2243
        %v2245 = vrot.slane %v919, 2
        %v2246 = vsel %vm1798, %v2243, %v2245
        %v2248 = vsel %vm1113, %v975, 0
        %v2250 = vsel %vm1113, %v2169, 0
        %v2252 = vsel %vm1113, %v2171, 0
        %v2254 = vsel %vm1113, %v2174, 0
        %v2256 = vsel %vm1113, %v2176, 0
        %v2258 = vsel %vm1113, %v2179, 0
        %v2260 = vsel %vm1113, %v2181, 0
        %v2262 = vsel %vm1113, %v2184, 0
        %v2264 = vsel %vm1113, %v2186, 0
        %v2266 = vsel %vm1113, %v2189, 0
        %v2268 = vsel %vm1113, %v2191, 0
        %v2270 = vsel %vm1113, %v2194, 0
        %v2272 = vsel %vm1113, %v2196, 0
        %v2274 = vsel %vm1113, %v2199, 0
        %v2276 = vsel %vm1113, %v2201, 0
        %v2278 = vsel %vm1113, %v2204, 0
        %v2280 = vsel %vm1113, %v2206, 0
        %v2282 = vsel %vm1113, %v2209, 0
        %v2284 = vsel %vm1113, %v2211, 0
        %v2286 = vsel %vm1113, %v2214, 0
        %v2288 = vsel %vm1113, %v2216, 0
        %v2290 = vsel %vm1113, %v2219, 0
        %v2292 = vsel %vm1113, %v2221, 0
        %v2294 = vsel %vm1113, %v2224, 0
        %v2296 = vsel %vm1113, %v2226, 0
        %v2298 = vsel %vm1113, %v2229, 0
        %v2300 = vsel %vm1113, %v2231, 0
        %v2302 = vsel %vm1113, %v2234, 0
        %v2304 = vsel %vm1113, %v2236, 0
        %v2306 = vsel %vm1113, %v2239, 0
        %v2308 = vsel %vm1113, %v2241, 0
        %v2310 = vsel %vm1113, %v2244, 0
        %v2312 = vsel %vm1113, %v2246, 0
        %2314 = vmatprep.subr.mxu0 0.0
        %2315 = vmatpush1.xpose.msra.mxu0 %v2250
        %2316 = vmatprep.subr.mxu0 0.0
        %2317 = vmatpush1.xpose.msra.mxu0 %v2252
        %2318 = vmatprep.subr.mxu0 0.0
        %2319 = vmatpush1.xpose.msra.mxu0 %v2254
        %2320 = vmatprep.subr.mxu0 0.0
        %2321 = vmatpush1.xpose.msra.mxu0 %v2256
        %2322 = vmatprep.subr.mxu0 0.0
        %2323 = vmatpush1.xpose.msra.mxu0 %v2258
        %2324 = vmatprep.subr.mxu0 0.0
        %2325 = vmatpush1.xpose.msra.mxu0 %v2260
        %2326 = vmatprep.subr.mxu0 0.0
        %2327 = vmatpush1.xpose.msra.mxu0 %v2262
        %2328 = vmatprep.subr.mxu0 0.0
        %2329 = vmatpush1.xpose.msra.mxu0 %v2264
        %2330 = vmatprep.subr.mxu0 0.0
        %2331 = vmatpush1.xpose.msra.mxu0 %v2266
        %2332 = vmatprep.subr.mxu0 0.0
        %2333 = vmatpush1.xpose.msra.mxu0 %v2268
        %2334 = vmatprep.subr.mxu0 0.0
        %2335 = vmatpush1.xpose.msra.mxu0 %v2270
        %2336 = vmatprep.subr.mxu0 0.0
        %2337 = vmatpush1.xpose.msra.mxu0 %v2272
        %2338 = vmatprep.subr.mxu0 0.0
        %2339 = vmatpush1.xpose.msra.mxu0 %v2274
        %2340 = vmatprep.subr.mxu0 0.0
        %2341 = vmatpush1.xpose.msra.mxu0 %v2276
        %2342 = vmatprep.subr.mxu0 0.0
        %2343 = vmatpush1.xpose.msra.mxu0 %v2278
        %2344 = vmatprep.subr.mxu0 0.0
        %2345 = vmatpush1.xpose.msra.mxu0 %v2280
        %2346 = vmatprep.subr.mxu0 0.0
        %2347 = vmatpush1.xpose.msra.mxu0 %v2282
        %2348 = vmatprep.subr.mxu0 0.0
        %2349 = vmatpush1.xpose.msra.mxu0 %v2284
        %2350 = vmatprep.subr.mxu0 0.0
        %2351 = vmatpush1.xpose.msra.mxu0 %v2286
        %2352 = vmatprep.subr.mxu0 0.0
        %2353 = vmatpush1.xpose.msra.mxu0 %v2288
        %2354 = vmatprep.subr.mxu0 0.0
        %2355 = vmatpush1.xpose.msra.mxu0 %v2290
        %2356 = vmatprep.subr.mxu0 0.0
        %2357 = vmatpush1.xpose.msra.mxu0 %v2292
        %2358 = vmatprep.subr.mxu0 0.0
        %2359 = vmatpush1.xpose.msra.mxu0 %v2294
        %2360 = vmatprep.subr.mxu0 0.0
        %2361 = vmatpush1.xpose.msra.mxu0 %v2296
        %2362 = vmatprep.subr.mxu0 0.0
        %2363 = vmatpush1.xpose.msra.mxu0 %v2298
        %2364 = vmatprep.subr.mxu0 0.0
        %2365 = vmatpush1.xpose.msra.mxu0 %v2300
        %2366 = vmatprep.subr.mxu0 0.0
        %2367 = vmatpush1.xpose.msra.mxu0 %v2302
        %2368 = vmatprep.subr.mxu0 0.0
        %2369 = vmatpush1.xpose.msra.mxu0 %v2304
        %2370 = vmatprep.subr.mxu0 0.0
        %2371 = vmatpush1.xpose.msra.mxu0 %v2306
        %2372 = vmatprep.subr.mxu0 0.0
        %2373 = vmatpush1.xpose.msra.mxu0 %v2308
        %2374 = vmatprep.subr.mxu0 0.0
        %2375 = vmatpush1.xpose.msra.mxu0 %v2310
        %2376 = vmatprep.subr.mxu0 0.0
        %2377 = vmatpush1.xpose.msra.mxu0 %v2312
        %2378 = vmatprep.mubr.f32.mxu0 0.0
        %2379 = vmatmul.mubr.f32.gmra.mrb[0].mxu0 %v2248
        %v2380 = vpop.f32.mrb[0].mxu0
        %v2381 = vadd.f32 0.0, %v2380
        %v2382 = vpop.f32.mrb[0].mxu0
        %v2383 = vadd.f32 0.0, %v2382
        %2384 = vdwg.mxu0
        %v2385 = vadd.f32 %v2165, %v2381
        %v2386 = vadd.f32 %v2166, %v2383
        %v2388 = vsel %vm1113, %v977, 0
        %2390 = vmatprep.subr.mxu0 0.0
        %2391 = vmatpush1.xpose.msra.mxu0 %v1661
        %2392 = vmatprep.subr.mxu0 0.0
        %2393 = vmatpush1.xpose.msra.mxu0 %v1663
        %2394 = vmatprep.subr.mxu0 0.0
        %2395 = vmatpush1.xpose.msra.mxu0 %v1665
        %2396 = vmatprep.subr.mxu0 0.0
        %2397 = vmatpush1.xpose.msra.mxu0 %v1667
        %2398 = vmatprep.subr.mxu0 0.0
        %2399 = vmatpush1.xpose.msra.mxu0 %v1669
        %2400 = vmatprep.subr.mxu0 0.0
        %2401 = vmatpush1.xpose.msra.mxu0 %v1671
        %2402 = vmatprep.subr.mxu0 0.0
        %2403 = vmatpush1.xpose.msra.mxu0 %v1673
        %2404 = vmatprep.subr.mxu0 0.0
        %2405 = vmatpush1.xpose.msra.mxu0 %v1675
        %2406 = vmatprep.subr.mxu0 0.0
        %2407 = vmatpush1.xpose.msra.mxu0 %v1677
        %2408 = vmatprep.subr.mxu0 0.0
        %2409 = vmatpush1.xpose.msra.mxu0 %v1679
        %2410 = vmatprep.subr.mxu0 0.0
        %2411 = vmatpush1.xpose.msra.mxu0 %v1681
        %2412 = vmatprep.subr.mxu0 0.0
        %2413 = vmatpush1.xpose.msra.mxu0 %v1683
        %2414 = vmatprep.subr.mxu0 0.0
        %2415 = vmatpush1.xpose.msra.mxu0 %v1685
        %2416 = vmatprep.subr.mxu0 0.0
        %2417 = vmatpush1.xpose.msra.mxu0 %v1687
        %2418 = vmatprep.subr.mxu0 0.0
        %2419 = vmatpush1.xpose.msra.mxu0 %v1689
        %2420 = vmatprep.subr.mxu0 0.0
        %2421 = vmatpush1.xpose.msra.mxu0 %v1691
        %2422 = vmatprep.subr.mxu0 0.0
        %2423 = vmatpush1.xpose.msra.mxu0 %v1693
        %2424 = vmatprep.subr.mxu0 0.0
        %2425 = vmatpush1.xpose.msra.mxu0 %v1695
        %2426 = vmatprep.subr.mxu0 0.0
        %2427 = vmatpush1.xpose.msra.mxu0 %v1697
        %2428 = vmatprep.subr.mxu0 0.0
        %2429 = vmatpush1.xpose.msra.mxu0 %v1699
        %2430 = vmatprep.subr.mxu0 0.0
        %2431 = vmatpush1.xpose.msra.mxu0 %v1701
        %2432 = vmatprep.subr.mxu0 0.0
        %2433 = vmatpush1.xpose.msra.mxu0 %v1703
        %2434 = vmatprep.subr.mxu0 0.0
        %2435 = vmatpush1.xpose.msra.mxu0 %v1705
        %2436 = vmatprep.subr.mxu0 0.0
        %2437 = vmatpush1.xpose.msra.mxu0 %v1707
        %2438 = vmatprep.subr.mxu0 0.0
        %2439 = vmatpush1.xpose.msra.mxu0 %v1709
        %2440 = vmatprep.subr.mxu0 0.0
        %2441 = vmatpush1.xpose.msra.mxu0 %v1711
        %2442 = vmatprep.subr.mxu0 0.0
        %2443 = vmatpush1.xpose.msra.mxu0 %v1713
        %2444 = vmatprep.subr.mxu0 0.0
        %2445 = vmatpush1.xpose.msra.mxu0 %v1715
        %2446 = vmatprep.subr.mxu0 0.0
        %2447 = vmatpush1.xpose.msra.mxu0 %v1717
        %2448 = vmatprep.subr.mxu0 0.0
        %2449 = vmatpush1.xpose.msra.mxu0 %v1719
        %2450 = vmatprep.subr.mxu0 0.0
        %2451 = vmatpush1.xpose.msra.mxu0 %v1721
        %2452 = vmatprep.subr.mxu0 0.0
        %2453 = vmatpush1.xpose.msra.mxu0 %v1723
        %2454 = vmatprep.mubr.f32.mxu0 0.0
        %2455 = vmatmul.mubr.f32.gmra.mrb[0].mxu0 %v2388
        %v2456 = vpop.f32.mrb[0].mxu0
        %v2457 = vadd.f32 0.0, %v2456
        %v2458 = vpop.f32.mrb[0].mxu0
        %v2459 = vadd.f32 0.0, %v2458
        %2460 = vdwg.mxu0
        %v2462 = vsel %vm1113, %v976, 0
        %2464 = vmatprep.subr.mxu0 0.0
        %2465 = vmatpush1.xpose.msra.mxu0 %v1394
        %2466 = vmatprep.subr.mxu0 0.0
        %2467 = vmatpush1.xpose.msra.mxu0 %v1397
        %2468 = vmatprep.subr.mxu0 0.0
        %2469 = vmatpush1.xpose.msra.mxu0 %v1400
        %2470 = vmatprep.subr.mxu0 0.0
        %2471 = vmatpush1.xpose.msra.mxu0 %v1403
        %2472 = vmatprep.subr.mxu0 0.0
        %2473 = vmatpush1.xpose.msra.mxu0 %v1406
        %2474 = vmatprep.subr.mxu0 0.0
        %2475 = vmatpush1.xpose.msra.mxu0 %v1409
        %2476 = vmatprep.subr.mxu0 0.0
        %2477 = vmatpush1.xpose.msra.mxu0 %v1412
        %2478 = vmatprep.subr.mxu0 0.0
        %2479 = vmatpush1.xpose.msra.mxu0 %v1415
        %2480 = vmatprep.subr.mxu0 0.0
        %2481 = vmatpush1.xpose.msra.mxu0 %v1418
        %2482 = vmatprep.subr.mxu0 0.0
        %2483 = vmatpush1.xpose.msra.mxu0 %v1421
        %2484 = vmatprep.subr.mxu0 0.0
        %2485 = vmatpush1.xpose.msra.mxu0 %v1424
        %2486 = vmatprep.subr.mxu0 0.0
        %2487 = vmatpush1.xpose.msra.mxu0 %v1427
        %2488 = vmatprep.subr.mxu0 0.0
        %2489 = vmatpush1.xpose.msra.mxu0 %v1430
        %2490 = vmatprep.subr.mxu0 0.0
        %2491 = vmatpush1.xpose.msra.mxu0 %v1433
        %2492 = vmatprep.subr.mxu0 0.0
        %2493 = vmatpush1.xpose.msra.mxu0 %v1436
        %2494 = vmatprep.subr.mxu0 0.0
        %2495 = vmatpush1.xpose.msra.mxu0 %v1439
        %2496 = vmatprep.subr.mxu0 0.0
        %2497 = vmatpush1.xpose.msra.mxu0 %v1442
        %2498 = vmatprep.subr.mxu0 0.0
        %2499 = vmatpush1.xpose.msra.mxu0 %v1445
        %2500 = vmatprep.subr.mxu0 0.0
        %2501 = vmatpush1.xpose.msra.mxu0 %v1448
        %2502 = vmatprep.subr.mxu0 0.0
        %2503 = vmatpush1.xpose.msra.mxu0 %v1451
        %2504 = vmatprep.subr.mxu0 0.0
        %2505 = vmatpush1.xpose.msra.mxu0 %v1454
        %2506 = vmatprep.subr.mxu0 0.0
        %2507 = vmatpush1.xpose.msra.mxu0 %v1457
        %2508 = vmatprep.subr.mxu0 0.0
        %2509 = vmatpush1.xpose.msra.mxu0 %v1460
        %2510 = vmatprep.subr.mxu0 0.0
        %2511 = vmatpush1.xpose.msra.mxu0 %v1463
        %2512 = vmatprep.subr.mxu0 0.0
        %2513 = vmatpush1.xpose.msra.mxu0 %v1466
        %2514 = vmatprep.subr.mxu0 0.0
        %2515 = vmatpush1.xpose.msra.mxu0 %v1469
        %2516 = vmatprep.subr.mxu0 0.0
        %2517 = vmatpush1.xpose.msra.mxu0 %v1472
        %2518 = vmatprep.subr.mxu0 0.0
        %2519 = vmatpush1.xpose.msra.mxu0 %v1475
        %2520 = vmatprep.subr.mxu0 0.0
        %2521 = vmatpush1.xpose.msra.mxu0 %v1478
        %2522 = vmatprep.subr.mxu0 0.0
        %2523 = vmatpush1.xpose.msra.mxu0 %v1481
        %2524 = vmatprep.subr.mxu0 0.0
        %2525 = vmatpush1.xpose.msra.mxu0 %v1484
        %2526 = vmatprep.subr.mxu0 0.0
        %2527 = vmatpush1.xpose.msra.mxu0 %v1487
        %2528 = vmatprep.mubr.f32.mxu0 0.0
        %2529 = vmatmul.mubr.f32.gmra.mrb[0].mxu0 %v2462
        %v2530 = vpop.f32.mrb[0].mxu0
        %v2531 = vadd.f32 %v2457, %v2530
        %v2532 = vpop.f32.mrb[0].mxu0
        %v2533 = vadd.f32 %v2459, %v2532
        %2534 = vdwg.mxu0
        %v2536 = vsel %vm1113, %v978, 0
        %v2539 = vsel %vm1113, %v920, 0
        %v2542 = vsel %vm1113, %v921, 0
        %v2545 = vsel %vm1113, %v923, 0
        %v2548 = vsel %vm1113, %v924, 0
        %v2551 = vsel %vm1113, %v926, 0
        %v2554 = vsel %vm1113, %v927, 0
        %v2557 = vsel %vm1113, %v929, 0
        %v2560 = vsel %vm1113, %v930, 0
        %v2563 = vsel %vm1113, %v932, 0
        %v2566 = vsel %vm1113, %v933, 0
        %v2569 = vsel %vm1113, %v935, 0
        %v2572 = vsel %vm1113, %v936, 0
        %v2575 = vsel %vm1113, %v938, 0
        %v2578 = vsel %vm1113, %v939, 0
        %v2581 = vsel %vm1113, %v941, 0
        %v2584 = vsel %vm1113, %v942, 0
        %v2587 = vsel %vm1113, %v944, 0
        %v2590 = vsel %vm1113, %v945, 0
        %v2593 = vsel %vm1113, %v947, 0
        %v2596 = vsel %vm1113, %v948, 0
        %v2599 = vsel %vm1113, %v950, 0
        %v2602 = vsel %vm1113, %v951, 0
        %v2605 = vsel %vm1113, %v953, 0
        %v2608 = vsel %vm1113, %v954, 0
        %v2611 = vsel %vm1113, %v956, 0
        %v2614 = vsel %vm1113, %v957, 0
        %v2617 = vsel %vm1113, %v959, 0
        %v2620 = vsel %vm1113, %v960, 0
        %v2623 = vsel %vm1113, %v962, 0
        %v2626 = vsel %vm1113, %v963, 0
        %v2629 = vsel %vm1113, %v965, 0
        %v2632 = vsel %vm1113, %v966, 0
        %2634 = vmatprep.subr.mxu0 0.0
        %2635 = vmatpush1.xpose.msra.mxu0 %v2539
        %2636 = vmatprep.subr.mxu0 0.0
        %2637 = vmatpush1.xpose.msra.mxu0 %v2542
        %2638 = vmatprep.subr.mxu0 0.0
        %2639 = vmatpush1.xpose.msra.mxu0 %v2545
        %2640 = vmatprep.subr.mxu0 0.0
        %2641 = vmatpush1.xpose.msra.mxu0 %v2548
        %2642 = vmatprep.subr.mxu0 0.0
        %2643 = vmatpush1.xpose.msra.mxu0 %v2551
        %2644 = vmatprep.subr.mxu0 0.0
        %2645 = vmatpush1.xpose.msra.mxu0 %v2554
        %2646 = vmatprep.subr.mxu0 0.0
        %2647 = vmatpush1.xpose.msra.mxu0 %v2557
        %2648 = vmatprep.subr.mxu0 0.0
        %2649 = vmatpush1.xpose.msra.mxu0 %v2560
        %2650 = vmatprep.subr.mxu0 0.0
        %2651 = vmatpush1.xpose.msra.mxu0 %v2563
        %2652 = vmatprep.subr.mxu0 0.0
        %2653 = vmatpush1.xpose.msra.mxu0 %v2566
        %2654 = vmatprep.subr.mxu0 0.0
        %2655 = vmatpush1.xpose.msra.mxu0 %v2569
        %2656 = vmatprep.subr.mxu0 0.0
        %2657 = vmatpush1.xpose.msra.mxu0 %v2572
        %2658 = vmatprep.subr.mxu0 0.0
        %2659 = vmatpush1.xpose.msra.mxu0 %v2575
        %2660 = vmatprep.subr.mxu0 0.0
        %2661 = vmatpush1.xpose.msra.mxu0 %v2578
        %2662 = vmatprep.subr.mxu0 0.0
        %2663 = vmatpush1.xpose.msra.mxu0 %v2581
        %2664 = vmatprep.subr.mxu0 0.0
        %2665 = vmatpush1.xpose.msra.mxu0 %v2584
        %2666 = vmatprep.subr.mxu0 0.0
        %2667 = vmatpush1.xpose.msra.mxu0 %v2587
        %2668 = vmatprep.subr.mxu0 0.0
        %2669 = vmatpush1.xpose.msra.mxu0 %v2590
        %2670 = vmatprep.subr.mxu0 0.0
        %2671 = vmatpush1.xpose.msra.mxu0 %v2593
        %2672 = vmatprep.subr.mxu0 0.0
        %2673 = vmatpush1.xpose.msra.mxu0 %v2596
        %2674 = vmatprep.subr.mxu0 0.0
        %2675 = vmatpush1.xpose.msra.mxu0 %v2599
        %2676 = vmatprep.subr.mxu0 0.0
        %2677 = vmatpush1.xpose.msra.mxu0 %v2602
        %2678 = vmatprep.subr.mxu0 0.0
        %2679 = vmatpush1.xpose.msra.mxu0 %v2605
        %2680 = vmatprep.subr.mxu0 0.0
        %2681 = vmatpush1.xpose.msra.mxu0 %v2608
        %2682 = vmatprep.subr.mxu0 0.0
        %2683 = vmatpush1.xpose.msra.mxu0 %v2611
        %2684 = vmatprep.subr.mxu0 0.0
        %2685 = vmatpush1.xpose.msra.mxu0 %v2614
        %2686 = vmatprep.subr.mxu0 0.0
        %2687 = vmatpush1.xpose.msra.mxu0 %v2617
        %2688 = vmatprep.subr.mxu0 0.0
        %2689 = vmatpush1.xpose.msra.mxu0 %v2620
        %2690 = vmatprep.subr.mxu0 0.0
        %2691 = vmatpush1.xpose.msra.mxu0 %v2623
        %2692 = vmatprep.subr.mxu0 0.0
        %2693 = vmatpush1.xpose.msra.mxu0 %v2626
        %2694 = vmatprep.subr.mxu0 0.0
        %2695 = vmatpush1.xpose.msra.mxu0 %v2629
        %2696 = vmatprep.subr.mxu0 0.0
        %2697 = vmatpush1.xpose.msra.mxu0 %v2632
        %2698 = vmatprep.mubr.f32.mxu0 0.0
        %2699 = vmatmul.mubr.f32.gmra.mrb[0].mxu0 %v2536
        %v2700 = vpop.f32.mrb[0].mxu0
        %v2701 = vadd.f32 0.0, %v2700
        %v2702 = vpop.f32.mrb[0].mxu0
        %v2703 = vadd.f32 0.0, %v2702
        %2704 = vdwg.mxu0
        %v2705 = vadd.f32 %v2531, %v2701
        %v2706 = vadd.f32 %v2533, %v2703
        %v2723 = vrot.slane %v920, 1
        %v2724 = vrot.slane %v921, 1
        %v2725 = vsel %vm1032, %v2723, %v2724
        %v2726 = vrot.slane %v922, 1
        %v2727 = vsel %vm1032, %v2724, %v2726
        %v2728 = vrot.slane %v923, 1
        %v2729 = vrot.slane %v924, 1
        %v2730 = vsel %vm1032, %v2728, %v2729
        %v2731 = vrot.slane %v925, 1
        %v2732 = vsel %vm1032, %v2729, %v2731
        %v2733 = vrot.slane %v926, 1
        %v2734 = vrot.slane %v927, 1
        %v2735 = vsel %vm1032, %v2733, %v2734
        %v2736 = vrot.slane %v928, 1
        %v2737 = vsel %vm1032, %v2734, %v2736
        %v2738 = vrot.slane %v929, 1
        %v2739 = vrot.slane %v930, 1
        %v2740 = vsel %vm1032, %v2738, %v2739
        %v2741 = vrot.slane %v931, 1
        %v2742 = vsel %vm1032, %v2739, %v2741
        %v2743 = vrot.slane %v932, 1
        %v2744 = vrot.slane %v933, 1
        %v2745 = vsel %vm1032, %v2743, %v2744
        %v2746 = vrot.slane %v934, 1
        %v2747 = vsel %vm1032, %v2744, %v2746
        %v2748 = vrot.slane %v935, 1
        %v2749 = vrot.slane %v936, 1
        %v2750 = vsel %vm1032, %v2748, %v2749
        %v2751 = vrot.slane %v937, 1
        %v2752 = vsel %vm1032, %v2749, %v2751
        %v2753 = vrot.slane %v938, 1
        %v2754 = vrot.slane %v939, 1
        %v2755 = vsel %vm1032, %v2753, %v2754
        %v2756 = vrot.slane %v940, 1
        %v2757 = vsel %vm1032, %v2754, %v2756
        %v2758 = vrot.slane %v941, 1
        %v2759 = vrot.slane %v942, 1
        %v2760 = vsel %vm1032, %v2758, %v2759
        %v2761 = vrot.slane %v943, 1
        %v2762 = vsel %vm1032, %v2759, %v2761
        %v2763 = vrot.slane %v944, 1
        %v2764 = vrot.slane %v945, 1
        %v2765 = vsel %vm1032, %v2763, %v2764
        %v2766 = vrot.slane %v946, 1
        %v2767 = vsel %vm1032, %v2764, %v2766
        %v2768 = vrot.slane %v947, 1
        %v2769 = vrot.slane %v948, 1
        %v2770 = vsel %vm1032, %v2768, %v2769
        %v2771 = vrot.slane %v949, 1
        %v2772 = vsel %vm1032, %v2769, %v2771
        %v2773 = vrot.slane %v950, 1
        %v2774 = vrot.slane %v951, 1
        %v2775 = vsel %vm1032, %v2773, %v2774
        %v2776 = vrot.slane %v952, 1
        %v2777 = vsel %vm1032, %v2774, %v2776
        %v2778 = vrot.slane %v953, 1
        %v2779 = vrot.slane %v954, 1
        %v2780 = vsel %vm1032, %v2778, %v2779
        %v2781 = vrot.slane %v955, 1
        %v2782 = vsel %vm1032, %v2779, %v2781
        %v2783 = vrot.slane %v956, 1
        %v2784 = vrot.slane %v957, 1
        %v2785 = vsel %vm1032, %v2783, %v2784
        %v2786 = vrot.slane %v958, 1
        %v2787 = vsel %vm1032, %v2784, %v2786
        %v2788 = vrot.slane %v959, 1
        %v2789 = vrot.slane %v960, 1
        %v2790 = vsel %vm1032, %v2788, %v2789
        %v2791 = vrot.slane %v961, 1
        %v2792 = vsel %vm1032, %v2789, %v2791
        %v2793 = vrot.slane %v962, 1
        %v2794 = vrot.slane %v963, 1
        %v2795 = vsel %vm1032, %v2793, %v2794
        %v2796 = vrot.slane %v964, 1
        %v2797 = vsel %vm1032, %v2794, %v2796
        %v2798 = vrot.slane %v965, 1
        %v2799 = vrot.slane %v966, 1
        %v2800 = vsel %vm1032, %v2798, %v2799
        %v2801 = vrot.slane %v967, 1
        %v2802 = vsel %vm1032, %v2799, %v2801
        %v2804 = vsel %vm1113, %v979, 0
        %v2806 = vsel %vm1113, %v2725, 0
        %v2808 = vsel %vm1113, %v2727, 0
        %v2810 = vsel %vm1113, %v2730, 0
        %v2812 = vsel %vm1113, %v2732, 0
        %v2814 = vsel %vm1113, %v2735, 0
        %v2816 = vsel %vm1113, %v2737, 0
        %v2818 = vsel %vm1113, %v2740, 0
        %v2820 = vsel %vm1113, %v2742, 0
        %v2822 = vsel %vm1113, %v2745, 0
        %v2824 = vsel %vm1113, %v2747, 0
        %v2826 = vsel %vm1113, %v2750, 0
        %v2828 = vsel %vm1113, %v2752, 0
        %v2830 = vsel %vm1113, %v2755, 0
        %v2832 = vsel %vm1113, %v2757, 0
        %v2834 = vsel %vm1113, %v2760, 0
        %v2836 = vsel %vm1113, %v2762, 0
        %v2838 = vsel %vm1113, %v2765, 0
        %v2840 = vsel %vm1113, %v2767, 0
        %v2842 = vsel %vm1113, %v2770, 0
        %v2844 = vsel %vm1113, %v2772, 0
        %v2846 = vsel %vm1113, %v2775, 0
        %v2848 = vsel %vm1113, %v2777, 0
        %v2850 = vsel %vm1113, %v2780, 0
        %v2852 = vsel %vm1113, %v2782, 0
        %v2854 = vsel %vm1113, %v2785, 0
        %v2856 = vsel %vm1113, %v2787, 0
        %v2858 = vsel %vm1113, %v2790, 0
        %v2860 = vsel %vm1113, %v2792, 0
        %v2862 = vsel %vm1113, %v2795, 0
        %v2864 = vsel %vm1113, %v2797, 0
        %v2866 = vsel %vm1113, %v2800, 0
        %v2868 = vsel %vm1113, %v2802, 0
        %2870 = vmatprep.subr.mxu0 0.0
        %2871 = vmatpush1.xpose.msra.mxu0 %v2806
        %2872 = vmatprep.subr.mxu0 0.0
        %2873 = vmatpush1.xpose.msra.mxu0 %v2808
        %2874 = vmatprep.subr.mxu0 0.0
        %2875 = vmatpush1.xpose.msra.mxu0 %v2810
        %2876 = vmatprep.subr.mxu0 0.0
        %2877 = vmatpush1.xpose.msra.mxu0 %v2812
        %2878 = vmatprep.subr.mxu0 0.0
        %2879 = vmatpush1.xpose.msra.mxu0 %v2814
        %2880 = vmatprep.subr.mxu0 0.0
        %2881 = vmatpush1.xpose.msra.mxu0 %v2816
        %2882 = vmatprep.subr.mxu0 0.0
        %2883 = vmatpush1.xpose.msra.mxu0 %v2818
        %2884 = vmatprep.subr.mxu0 0.0
        %2885 = vmatpush1.xpose.msra.mxu0 %v2820
        %2886 = vmatprep.subr.mxu0 0.0
        %2887 = vmatpush1.xpose.msra.mxu0 %v2822
        %2888 = vmatprep.subr.mxu0 0.0
        %2889 = vmatpush1.xpose.msra.mxu0 %v2824
        %2890 = vmatprep.subr.mxu0 0.0
        %2891 = vmatpush1.xpose.msra.mxu0 %v2826
        %2892 = vmatprep.subr.mxu0 0.0
        %2893 = vmatpush1.xpose.msra.mxu0 %v2828
        %2894 = vmatprep.subr.mxu0 0.0
        %2895 = vmatpush1.xpose.msra.mxu0 %v2830
        %2896 = vmatprep.subr.mxu0 0.0
        %2897 = vmatpush1.xpose.msra.mxu0 %v2832
        %2898 = vmatprep.subr.mxu0 0.0
        %2899 = vmatpush1.xpose.msra.mxu0 %v2834
        %2900 = vmatprep.subr.mxu0 0.0
        %2901 = vmatpush1.xpose.msra.mxu0 %v2836
        %2902 = vmatprep.subr.mxu0 0.0
        %2903 = vmatpush1.xpose.msra.mxu0 %v2838
        %2904 = vmatprep.subr.mxu0 0.0
        %2905 = vmatpush1.xpose.msra.mxu0 %v2840
        %2906 = vmatprep.subr.mxu0 0.0
        %2907 = vmatpush1.xpose.msra.mxu0 %v2842
        %2908 = vmatprep.subr.mxu0 0.0
        %2909 = vmatpush1.xpose.msra.mxu0 %v2844
        %2910 = vmatprep.subr.mxu0 0.0
        %2911 = vmatpush1.xpose.msra.mxu0 %v2846
        %2912 = vmatprep.subr.mxu0 0.0
        %2913 = vmatpush1.xpose.msra.mxu0 %v2848
        %2914 = vmatprep.subr.mxu0 0.0
        %2915 = vmatpush1.xpose.msra.mxu0 %v2850
        %2916 = vmatprep.subr.mxu0 0.0
        %2917 = vmatpush1.xpose.msra.mxu0 %v2852
        %2918 = vmatprep.subr.mxu0 0.0
        %2919 = vmatpush1.xpose.msra.mxu0 %v2854
        %2920 = vmatprep.subr.mxu0 0.0
        %2921 = vmatpush1.xpose.msra.mxu0 %v2856
        %2922 = vmatprep.subr.mxu0 0.0
        %2923 = vmatpush1.xpose.msra.mxu0 %v2858
        %2924 = vmatprep.subr.mxu0 0.0
        %2925 = vmatpush1.xpose.msra.mxu0 %v2860
        %2926 = vmatprep.subr.mxu0 0.0
        %2927 = vmatpush1.xpose.msra.mxu0 %v2862
        %2928 = vmatprep.subr.mxu0 0.0
        %2929 = vmatpush1.xpose.msra.mxu0 %v2864
        %2930 = vmatprep.subr.mxu0 0.0
        %2931 = vmatpush1.xpose.msra.mxu0 %v2866
        %2932 = vmatprep.subr.mxu0 0.0
        %2933 = vmatpush1.xpose.msra.mxu0 %v2868
        %2934 = vmatprep.mubr.f32.mxu0 0.0
        %2935 = vmatmul.mubr.f32.gmra.mrb[0].mxu0 %v2804
        %v2936 = vpop.f32.mrb[0].mxu0
        %v2937 = vadd.f32 0.0, %v2936
        %v2938 = vpop.f32.mrb[0].mxu0
        %v2939 = vadd.f32 0.0, %v2938
        %2940 = vdwg.mxu0
        %v2941 = vadd.f32 %v2705, %v2937
        %v2942 = vadd.f32 %v2706, %v2939
        %v2944 = vsel %vm1113, %v981, 0
        %2946 = vmatprep.subr.mxu0 0.0
        %2947 = vmatpush1.xpose.msra.mxu0 %v2250
        %2948 = vmatprep.subr.mxu0 0.0
        %2949 = vmatpush1.xpose.msra.mxu0 %v2252
        %2950 = vmatprep.subr.mxu0 0.0
        %2951 = vmatpush1.xpose.msra.mxu0 %v2254
        %2952 = vmatprep.subr.mxu0 0.0
        %2953 = vmatpush1.xpose.msra.mxu0 %v2256
        %2954 = vmatprep.subr.mxu0 0.0
        %2955 = vmatpush1.xpose.msra.mxu0 %v2258
        %2956 = vmatprep.subr.mxu0 0.0
        %2957 = vmatpush1.xpose.msra.mxu0 %v2260
        %2958 = vmatprep.subr.mxu0 0.0
        %2959 = vmatpush1.xpose.msra.mxu0 %v2262
        %2960 = vmatprep.subr.mxu0 0.0
        %2961 = vmatpush1.xpose.msra.mxu0 %v2264
        %2962 = vmatprep.subr.mxu0 0.0
        %2963 = vmatpush1.xpose.msra.mxu0 %v2266
        %2964 = vmatprep.subr.mxu0 0.0
        %2965 = vmatpush1.xpose.msra.mxu0 %v2268
        %2966 = vmatprep.subr.mxu0 0.0
        %2967 = vmatpush1.xpose.msra.mxu0 %v2270
        %2968 = vmatprep.subr.mxu0 0.0
        %2969 = vmatpush1.xpose.msra.mxu0 %v2272
        %2970 = vmatprep.subr.mxu0 0.0
        %2971 = vmatpush1.xpose.msra.mxu0 %v2274
        %2972 = vmatprep.subr.mxu0 0.0
        %2973 = vmatpush1.xpose.msra.mxu0 %v2276
        %2974 = vmatprep.subr.mxu0 0.0
        %2975 = vmatpush1.xpose.msra.mxu0 %v2278
        %2976 = vmatprep.subr.mxu0 0.0
        %2977 = vmatpush1.xpose.msra.mxu0 %v2280
        %2978 = vmatprep.subr.mxu0 0.0
        %2979 = vmatpush1.xpose.msra.mxu0 %v2282
        %2980 = vmatprep.subr.mxu0 0.0
        %2981 = vmatpush1.xpose.msra.mxu0 %v2284
        %2982 = vmatprep.subr.mxu0 0.0
        %2983 = vmatpush1.xpose.msra.mxu0 %v2286
        %2984 = vmatprep.subr.mxu0 0.0
        %2985 = vmatpush1.xpose.msra.mxu0 %v2288
        %2986 = vmatprep.subr.mxu0 0.0
        %2987 = vmatpush1.xpose.msra.mxu0 %v2290
        %2988 = vmatprep.subr.mxu0 0.0
        %2989 = vmatpush1.xpose.msra.mxu0 %v2292
        %2990 = vmatprep.subr.mxu0 0.0
        %2991 = vmatpush1.xpose.msra.mxu0 %v2294
        %2992 = vmatprep.subr.mxu0 0.0
        %2993 = vmatpush1.xpose.msra.mxu0 %v2296
        %2994 = vmatprep.subr.mxu0 0.0
        %2995 = vmatpush1.xpose.msra.mxu0 %v2298
        %2996 = vmatprep.subr.mxu0 0.0
        %2997 = vmatpush1.xpose.msra.mxu0 %v2300
        %2998 = vmatprep.subr.mxu0 0.0
        %2999 = vmatpush1.xpose.msra.mxu0 %v2302
        %3000 = vmatprep.subr.mxu0 0.0
        %3001 = vmatpush1.xpose.msra.mxu0 %v2304
        %3002 = vmatprep.subr.mxu0 0.0
        %3003 = vmatpush1.xpose.msra.mxu0 %v2306
        %3004 = vmatprep.subr.mxu0 0.0
        %3005 = vmatpush1.xpose.msra.mxu0 %v2308
        %3006 = vmatprep.subr.mxu0 0.0
        %3007 = vmatpush1.xpose.msra.mxu0 %v2310
        %3008 = vmatprep.subr.mxu0 0.0
        %3009 = vmatpush1.xpose.msra.mxu0 %v2312
        %3010 = vmatprep.mubr.f32.mxu0 0.0
        %3011 = vmatmul.mubr.f32.gmra.mrb[0].mxu0 %v2944
        %v3012 = vpop.f32.mrb[0].mxu0
        %v3013 = vadd.f32 0.0, %v3012
        %v3014 = vpop.f32.mrb[0].mxu0
        %v3015 = vadd.f32 0.0, %v3014
        %3016 = vdwg.mxu0
        %v3018 = vsel %vm1113, %v980, 0
        %3020 = vmatprep.subr.mxu0 0.0
        %3021 = vmatpush1.xpose.msra.mxu0 %v1661
        %3022 = vmatprep.subr.mxu0 0.0
        %3023 = vmatpush1.xpose.msra.mxu0 %v1663
        %3024 = vmatprep.subr.mxu0 0.0
        %3025 = vmatpush1.xpose.msra.mxu0 %v1665
        %3026 = vmatprep.subr.mxu0 0.0
        %3027 = vmatpush1.xpose.msra.mxu0 %v1667
        %3028 = vmatprep.subr.mxu0 0.0
        %3029 = vmatpush1.xpose.msra.mxu0 %v1669
        %3030 = vmatprep.subr.mxu0 0.0
        %3031 = vmatpush1.xpose.msra.mxu0 %v1671
        %3032 = vmatprep.subr.mxu0 0.0
        %3033 = vmatpush1.xpose.msra.mxu0 %v1673
        %3034 = vmatprep.subr.mxu0 0.0
        %3035 = vmatpush1.xpose.msra.mxu0 %v1675
        %3036 = vmatprep.subr.mxu0 0.0
        %3037 = vmatpush1.xpose.msra.mxu0 %v1677
        %3038 = vmatprep.subr.mxu0 0.0
        %3039 = vmatpush1.xpose.msra.mxu0 %v1679
        %3040 = vmatprep.subr.mxu0 0.0
        %3041 = vmatpush1.xpose.msra.mxu0 %v1681
        %3042 = vmatprep.subr.mxu0 0.0
        %3043 = vmatpush1.xpose.msra.mxu0 %v1683
        %3044 = vmatprep.subr.mxu0 0.0
        %3045 = vmatpush1.xpose.msra.mxu0 %v1685
        %3046 = vmatprep.subr.mxu0 0.0
        %3047 = vmatpush1.xpose.msra.mxu0 %v1687
        %3048 = vmatprep.subr.mxu0 0.0
        %3049 = vmatpush1.xpose.msra.mxu0 %v1689
        %3050 = vmatprep.subr.mxu0 0.0
        %3051 = vmatpush1.xpose.msra.mxu0 %v1691
        %3052 = vmatprep.subr.mxu0 0.0
        %3053 = vmatpush1.xpose.msra.mxu0 %v1693
        %3054 = vmatprep.subr.mxu0 0.0
        %3055 = vmatpush1.xpose.msra.mxu0 %v1695
        %3056 = vmatprep.subr.mxu0 0.0
        %3057 = vmatpush1.xpose.msra.mxu0 %v1697
        %3058 = vmatprep.subr.mxu0 0.0
        %3059 = vmatpush1.xpose.msra.mxu0 %v1699
        %3060 = vmatprep.subr.mxu0 0.0
        %3061 = vmatpush1.xpose.msra.mxu0 %v1701
        %3062 = vmatprep.subr.mxu0 0.0
        %3063 = vmatpush1.xpose.msra.mxu0 %v1703
        %3064 = vmatprep.subr.mxu0 0.0
        %3065 = vmatpush1.xpose.msra.mxu0 %v1705
        %3066 = vmatprep.subr.mxu0 0.0
        %3067 = vmatpush1.xpose.msra.mxu0 %v1707
        %3068 = vmatprep.subr.mxu0 0.0
        %3069 = vmatpush1.xpose.msra.mxu0 %v1709
        %3070 = vmatprep.subr.mxu0 0.0
        %3071 = vmatpush1.xpose.msra.mxu0 %v1711
        %3072 = vmatprep.subr.mxu0 0.0
        %3073 = vmatpush1.xpose.msra.mxu0 %v1713
        %3074 = vmatprep.subr.mxu0 0.0
        %3075 = vmatpush1.xpose.msra.mxu0 %v1715
        %3076 = vmatprep.subr.mxu0 0.0
        %3077 = vmatpush1.xpose.msra.mxu0 %v1717
        %3078 = vmatprep.subr.mxu0 0.0
        %3079 = vmatpush1.xpose.msra.mxu0 %v1719
        %3080 = vmatprep.subr.mxu0 0.0
        %3081 = vmatpush1.xpose.msra.mxu0 %v1721
        %3082 = vmatprep.subr.mxu0 0.0
        %3083 = vmatpush1.xpose.msra.mxu0 %v1723
        %3084 = vmatprep.mubr.f32.mxu0 0.0
        %3085 = vmatmul.mubr.f32.gmra.mrb[0].mxu0 %v3018
        %v3086 = vpop.f32.mrb[0].mxu0
        %v3087 = vadd.f32 %v3013, %v3086
        %v3088 = vpop.f32.mrb[0].mxu0
        %v3089 = vadd.f32 %v3015, %v3088
        %3090 = vdwg.mxu0
        %v3092 = vsel %vm1113, %v982, 0
        %3094 = vmatprep.subr.mxu0 0.0
        %3095 = vmatpush1.xpose.msra.mxu0 %v2806
        %3096 = vmatprep.subr.mxu0 0.0
        %3097 = vmatpush1.xpose.msra.mxu0 %v2808
        %3098 = vmatprep.subr.mxu0 0.0
        %3099 = vmatpush1.xpose.msra.mxu0 %v2810
        %3100 = vmatprep.subr.mxu0 0.0
        %3101 = vmatpush1.xpose.msra.mxu0 %v2812
        %3102 = vmatprep.subr.mxu0 0.0
        %3103 = vmatpush1.xpose.msra.mxu0 %v2814
        %3104 = vmatprep.subr.mxu0 0.0
        %3105 = vmatpush1.xpose.msra.mxu0 %v2816
        %3106 = vmatprep.subr.mxu0 0.0
        %3107 = vmatpush1.xpose.msra.mxu0 %v2818
        %3108 = vmatprep.subr.mxu0 0.0
        %3109 = vmatpush1.xpose.msra.mxu0 %v2820
        %3110 = vmatprep.subr.mxu0 0.0
        %3111 = vmatpush1.xpose.msra.mxu0 %v2822
        %3112 = vmatprep.subr.mxu0 0.0
        %3113 = vmatpush1.xpose.msra.mxu0 %v2824
        %3114 = vmatprep.subr.mxu0 0.0
        %3115 = vmatpush1.xpose.msra.mxu0 %v2826
        %3116 = vmatprep.subr.mxu0 0.0
        %3117 = vmatpush1.xpose.msra.mxu0 %v2828
        %3118 = vmatprep.subr.mxu0 0.0
        %3119 = vmatpush1.xpose.msra.mxu0 %v2830
        %3120 = vmatprep.subr.mxu0 0.0
        %3121 = vmatpush1.xpose.msra.mxu0 %v2832
        %3122 = vmatprep.subr.mxu0 0.0
        %3123 = vmatpush1.xpose.msra.mxu0 %v2834
        %3124 = vmatprep.subr.mxu0 0.0
        %3125 = vmatpush1.xpose.msra.mxu0 %v2836
        %3126 = vmatprep.subr.mxu0 0.0
        %3127 = vmatpush1.xpose.msra.mxu0 %v2838
        %3128 = vmatprep.subr.mxu0 0.0
        %3129 = vmatpush1.xpose.msra.mxu0 %v2840
        %3130 = vmatprep.subr.mxu0 0.0
        %3131 = vmatpush1.xpose.msra.mxu0 %v2842
        %3132 = vmatprep.subr.mxu0 0.0
        %3133 = vmatpush1.xpose.msra.mxu0 %v2844
        %3134 = vmatprep.subr.mxu0 0.0
        %3135 = vmatpush1.xpose.msra.mxu0 %v2846
        %3136 = vmatprep.subr.mxu0 0.0
        %3137 = vmatpush1.xpose.msra.mxu0 %v2848
        %3138 = vmatprep.subr.mxu0 0.0
        %3139 = vmatpush1.xpose.msra.mxu0 %v2850
        %3140 = vmatprep.subr.mxu0 0.0
        %3141 = vmatpush1.xpose.msra.mxu0 %v2852
        %3142 = vmatprep.subr.mxu0 0.0
        %3143 = vmatpush1.xpose.msra.mxu0 %v2854
        %3144 = vmatprep.subr.mxu0 0.0
        %3145 = vmatpush1.xpose.msra.mxu0 %v2856
        %3146 = vmatprep.subr.mxu0 0.0
        %3147 = vmatpush1.xpose.msra.mxu0 %v2858
        %3148 = vmatprep.subr.mxu0 0.0
        %3149 = vmatpush1.xpose.msra.mxu0 %v2860
        %3150 = vmatprep.subr.mxu0 0.0
        %3151 = vmatpush1.xpose.msra.mxu0 %v2862
        %3152 = vmatprep.subr.mxu0 0.0
        %3153 = vmatpush1.xpose.msra.mxu0 %v2864
        %3154 = vmatprep.subr.mxu0 0.0
        %3155 = vmatpush1.xpose.msra.mxu0 %v2866
        %3156 = vmatprep.subr.mxu0 0.0
        %3157 = vmatpush1.xpose.msra.mxu0 %v2868
        %3158 = vmatprep.mubr.f32.mxu0 0.0
        %3159 = vmatmul.mubr.f32.gmra.mrb[0].mxu0 %v3092
        %v3160 = vpop.f32.mrb[0].mxu0
        %v3161 = vadd.f32 0.0, %v3160
        %v3162 = vpop.f32.mrb[0].mxu0
        %v3163 = vadd.f32 0.0, %v3162
        %3164 = vdwg.mxu0
        %v3165 = vadd.f32 %v3087, %v3161
        %v3166 = vadd.f32 %v3089, %v3163
        %v3167 = vrot.slane %v920, 2
        %v3168 = vrot.slane %v921, 2
        %v3169 = vsel %vm1798, %v3167, %v3168
        %v3170 = vrot.slane %v922, 2
        %v3171 = vsel %vm1798, %v3168, %v3170
        %v3172 = vrot.slane %v923, 2
        %v3173 = vrot.slane %v924, 2
        %v3174 = vsel %vm1798, %v3172, %v3173
        %v3175 = vrot.slane %v925, 2
        %v3176 = vsel %vm1798, %v3173, %v3175
        %v3177 = vrot.slane %v926, 2
        %v3178 = vrot.slane %v927, 2
        %v3179 = vsel %vm1798, %v3177, %v3178
        %v3180 = vrot.slane %v928, 2
        %v3181 = vsel %vm1798, %v3178, %v3180
        %v3182 = vrot.slane %v929, 2
        %v3183 = vrot.slane %v930, 2
        %v3184 = vsel %vm1798, %v3182, %v3183
        %v3185 = vrot.slane %v931, 2
        %v3186 = vsel %vm1798, %v3183, %v3185
        %v3187 = vrot.slane %v932, 2
        %v3188 = vrot.slane %v933, 2
        %v3189 = vsel %vm1798, %v3187, %v3188
        %v3190 = vrot.slane %v934, 2
        %v3191 = vsel %vm1798, %v3188, %v3190
        %v3192 = vrot.slane %v935, 2
        %v3193 = vrot.slane %v936, 2
        %v3194 = vsel %vm1798, %v3192, %v3193
        %v3195 = vrot.slane %v937, 2
        %v3196 = vsel %vm1798, %v3193, %v3195
        %v3197 = vrot.slane %v938, 2
        %v3198 = vrot.slane %v939, 2
        %v3199 = vsel %vm1798, %v3197, %v3198
        %v3200 = vrot.slane %v940, 2
        %v3201 = vsel %vm1798, %v3198, %v3200
        %v3202 = vrot.slane %v941, 2
        %v3203 = vrot.slane %v942, 2
        %v3204 = vsel %vm1798, %v3202, %v3203
        %v3205 = vrot.slane %v943, 2
        %v3206 = vsel %vm1798, %v3203, %v3205
        %v3207 = vrot.slane %v944, 2
        %v3208 = vrot.slane %v945, 2
        %v3209 = vsel %vm1798, %v3207, %v3208
        %v3210 = vrot.slane %v946, 2
        %v3211 = vsel %vm1798, %v3208, %v3210
        %v3212 = vrot.slane %v947, 2
        %v3213 = vrot.slane %v948, 2
        %v3214 = vsel %vm1798, %v3212, %v3213
        %v3215 = vrot.slane %v949, 2
        %v3216 = vsel %vm1798, %v3213, %v3215
        %v3217 = vrot.slane %v950, 2
        %v3218 = vrot.slane %v951, 2
        %v3219 = vsel %vm1798, %v3217, %v3218
        %v3220 = vrot.slane %v952, 2
        %v3221 = vsel %vm1798, %v3218, %v3220
        %v3222 = vrot.slane %v953, 2
        %v3223 = vrot.slane %v954, 2
        %v3224 = vsel %vm1798, %v3222, %v3223
        %v3225 = vrot.slane %v955, 2
        %v3226 = vsel %vm1798, %v3223, %v3225
        %v3227 = vrot.slane %v956, 2
        %v3228 = vrot.slane %v957, 2
        %v3229 = vsel %vm1798, %v3227, %v3228
        %v3230 = vrot.slane %v958, 2
        %v3231 = vsel %vm1798, %v3228, %v3230
        %v3232 = vrot.slane %v959, 2
        %v3233 = vrot.slane %v960, 2
        %v3234 = vsel %vm1798, %v3232, %v3233
        %v3235 = vrot.slane %v961, 2
        %v3236 = vsel %vm1798, %v3233, %v3235
        %v3237 = vrot.slane %v962, 2
        %v3238 = vrot.slane %v963, 2
        %v3239 = vsel %vm1798, %v3237, %v3238
        %v3240 = vrot.slane %v964, 2
        %v3241 = vsel %vm1798, %v3238, %v3240
        %v3242 = vrot.slane %v965, 2
        %v3243 = vrot.slane %v966, 2
        %v3244 = vsel %vm1798, %v3242, %v3243
        %v3245 = vrot.slane %v967, 2
        %v3246 = vsel %vm1798, %v3243, %v3245
        %v3248 = vsel %vm1113, %v983, 0
        %v3250 = vsel %vm1113, %v3169, 0
        %v3252 = vsel %vm1113, %v3171, 0
        %v3254 = vsel %vm1113, %v3174, 0
        %v3256 = vsel %vm1113, %v3176, 0
        %v3258 = vsel %vm1113, %v3179, 0
        %v3260 = vsel %vm1113, %v3181, 0
        %v3262 = vsel %vm1113, %v3184, 0
        %v3264 = vsel %vm1113, %v3186, 0
        %v3266 = vsel %vm1113, %v3189, 0
        %v3268 = vsel %vm1113, %v3191, 0
        %v3270 = vsel %vm1113, %v3194, 0
        %v3272 = vsel %vm1113, %v3196, 0
        %v3274 = vsel %vm1113, %v3199, 0
        %v3276 = vsel %vm1113, %v3201, 0
        %v3278 = vsel %vm1113, %v3204, 0
        %v3280 = vsel %vm1113, %v3206, 0
        %v3282 = vsel %vm1113, %v3209, 0
        %v3284 = vsel %vm1113, %v3211, 0
        %v3286 = vsel %vm1113, %v3214, 0
        %v3288 = vsel %vm1113, %v3216, 0
        %v3290 = vsel %vm1113, %v3219, 0
        %v3292 = vsel %vm1113, %v3221, 0
        %v3294 = vsel %vm1113, %v3224, 0
        %v3296 = vsel %vm1113, %v3226, 0
        %v3298 = vsel %vm1113, %v3229, 0
        %v3300 = vsel %vm1113, %v3231, 0
        %v3302 = vsel %vm1113, %v3234, 0
        %v3304 = vsel %vm1113, %v3236, 0
        %v3306 = vsel %vm1113, %v3239, 0
        %v3308 = vsel %vm1113, %v3241, 0
        %v3310 = vsel %vm1113, %v3244, 0
        %v3312 = vsel %vm1113, %v3246, 0
        %3314 = vmatprep.subr.mxu0 0.0
        %3315 = vmatpush1.xpose.msra.mxu0 %v3250
        %3316 = vmatprep.subr.mxu0 0.0
        %3317 = vmatpush1.xpose.msra.mxu0 %v3252
        %3318 = vmatprep.subr.mxu0 0.0
        %3319 = vmatpush1.xpose.msra.mxu0 %v3254
        %3320 = vmatprep.subr.mxu0 0.0
        %3321 = vmatpush1.xpose.msra.mxu0 %v3256
        %3322 = vmatprep.subr.mxu0 0.0
        %3323 = vmatpush1.xpose.msra.mxu0 %v3258
        %3324 = vmatprep.subr.mxu0 0.0
        %3325 = vmatpush1.xpose.msra.mxu0 %v3260
        %3326 = vmatprep.subr.mxu0 0.0
        %3327 = vmatpush1.xpose.msra.mxu0 %v3262
        %3328 = vmatprep.subr.mxu0 0.0
        %3329 = vmatpush1.xpose.msra.mxu0 %v3264
        %3330 = vmatprep.subr.mxu0 0.0
        %3331 = vmatpush1.xpose.msra.mxu0 %v3266
        %3332 = vmatprep.subr.mxu0 0.0
        %3333 = vmatpush1.xpose.msra.mxu0 %v3268
        %3334 = vmatprep.subr.mxu0 0.0
        %3335 = vmatpush1.xpose.msra.mxu0 %v3270
        %3336 = vmatprep.subr.mxu0 0.0
        %3337 = vmatpush1.xpose.msra.mxu0 %v3272
        %3338 = vmatprep.subr.mxu0 0.0
        %3339 = vmatpush1.xpose.msra.mxu0 %v3274
        %3340 = vmatprep.subr.mxu0 0.0
        %3341 = vmatpush1.xpose.msra.mxu0 %v3276
        %3342 = vmatprep.subr.mxu0 0.0
        %3343 = vmatpush1.xpose.msra.mxu0 %v3278
        %3344 = vmatprep.subr.mxu0 0.0
        %3345 = vmatpush1.xpose.msra.mxu0 %v3280
        %3346 = vmatprep.subr.mxu0 0.0
        %3347 = vmatpush1.xpose.msra.mxu0 %v3282
        %3348 = vmatprep.subr.mxu0 0.0
        %3349 = vmatpush1.xpose.msra.mxu0 %v3284
        %3350 = vmatprep.subr.mxu0 0.0
        %3351 = vmatpush1.xpose.msra.mxu0 %v3286
        %3352 = vmatprep.subr.mxu0 0.0
        %3353 = vmatpush1.xpose.msra.mxu0 %v3288
        %3354 = vmatprep.subr.mxu0 0.0
        %3355 = vmatpush1.xpose.msra.mxu0 %v3290
        %3356 = vmatprep.subr.mxu0 0.0
        %3357 = vmatpush1.xpose.msra.mxu0 %v3292
        %3358 = vmatprep.subr.mxu0 0.0
        %3359 = vmatpush1.xpose.msra.mxu0 %v3294
        %3360 = vmatprep.subr.mxu0 0.0
        %3361 = vmatpush1.xpose.msra.mxu0 %v3296
        %3362 = vmatprep.subr.mxu0 0.0
        %3363 = vmatpush1.xpose.msra.mxu0 %v3298
        %3364 = vmatprep.subr.mxu0 0.0
        %3365 = vmatpush1.xpose.msra.mxu0 %v3300
        %3366 = vmatprep.subr.mxu0 0.0
        %3367 = vmatpush1.xpose.msra.mxu0 %v3302
        %3368 = vmatprep.subr.mxu0 0.0
        %3369 = vmatpush1.xpose.msra.mxu0 %v3304
        %3370 = vmatprep.subr.mxu0 0.0
        %3371 = vmatpush1.xpose.msra.mxu0 %v3306
        %3372 = vmatprep.subr.mxu0 0.0
        %3373 = vmatpush1.xpose.msra.mxu0 %v3308
        %3374 = vmatprep.subr.mxu0 0.0
        %3375 = vmatpush1.xpose.msra.mxu0 %v3310
        %3376 = vmatprep.subr.mxu0 0.0
        %3377 = vmatpush1.xpose.msra.mxu0 %v3312
        %3378 = vmatprep.mubr.f32.mxu0 0.0
        %3379 = vmatmul.mubr.f32.gmra.mrb[0].mxu0 %v3248
        %v3380 = vpop.f32.mrb[0].mxu0
        %v3381 = vadd.f32 0.0, %v3380
        %v3382 = vpop.f32.mrb[0].mxu0
        %v3383 = vadd.f32 0.0, %v3382
        %3384 = vdwg.mxu0
        %v3385 = vadd.f32 %v3165, %v3381
        %v3386 = vadd.f32 %v3166, %v3383
        %3387 = vst [vmem:[%s808] sm:$0xff] %v1796
        %3388 = vst [vmem:[%s808 + $0x8] sm:$0xff] %v1797
        %v3389 = vadd.f32 %v1796, %v1797
        %3390 = vadd.xlane.f32.xlu0 %v3389
        %v3391 = vpop.xlane.xlu0 %3390
        %v3392 = vmul.f32 %v1796, %v1796
        %v3393 = vmul.f32 %v1797, %v1797
        %v3394 = vadd.f32 %v3392, %v3393
        %3395 = vadd.xlane.f32.xlu0 %v3394
        %v3396 = vpop.xlane.xlu0 %3395
        %s3397 = scalar_lea.vmem %s808, 16 [#allocation3]
        %3398 = vst [vmem:[%s3397] sm:$0xff] %v2385
        %3399 = vst [vmem:[%s3397 + $0x8] sm:$0xff] %v2386
        %v3400 = vadd.f32 %v2385, %v2386
        %3401 = vadd.xlane.f32.xlu0 %v3400
        %v3402 = vpop.xlane.xlu0 %3401
        %v3403 = vmul.f32 %v2385, %v2385
        %v3404 = vmul.f32 %v2386, %v2386
        %v3405 = vadd.f32 %v3403, %v3404
        %3406 = vadd.xlane.f32.xlu0 %v3405
        %v3407 = vpop.xlane.xlu0 %3406
        %v3408 = vadd.f32 %v3391, %v3402
        %v3409 = vadd.f32 %v3396, %v3407
        %s3410 = scalar_lea.vmem %s808, 32 [#allocation3]
        %3411 = vst [vmem:[%s3410] sm:$0xff] %v2941
        %3412 = vst [vmem:[%s3410 + $0x8] sm:$0xff] %v2942
        %v3413 = vadd.f32 %v2941, %v2942
        %3414 = vadd.xlane.f32.xlu0 %v3413
        %v3415 = vpop.xlane.xlu0 %3414
        %v3416 = vmul.f32 %v2941, %v2941
        %v3417 = vmul.f32 %v2942, %v2942
        %v3418 = vadd.f32 %v3416, %v3417
        %3419 = vadd.xlane.f32.xlu0 %v3418
        %v3420 = vpop.xlane.xlu0 %3419
        %v3421 = vadd.f32 %v3408, %v3415
        %v3422 = vadd.f32 %v3409, %v3420
        %s3423 = scalar_lea.vmem %s808, 48 [#allocation3]
        %3424 = vst [vmem:[%s3423] sm:$0xff] %v3385
        %3425 = vst [vmem:[%s3423 + $0x8] sm:$0xff] %v3386
        %v3426 = vadd.f32 %v3385, %v3386
        %3427 = vadd.xlane.f32.xlu0 %v3426
        %v3428 = vpop.xlane.xlu0 %3427
        %v3429 = vmul.f32 %v3385, %v3385
        %v3430 = vmul.f32 %v3386, %v3386
        %v3431 = vadd.f32 %v3429, %v3430
        %3432 = vadd.xlane.f32.xlu0 %v3431
        %v3433 = vpop.xlane.xlu0 %3432
        %v3434 = vadd.f32 %v3421, %v3428
        %v3435 = vadd.f32 %v3422, %v3433
        %v3436 = vld [vmem:[%s3] sm:$0xff]
        %v3437 = vadd.f32 %v3436, %v3434
        %vm3438 = vcmask 7168
        %3439 = vst.msk [vmem:[%s3] sm:$0xff] %vm3438, %v3437
        %v3440 = vld [vmem:[%s4] sm:$0xff]
        %v3441 = vadd.f32 %v3440, %v3435
        %3442 = vst.msk [vmem:[%s4] sm:$0xff] %vm3438, %v3441
        %s3443 = sand.u32 %s87, 1
        %s3444 = sand.u32 %s87, 1
        %s3445 = smul.addr %s3444, 64
        %s3446 = scalar_lea.vmem [#allocation3], %s3445
        // Predicated region
        $region71: #{upsample2x_block.2} parent=61 // pred_check
          %p3447 = pneg %p97
        $region72: #{upsample2x_block.2} parent=61 // pred_check_branch
          %3449 = sbr.rel (%p3447) target = $region74
        $region73: #{upsample2x_block.2} parent=61 // pred_region
          %s3450 = smul.u32 2, %s21
          %s3451 = smul.addr %s20, 2
          %s3452 = sadd.s32 %s3450, %s3451
          %s3453 = smul.addr %s3452, 8
          %s3454 = scalar_lea.vmem %s2, %s3453
          // Predicated region
          $region75: #{upsample2x_block.2} parent=73 // pred_check
            _
          $region76: #{upsample2x_block.2} parent=73 // pred_check_branch
            %3456 = sbr.rel (0) target = $region78
          $region77: #{upsample2x_block.2} parent=73 // pred_region
            // Predicated region
            $region79: #{upsample2x_block.2} parent=77 // pred_check
              _
            $region80: #{upsample2x_block.2} parent=77 // pred_check_branch
              %3458 = sbr.rel (0) target = $region82
            $region81: #{upsample2x_block.2} parent=77 // pred_region
              loop: start=0, step=1, limit=1
              $region83: #{upsample2x_block.2} parent=81 // loop_pre_header
                _
              $region84: #{upsample2x_block.2} parent=81 // loop_header
                %s3460 = sphi 0, %s3464
                %p3461 = scmp.ge.s32.totalorder %s3460, 1
                %s3465 = sphi %s3446, %s3446
                %s3466 = sphi %s3454, %s3454
              $region85: #{upsample2x_block.2} parent=81 // loop_header_branch
                %3463 = sbr.rel (%p3461) target = $region89
              $region86: #{upsample2x_block.2} parent=81 // loop_body
                %v3467 = vld [vmem:[%s3465] sm:$0xff]
                %3468 = vst [vmem:[%s3466] sm:$0xff] %v3467
                %v3469 = vld [vmem:[%s3465 + $0x8] sm:$0xff]
                %3470 = vst [vmem:[%s3466 + $0x8] sm:$0xff] %v3469
                %v3471 = vld [vmem:[%s3465 + $0x10] sm:$0xff]
                %3472 = vst [vmem:[%s3466 + $0x20] sm:$0xff] %v3471
                %v3473 = vld [vmem:[%s3465 + $0x18] sm:$0xff]
                %3474 = vst [vmem:[%s3466 + $0x28] sm:$0xff] %v3473
                %v3475 = vld [vmem:[%s3465 + $0x20] sm:$0xff]
                %3476 = vst [vmem:[%s3466 + $0x40] sm:$0xff] %v3475
                %v3477 = vld [vmem:[%s3465 + $0x28] sm:$0xff]
                %3478 = vst [vmem:[%s3466 + $0x48] sm:$0xff] %v3477
                %v3479 = vld [vmem:[%s3465 + $0x30] sm:$0xff]
                %3480 = vst [vmem:[%s3466 + $0x60] sm:$0xff] %v3479
                %v3481 = vld [vmem:[%s3465 + $0x38] sm:$0xff]
                %3482 = vst [vmem:[%s3466 + $0x68] sm:$0xff] %v3481
              $region87: #{upsample2x_block.2} parent=81 // loop_footer
                %s3464 = sadd.s32 1, %s3460
              $region88: #{upsample2x_block.2} parent=81 // loop_footer_branch
                %3459 = sbr.rel target = $region84
              $region89: #{upsample2x_block.2} parent=81 // loop_exit
                _
            $region82: #{upsample2x_block.2} parent=77 // pred_fallthru
              _
            // Predicated region
            $region90: #{upsample2x_block.2} parent=77 // pred_check
              _
            $region91: #{upsample2x_block.2} parent=77 // pred_check_branch
              %3484 = sbr.rel target = $region93
            $region92: #{upsample2x_block.2} parent=77 // pred_region
              _
            $region93: #{upsample2x_block.2} parent=77 // pred_fallthru
              _
          $region78: #{upsample2x_block.2} parent=73 // pred_fallthru
            _
          %3485 = vnop
        $region74: #{upsample2x_block.2} parent=61 // pred_fallthru
          _
        // Predicated region
        $region94: #{upsample2x_block.2} parent=61 // pred_check
          %p3486 = pneg %p118
        $region95: #{upsample2x_block.2} parent=61 // pred_check_branch
          %3488 = sbr.rel (%p3486) target = $region97
        $region96: #{upsample2x_block.2} parent=61 // pred_region
          _
        $region97: #{upsample2x_block.2} parent=61 // pred_fallthru
          _
        // Predicated region
        $region98: #{upsample2x_block.2} parent=61 // pred_check
          %p3489 = pneg %p139
        $region99: #{upsample2x_block.2} parent=61 // pred_check_branch
          %3491 = sbr.rel (%p3489) target = $region101
        $region100: #{upsample2x_block.2} parent=61 // pred_region
          _
        $region101: #{upsample2x_block.2} parent=61 // pred_fallthru
          _
        // Predicated region
        $region102: #{upsample2x_block.2} parent=61 // pred_check
          %p3492 = pneg %p118
        $region103: #{upsample2x_block.2} parent=61 // pred_check_branch
          %3494 = sbr.rel (%p3492) target = $region105
        $region104: #{upsample2x_block.2} parent=61 // pred_region
          _
        $region105: #{upsample2x_block.2} parent=61 // pred_fallthru
          _
        // Predicated region
        $region106: #{upsample2x_block.2} parent=61 // pred_check
          %p3495 = pneg %p139
        $region107: #{upsample2x_block.2} parent=61 // pred_check_branch
          %3497 = sbr.rel (%p3495) target = $region109
        $region108: #{upsample2x_block.2} parent=61 // pred_region
          _
        $region109: #{upsample2x_block.2} parent=61 // pred_fallthru
          _
      $region62: #{upsample2x_block.2} parent=5 // pred_fallthru
        _
      %p3498 = scmp.le.s32.totalorder 2, %s11
      // Predicated region
      $region110: #{upsample2x_block.2} parent=5 // pred_check
        %p3499 = pneg %p3498
      $region111: #{upsample2x_block.2} parent=5 // pred_check_branch
        %3501 = sbr.rel (%p3499) target = $region113
      $region112: #{upsample2x_block.2} parent=5 // pred_region
        %s3502 = ssub.s32 %s11, 2
        // Predicated region
        $region114: #{upsample2x_block.2} parent=112 // pred_check
          %p3503 = pneg %p103
        $region115: #{upsample2x_block.2} parent=112 // pred_check_branch
          %3505 = sbr.rel (%p3503) target = $region117
        $region116: #{upsample2x_block.2} parent=112 // pred_region
          %s3506 = sand.u32 %s88, 1
          %s3507 = sand.u32 %s88, 1
          %s3508 = smul.addr %s3507, 64
          %s3509 = scalar_lea.vmem [#allocation3], %s3508
        $region117: #{upsample2x_block.2} parent=112 // pred_fallthru
          _
      $region113: #{upsample2x_block.2} parent=5 // pred_fallthru
        _
    $region6: #{upsample2x_block.2} parent=1 // loop_footer
      %s15 = sadd.s32 1, %s11
    $region7: #{upsample2x_block.2} parent=1 // loop_footer_branch
      %10 = sbr.rel target = $region3
    $region8: #{upsample2x_block.2} parent=1 // loop_exit
      _

</llo_original>
